<compile_context>
chip_gen: v7x
topology: tpu7x:2x2x1
jax: 0.10.0
libtpu: 0.0.40
codegen_flags: <defaults>
</compile_context>

<pallas_src>
import functools
import math

import jax
import jax.numpy as jnp
import numpy as np
from jax.experimental import pallas as pl
from jax.experimental.pallas import tpu as pltpu


def _premspa_kernel(x_ref, bn1s_ref, bn1b_ref, w1t_ref, bn2b_ref, w3t_ref,
                    bnmb_ref, mask_ref, gap_ref, seg_ref, fc1_ref, fc2_ref,
                    bn3s_ref, bn3b_ref, wc3t_ref, out_ref,
                    row_ref, cat_ref, *, nums, cpad, btile, H, W):
    HW = H * W
    NL = btile * HW          # lanes per grid step (batch tile * pixels)
    halo = W + 1             # flat halo wide enough for any 3x3 tap offset (|off| <= W+1)

    x = x_ref[...]                                            # (Cin, NL) f32, residual

    # --- bn1 + relu ---
    h = jnp.maximum(x * bn1s_ref[...] + bn1b_ref[...], 0.0)
    # --- conv1 (1x1) with bn2 scale folded into its rows; + bn2 shift, relu ---
    h1 = jnp.dot(w1t_ref[...], h.astype(jnp.bfloat16),
                 preferred_element_type=jnp.float32)
    h1 = jnp.maximum(h1 + bn2b_ref[...], 0.0)                 # (nums*cpad, NL) f32

    # zero only the halo lanes (interior is fully overwritten per branch); out-of-image
    # taps are masked below, the zero halo just guarantees no garbage can propagate.
    row_ref[:, 0:halo] = jnp.zeros((cpad, halo), jnp.float32)
    row_ref[:, halo + NL:2 * halo + NL] = jnp.zeros((cpad, halo), jnp.float32)

    # --- MSAModule: cascaded 3x3 convs + per-branch (folded) BN ---
    sp = None
    for i in range(nums):
        spx_i = h1[i * cpad:(i + 1) * cpad, :]
        sp_in = spx_i if i == 0 else sp + spx_i               # cascade (post-BN prev)
        row_ref[:, halo:halo + NL] = sp_in
        windows = []
        for ky in range(3):
            for kx in range(3):
                t = ky * 3 + kx
                off = (ky - 1) * W + (kx - 1)
                wdw = row_ref[:, halo + off:halo + off + NL]  # shifted lane window
                if (ky, kx) != (1, 1):
                    # batch is packed contiguously on lanes -> mask both h+dy and w+dx
                    wdw = wdw * mask_ref[t:t + 1, :]
                windows.append(wdw)
        col = jnp.concatenate(windows, axis=0).astype(jnp.bfloat16)   # (9*cpad, NL)
        sp = jnp.dot(w3t_ref[i], col,
                     preferred_element_type=jnp.float32) + bnmb_ref[i]
        # store unscaled branch output; re-scaled in place after attention is known
        cat_ref[i * cpad:(i + 1) * cpad, :] = sp

    # --- channel attention per branch, fully batched over (branch, image) ---
    # TODO(synk): SPRLayer source was not provided; implemented as SE-style channel
    # attention (GAP -> FC -> relu -> FC -> sigmoid) shared across branches.
    pooled = jnp.dot(cat_ref[...], gap_ref[...],
                     preferred_element_type=jnp.float32)      # (nums*cpad, btile) GAP
    z = jnp.maximum(jnp.dot(fc1_ref[...], pooled.astype(jnp.bfloat16),
                            preferred_element_type=jnp.float32), 0.0)
    logits = jnp.dot(fc2_ref[...], z.astype(jnp.bfloat16),
                     preferred_element_type=jnp.float32)      # (nums*cpad, btile)
    a = 1.0 / (1.0 + jnp.exp(-logits))

    # softmax over the branch dim (branches are 8-row blocks of `a`)
    parts = [a[i * cpad:(i + 1) * cpad, :] for i in range(nums)]
    m = parts[0]
    for q in parts[1:]:
        m = jnp.maximum(m, q)
    exps = [jnp.exp(q - m) for q in parts]
    den = exps[0]
    for e in exps[1:]:
        den = den + e
    inv_den = 1.0 / den

    # --- attention * bn3 (scale folded) + shift + relu, applied in place on cat_ref;
    #     per-image scalars broadcast across each image's HW lane segment via MXU ---
    for i in range(nums):
        sc_small = exps[i] * inv_den * bn3s_ref[i]            # (cpad, btile)
        sc_full = jnp.dot(sc_small, seg_ref[...],
                          preferred_element_type=jnp.float32)  # (cpad, NL)
        v = jnp.maximum(cat_ref[i * cpad:(i + 1) * cpad, :] * sc_full + bn3b_ref[i],
                        0.0)
        cat_ref[i * cpad:(i + 1) * cpad, :] = v

    # --- fused conv3 (1x1) on the concatenated branches + residual ---
    proj = jnp.dot(wc3t_ref[...], cat_ref[...].astype(jnp.bfloat16),
                   preferred_element_type=jnp.float32)        # (Cout, NL)
    out_ref[...] = x + proj


def prepare_premspa(p, H, W, btile):
    """One-time weight prep (hoisted out of the forward path): BN folding, channel
    padding to 8, im2col weight layout, block-diag SE FCs, masks, bf16 casts."""
    nums, width = int(p["nums"]), int(p["width"])
    cpad = ((width + 7) // 8) * 8
    w1 = np.asarray(p["w1"], np.float32)                      # (cmid, Cin)
    _, Cin = w1.shape
    wc3 = np.asarray(p["wc3"], np.float32)                    # (Cout, cmid)
    Cout = wc3.shape[0]
    fc1 = np.asarray(p["fc1"], np.float32)                    # (hidden, width)
    fc2 = np.asarray(p["fc2"], np.float32)                    # (width, hidden)
    hidden = fc1.shape[0]
    hpad = ((hidden + 7) // 8) * 8
    HW = H * W
    NL = btile * HW

    bn1s = np.asarray(p["bn1_s"], np.float32).reshape(-1, 1)
    bn1b = np.asarray(p["bn1_b"], np.float32).reshape(-1, 1)

    # conv1: fold bn2 scale into rows, pad each branch block to cpad output channels
    bn2s = np.asarray(p["bn2_s"], np.float32).reshape(nums, width, 1)
    w1p = np.zeros((nums, cpad, Cin), np.float32)
    w1p[:, :width, :] = bn2s * w1.reshape(nums, width, Cin)
    bn2b = np.zeros((nums, cpad, 1), np.float32)
    bn2b[:, :width, 0] = np.asarray(p["bn2_b"], np.float32).reshape(nums, width)

    # per-branch 3x3 conv as (cpad, 9*cpad) im2col weights, branch-BN scale folded,
    # zero rows/cols for padded channels.  Column order = (ky*3+kx)*cpad + cin.
    w3 = np.asarray(p["w3"], np.float32)                      # (nums, O, I, 3, 3)
    bnms = np.asarray(p["bnm_s"], np.float32).reshape(nums, width, 1, 1, 1)
    w3_oyx_i = np.transpose(w3 * bnms, (0, 1, 3, 4, 2))       # (nums, O, ky, kx, I)
    w3p = np.zeros((nums, cpad, 3, 3, cpad), np.float32)
    w3p[:, :width, :, :, :width] = w3_oyx_i
    bnmb = np.zeros((nums, cpad, 1), np.float32)
    bnmb[:, :width, 0] = np.asarray(p["bnm_b"], np.float32)

    bn3s = np.zeros((nums, cpad, 1), np.float32)
    bn3s[:, :width, 0] = np.asarray(p["bn3_s"], np.float32).reshape(nums, width)
    bn3b = np.zeros((nums, cpad, 1), np.float32)
    bn3b[:, :width, 0] = np.asarray(p["bn3_b"], np.float32).reshape(nums, width)

    wc3p = np.zeros((Cout, nums, cpad), np.float32)
    wc3p[:, :, :width] = wc3.reshape(Cout, nums, width)

    # SE FCs shared across branches, laid out block-diagonally so the whole
    # (branch, image)-batched attention runs as two small bf16 matmuls.
    fc1p = np.zeros((hpad, cpad), np.float32); fc1p[:hidden, :width] = fc1
    fc2p = np.zeros((cpad, hpad), np.float32); fc2p[:width, :hidden] = fc2
    fc1b = np.zeros((nums * hpad, nums * cpad), np.float32)
    fc2b = np.zeros((nums * cpad, nums * hpad), np.float32)
    for i in range(nums):
        fc1b[i * hpad:(i + 1) * hpad, i * cpad:(i + 1) * cpad] = fc1p
        fc2b[i * cpad:(i + 1) * cpad, i * hpad:(i + 1) * hpad] = fc2p

    # per-tap validity mask (batch packed contiguously on lanes -> mask h+dy AND w+dx)
    pidx = np.arange(NL)
    q = pidx % HW
    hh, ww = q // W, q % W
    mask = np.ones((9, NL), np.float32)
    for ky in range(3):
        for kx in range(3):
            dy, dx = ky - 1, kx - 1
            valid = (hh + dy >= 0) & (hh + dy < H) & (ww + dx >= 0) & (ww + dx < W)
            mask[ky * 3 + kx] = valid.astype(np.float32)

    img = pidx // HW
    gap = np.zeros((NL, btile), np.float32); gap[pidx, img] = 1.0 / HW   # per-image GAP
    seg = np.zeros((btile, NL), np.float32); seg[img, pidx] = 1.0        # per-image bcast

    bf = jnp.bfloat16
    ops = (
        jnp.asarray(bn1s), jnp.asarray(bn1b),
        jnp.asarray(w1p.reshape(nums * cpad, Cin), bf),
        jnp.asarray(bn2b.reshape(nums * cpad, 1)),
        jnp.asarray(w3p.reshape(nums, cpad, 9 * cpad), bf),
        jnp.asarray(bnmb),
        jnp.asarray(mask), jnp.asarray(gap), jnp.asarray(seg),
        jnp.asarray(fc1b, bf), jnp.asarray(fc2b, bf),
        jnp.asarray(bn3s), jnp.asarray(bn3b),
        jnp.asarray(wc3p.reshape(Cout, nums * cpad), bf),
    )
    meta = dict(nums=nums, width=width, cpad=cpad, hpad=hpad, btile=btile,
                H=H, W=W, cin=Cin, cout=Cout)
    return dict(meta=meta, ops=ops)


def premspa_block(x_nchw, prepared):
    meta, ops = prepared["meta"], prepared["ops"]
    B, Cin, H, W = x_nchw.shape
    nums, cpad, btile = meta["nums"], meta["cpad"], meta["btile"]
    assert (H, W) == (meta["H"], meta["W"]) and Cin == meta["cin"]
    assert B % btile == 0
    HW = H * W
    NL = btile * HW
    halo = W + 1

    # layout plumbing: NCHW -> channels on sublanes, image-major pixels on lanes
    x2t = jnp.transpose(x_nchw.reshape(B, Cin, HW), (1, 0, 2)).reshape(Cin, B * HW)

    kernel = functools.partial(_premspa_kernel, nums=nums, cpad=cpad, btile=btile,
                               H=H, W=W)

    def resident(a):
        nd = a.ndim
        return pl.BlockSpec(a.shape, lambda g, _n=nd: (0,) * _n)   # resident across grid

    out2t = pl.pallas_call(
        kernel,
        out_shape=jax.ShapeDtypeStruct((Cin, B * HW), jnp.float32),
        grid=(B // btile,),
        in_specs=[pl.BlockSpec((Cin, NL), lambda g: (0, g))] + [resident(a) for a in ops],
        out_specs=pl.BlockSpec((Cin, NL), lambda g: (0, g)),
        scratch_shapes=[
            pltpu.VMEM((cpad, NL + 2 * halo), jnp.float32),     # flat haloed row buffer
            pltpu.VMEM((nums * cpad, NL), jnp.float32),         # fused conv3 input
        ],
        input_output_aliases={0: 0},                            # x only read (residual)
        compiler_params=pltpu.CompilerParams(
            dimension_semantics=("parallel",),    # batch tiles across cores (megacore)
            vmem_limit_bytes=32 * 1024 * 1024,    # explicit budget, safe on v5e/v6e/v7x
        ),
    )(x2t, *ops)

    return jnp.transpose(out2t.reshape(Cin, B, HW), (1, 0, 2)).reshape(B, Cin, H, W)


def choose_batch_tile(batch, hw, target_lanes=512):
    bt = max(1, min(target_lanes // max(hw, 1), max(1, batch // 2)))
    bt = min(bt, batch)
    while batch % bt:
        bt -= 1
    return bt


def make_params(key, inplanes, planes, baseWidth=8, scale=3):
    width = int(math.floor(planes * (baseWidth / 16.0)))
    cmid = width * scale
    cout = planes * 4
    assert cout == inplanes, "residual add requires inplanes == planes*expansion"

    ks = jax.random.split(key, 16)
    eps = 1e-5

    def bn(k, c):
        kg, kb, km, kv = jax.random.split(k, 4)
        gamma = 1.0 + 0.1 * jax.random.normal(kg, (c,), jnp.float32)
        beta = 0.1 * jax.random.normal(kb, (c,), jnp.float32)
        mean = 0.1 * jax.random.normal(km, (c,), jnp.float32)
        var = jax.nn.softplus(jax.random.normal(kv, (c,), jnp.float32)) + 0.5
        s = gamma / jnp.sqrt(var + eps)
        return s, beta - mean * s

    bn1_s, bn1_b = bn(ks[0], inplanes)
    bn2_s, bn2_b = bn(ks[1], cmid)
    bn3_s, bn3_b = bn(ks[2], cmid)
    bnm = [bn(ks[3 + i], width) for i in range(scale)]
    bnm_s = jnp.stack([s for s, _ in bnm])            # (scale, width)
    bnm_b = jnp.stack([b for _, b in bnm])

    w1 = 0.2 * jax.random.normal(ks[8], (cmid, inplanes), jnp.float32)             # (O,I)
    w3 = 0.2 * jax.random.normal(ks[9], (scale, width, width, 3, 3), jnp.float32)  # OIHW
    wc3 = 0.2 * jax.random.normal(ks[10], (cout, cmid), jnp.float32)               # (O,I)
    hidden = max(width // 2, 1)
    fc1 = 0.5 * jax.random.normal(ks[11], (hidden, width), jnp.float32)
    fc2 = 0.5 * jax.random.normal(ks[12], (width, hidden), jnp.float32)

    return dict(nums=scale, width=width,
                bn1_s=bn1_s, bn1_b=bn1_b, bn2_s=bn2_s, bn2_b=bn2_b,
                bn3_s=bn3_s, bn3_b=bn3_b, bnm_s=bnm_s, bnm_b=bnm_b,
                w1=w1, w3=w3, wc3=wc3, fc1=fc1, fc2=fc2)


def reference(x, p):
    """Pure-JAX, all-f32, PyTorch-faithful (NCHW) reference for verification."""
    nums, width = p["nums"], p["width"]

    def bn(y, s, b):
        return y * s[None, :, None, None] + b[None, :, None, None]

    h = jnp.maximum(bn(x, p["bn1_s"], p["bn1_b"]), 0.0)
    h = jnp.einsum("bchw,dc->bdhw", h, p["w1"])
    h = jnp.maximum(bn(h, p["bn2_s"], p["bn2_b"]), 0.0)

    feats = []
    sp = None
    for i in range(nums):
        spx_i = h[:, i * width:(i + 1) * width]
        sp = spx_i if i == 0 else sp + spx_i
        sp = jax.lax.conv_general_dilated(
            sp, p["w3"][i], window_strides=(1, 1), padding=((1, 1), (1, 1)),
            dimension_numbers=("NCHW", "OIHW", "NCHW"))
        sp = bn(sp, p["bnm_s"][i], p["bnm_b"][i])
        feats.append(sp)

    attn = []
    for i in range(nums):
        pooled = feats[i].mean(axis=(2, 3))                      # (B, width)
        z = jnp.maximum(pooled @ p["fc1"].T, 0.0)
        attn.append(jax.nn.sigmoid(z @ p["fc2"].T))
    a = jax.nn.softmax(jnp.stack(attn, axis=1), axis=1)          # (B, nums, width)

    fw = jnp.concatenate([feats[i] * a[:, i][:, :, None, None] for i in range(nums)],
                         axis=1)
    fw = jnp.maximum(bn(fw, p["bn3_s"], p["bn3_b"]), 0.0)
    return x + jnp.einsum("bchw,dc->bdhw", fw, p["wc3"])


if __name__ == "__main__":
    key = jax.random.PRNGKey(0)
    kx, kp = jax.random.split(key)

    # Shapes consistent with the module: planes=8, baseWidth=8, scale=3 -> width=4,
    # inplanes = planes*expansion = 32 (residual add works, downsample=None).
    B, inplanes, H, W = 8, 32, 8, 8
    planes = 8

    x = jax.random.normal(kx, (B, inplanes, H, W), jnp.float32)   # NCHW, like PyTorch
    params = make_params(kp, inplanes, planes, baseWidth=8, scale=3)

    btile = choose_batch_tile(B, H * W)            # -> 4 images/step, 256 lanes, grid=(2,)
    prepared = prepare_premspa(params, H, W, btile)  # one-time prep, hoisted out of fwd

    out = jax.block_until_ready(premspa_block(x, prepared))
    ref = reference(x, params)

    # Tolerance reflects bf16 MXU operands (f32 accumulation) vs an all-f32 reference.
    np.testing.assert_allclose(np.asarray(out), np.asarray(ref), rtol=4e-2, atol=4e-2)
    assert out.shape == (B, inplanes, H, W)
    print("KERNEL_OK")
</pallas_src>

<mosaic_0001>
module attributes {stable_mosaic.version = 11 : i64} {
  func.func @_premspa_kernel(%arg0: i32, %arg1: memref<32x256xf32, #tpu.memory_space<vmem>>, %arg2: memref<32x1xf32, #tpu.memory_space<vmem>>, %arg3: memref<32x1xf32, #tpu.memory_space<vmem>>, %arg4: memref<24x32xbf16, #tpu.memory_space<vmem>>, %arg5: memref<24x1xf32, #tpu.memory_space<vmem>>, %arg6: memref<3x8x72xbf16, #tpu.memory_space<vmem>>, %arg7: memref<3x8x1xf32, #tpu.memory_space<vmem>>, %arg8: memref<9x256xf32, #tpu.memory_space<vmem>>, %arg9: memref<256x4xf32, #tpu.memory_space<vmem>>, %arg10: memref<4x256xf32, #tpu.memory_space<vmem>>, %arg11: memref<24x24xbf16, #tpu.memory_space<vmem>>, %arg12: memref<24x24xbf16, #tpu.memory_space<vmem>>, %arg13: memref<3x8x1xf32, #tpu.memory_space<vmem>>, %arg14: memref<3x8x1xf32, #tpu.memory_space<vmem>>, %arg15: memref<32x24xbf16, #tpu.memory_space<vmem>>, %arg16: memref<32x256xf32, #tpu.memory_space<vmem>>, %arg17: memref<8x274xf32, #tpu.memory_space<vmem>>, %arg18: memref<24x256xf32, #tpu.memory_space<vmem>>) attributes {dimension_semantics = [#tpu.dimension_semantics<parallel>], iteration_bounds = array<i64: 2>, scalar_prefetch = 0 : i64, scratch_operands = 2 : i64, tpu.core_type = #tpu.core_type<tc>, window_params = [{transform_indices = @transform_0, window_bounds = array<i64: 32, 256>}, {pipeline_mode = #tpu.pipeline_mode<synchronous>, transform_indices = @transform_1, window_bounds = array<i64: 32, 1>}, {pipeline_mode = #tpu.pipeline_mode<synchronous>, transform_indices = @transform_2, window_bounds = array<i64: 32, 1>}, {pipeline_mode = #tpu.pipeline_mode<synchronous>, transform_indices = @transform_3, window_bounds = array<i64: 24, 32>}, {pipeline_mode = #tpu.pipeline_mode<synchronous>, transform_indices = @transform_4, window_bounds = array<i64: 24, 1>}, {pipeline_mode = #tpu.pipeline_mode<synchronous>, transform_indices = @transform_5, window_bounds = array<i64: 3, 8, 72>}, {pipeline_mode = #tpu.pipeline_mode<synchronous>, transform_indices = @transform_6, window_bounds = array<i64: 3, 8, 1>}, {pipeline_mode = #tpu.pipeline_mode<synchronous>, transform_indices = @transform_7, window_bounds = array<i64: 9, 256>}, {pipeline_mode = #tpu.pipeline_mode<synchronous>, transform_indices = @transform_8, window_bounds = array<i64: 256, 4>}, {pipeline_mode = #tpu.pipeline_mode<synchronous>, transform_indices = @transform_9, window_bounds = array<i64: 4, 256>}, {pipeline_mode = #tpu.pipeline_mode<synchronous>, transform_indices = @transform_10, window_bounds = array<i64: 24, 24>}, {pipeline_mode = #tpu.pipeline_mode<synchronous>, transform_indices = @transform_11, window_bounds = array<i64: 24, 24>}, {pipeline_mode = #tpu.pipeline_mode<synchronous>, transform_indices = @transform_12, window_bounds = array<i64: 3, 8, 1>}, {pipeline_mode = #tpu.pipeline_mode<synchronous>, transform_indices = @transform_13, window_bounds = array<i64: 3, 8, 1>}, {pipeline_mode = #tpu.pipeline_mode<synchronous>, transform_indices = @transform_14, window_bounds = array<i64: 32, 24>}, {transform_indices = @transform_15, window_bounds = array<i64: 32, 256>}]} {
    %c0 = arith.constant 0 : index
    %c0_0 = arith.constant 0 : index
    %0 = vector.load %arg1[%c0, %c0_0] : memref<32x256xf32, #tpu.memory_space<vmem>>, vector<32x256xf32>
    %c0_1 = arith.constant 0 : index
    %c0_2 = arith.constant 0 : index
    %1 = vector.load %arg2[%c0_1, %c0_2] : memref<32x1xf32, #tpu.memory_space<vmem>>, vector<32x1xf32>
    %2 = vector.broadcast %1 : vector<32x1xf32> to vector<32x256xf32>
    %3 = arith.mulf %0, %2 : vector<32x256xf32>
    %c0_3 = arith.constant 0 : index
    %c0_4 = arith.constant 0 : index
    %4 = vector.load %arg3[%c0_3, %c0_4] : memref<32x1xf32, #tpu.memory_space<vmem>>, vector<32x1xf32>
    %5 = vector.broadcast %4 : vector<32x1xf32> to vector<32x256xf32>
    %6 = arith.addf %3, %5 : vector<32x256xf32>
    %cst = arith.constant 0.000000e+00 : f32
    %7 = vector.broadcast %cst : f32 to vector<32x256xf32>
    %8 = arith.maximumf %6, %7 : vector<32x256xf32>
    %c0_5 = arith.constant 0 : index
    %c0_6 = arith.constant 0 : index
    %9 = vector.load %arg4[%c0_5, %c0_6] : memref<24x32xbf16, #tpu.memory_space<vmem>>, vector<24x32xbf16>
    %10 = arith.truncf %8 : vector<32x256xf32> to vector<32x256xbf16>
    %cst_7 = arith.constant dense<0.000000e+00> : vector<24x256xf32>
    %11 = tpu.matmul %9, %10, %cst_7 {dimension_numbers = #tpu.dot_dimension_numbers<[1], [0], [0], [1], [0, 0, 1, 1], [], []>} : vector<24x32xbf16>, vector<32x256xbf16>, vector<24x256xf32> -> vector<24x256xf32>
    %c0_8 = arith.constant 0 : index
    %c0_9 = arith.constant 0 : index
    %12 = vector.load %arg5[%c0_8, %c0_9] : memref<24x1xf32, #tpu.memory_space<vmem>>, vector<24x1xf32>
    %13 = vector.broadcast %12 : vector<24x1xf32> to vector<24x256xf32>
    %14 = arith.addf %11, %13 : vector<24x256xf32>
    %cst_10 = arith.constant 0.000000e+00 : f32
    %15 = vector.broadcast %cst_10 : f32 to vector<24x256xf32>
    %16 = arith.maximumf %14, %15 : vector<24x256xf32>
    %cst_11 = arith.constant 0.000000e+00 : f32
    %17 = vector.broadcast %cst_11 : f32 to vector<8x9xf32>
    %c0_12 = arith.constant 0 : index
    %c0_13 = arith.constant 0 : index
    %18 = vector.load %arg17[%c0_12, %c0_13] : memref<8x274xf32, #tpu.memory_space<vmem>>, vector<8x9xf32>
    tpu.vector_store %arg17[%c0_12, %c0_13], %17 {strides = array<i32>} : memref<8x274xf32, #tpu.memory_space<vmem>>, vector<8x9xf32>,
    %cst_14 = arith.constant 0.000000e+00 : f32
    %19 = vector.broadcast %cst_14 : f32 to vector<8x9xf32>
    %c0_15 = arith.constant 0 : index
    %c265 = arith.constant 265 : index
    %20 = vector.load %arg17[%c0_15, %c265] : memref<8x274xf32, #tpu.memory_space<vmem>>, vector<8x9xf32>
    tpu.vector_store %arg17[%c0_15, %c265], %19 {strides = array<i32>} : memref<8x274xf32, #tpu.memory_space<vmem>>, vector<8x9xf32>,
    %21 = vector.extract_strided_slice %16 {offsets = [0, 0], sizes = [8, 256], strides = [1, 1]} : vector<24x256xf32> to vector<8x256xf32>
    %c0_16 = arith.constant 0 : index
    %c9 = arith.constant 9 : index
    %22 = vector.load %arg17[%c0_16, %c9] : memref<8x274xf32, #tpu.memory_space<vmem>>, vector<8x256xf32>
    tpu.vector_store %arg17[%c0_16, %c9], %21 {strides = array<i32>} : memref<8x274xf32, #tpu.memory_space<vmem>>, vector<8x256xf32>,
    %c0_17 = arith.constant 0 : index
    %c0_18 = arith.constant 0 : index
    %23 = vector.load %arg17[%c0_17, %c0_18] : memref<8x274xf32, #tpu.memory_space<vmem>>, vector<8x256xf32>
    %c0_19 = arith.constant 0 : index
    %c0_20 = arith.constant 0 : index
    %24 = vector.load %arg8[%c0_19, %c0_20] : memref<9x256xf32, #tpu.memory_space<vmem>>, vector<1x256xf32>
    %25 = vector.broadcast %24 : vector<1x256xf32> to vector<8x256xf32>
    %26 = arith.mulf %23, %25 : vector<8x256xf32>
    %c0_21 = arith.constant 0 : index
    %c1 = arith.constant 1 : index
    %27 = vector.load %arg17[%c0_21, %c1] : memref<8x274xf32, #tpu.memory_space<vmem>>, vector<8x256xf32>
    %c1_22 = arith.constant 1 : index
    %c0_23 = arith.constant 0 : index
    %28 = vector.load %arg8[%c1_22, %c0_23] : memref<9x256xf32, #tpu.memory_space<vmem>>, vector<1x256xf32>
    %29 = vector.broadcast %28 : vector<1x256xf32> to vector<8x256xf32>
    %30 = arith.mulf %27, %29 : vector<8x256xf32>
    %c0_24 = arith.constant 0 : index
    %c2 = arith.constant 2 : index
    %31 = vector.load %arg17[%c0_24, %c2] : memref<8x274xf32, #tpu.memory_space<vmem>>, vector<8x256xf32>
    %c2_25 = arith.constant 2 : index
    %c0_26 = arith.constant 0 : index
    %32 = vector.load %arg8[%c2_25, %c0_26] : memref<9x256xf32, #tpu.memory_space<vmem>>, vector<1x256xf32>
    %33 = vector.broadcast %32 : vector<1x256xf32> to vector<8x256xf32>
    %34 = arith.mulf %31, %33 : vector<8x256xf32>
    %c0_27 = arith.constant 0 : index
    %c8 = arith.constant 8 : index
    %35 = vector.load %arg17[%c0_27, %c8] : memref<8x274xf32, #tpu.memory_space<vmem>>, vector<8x256xf32>
    %c3 = arith.constant 3 : index
    %c0_28 = arith.constant 0 : index
    %36 = vector.load %arg8[%c3, %c0_28] : memref<9x256xf32, #tpu.memory_space<vmem>>, vector<1x256xf32>
    %37 = vector.broadcast %36 : vector<1x256xf32> to vector<8x256xf32>
    %38 = arith.mulf %35, %37 : vector<8x256xf32>
    %c0_29 = arith.constant 0 : index
    %c9_30 = arith.constant 9 : index
    %39 = vector.load %arg17[%c0_29, %c9_30] : memref<8x274xf32, #tpu.memory_space<vmem>>, vector<8x256xf32>
    %c0_31 = arith.constant 0 : index
    %c10 = arith.constant 10 : index
    %40 = vector.load %arg17[%c0_31, %c10] : memref<8x274xf32, #tpu.memory_space<vmem>>, vector<8x256xf32>
    %c5 = arith.constant 5 : index
    %c0_32 = arith.constant 0 : index
    %41 = vector.load %arg8[%c5, %c0_32] : memref<9x256xf32, #tpu.memory_space<vmem>>, vector<1x256xf32>
    %42 = vector.broadcast %41 : vector<1x256xf32> to vector<8x256xf32>
    %43 = arith.mulf %40, %42 : vector<8x256xf32>
    %c0_33 = arith.constant 0 : index
    %c16 = arith.constant 16 : index
    %44 = vector.load %arg17[%c0_33, %c16] : memref<8x274xf32, #tpu.memory_space<vmem>>, vector<8x256xf32>
    %c6 = arith.constant 6 : index
    %c0_34 = arith.constant 0 : index
    %45 = vector.load %arg8[%c6, %c0_34] : memref<9x256xf32, #tpu.memory_space<vmem>>, vector<1x256xf32>
    %46 = vector.broadcast %45 : vector<1x256xf32> to vector<8x256xf32>
    %47 = arith.mulf %44, %46 : vector<8x256xf32>
    %c0_35 = arith.constant 0 : index
    %c17 = arith.constant 17 : index
    %48 = vector.load %arg17[%c0_35, %c17] : memref<8x274xf32, #tpu.memory_space<vmem>>, vector<8x256xf32>
    %c7 = arith.constant 7 : index
    %c0_36 = arith.constant 0 : index
    %49 = vector.load %arg8[%c7, %c0_36] : memref<9x256xf32, #tpu.memory_space<vmem>>, vector<1x256xf32>
    %50 = vector.broadcast %49 : vector<1x256xf32> to vector<8x256xf32>
    %51 = arith.mulf %48, %50 : vector<8x256xf32>
    %c0_37 = arith.constant 0 : index
    %c18 = arith.constant 18 : index
    %52 = vector.load %arg17[%c0_37, %c18] : memref<8x274xf32, #tpu.memory_space<vmem>>, vector<8x256xf32>
    %c8_38 = arith.constant 8 : index
    %c0_39 = arith.constant 0 : index
    %53 = vector.load %arg8[%c8_38, %c0_39] : memref<9x256xf32, #tpu.memory_space<vmem>>, vector<1x256xf32>
    %54 = vector.broadcast %53 : vector<1x256xf32> to vector<8x256xf32>
    %55 = arith.mulf %52, %54 : vector<8x256xf32>
    %56 = tpu.concatenate %26, %30, %34, %38, %39, %43, %47, %51, %55 in 0 : vector<8x256xf32>, vector<8x256xf32>, vector<8x256xf32>, vector<8x256xf32>, vector<8x256xf32>, vector<8x256xf32>, vector<8x256xf32>, vector<8x256xf32>, vector<8x256xf32> -> vector<72x256xf32>
    %57 = arith.truncf %56 : vector<72x256xf32> to vector<72x256xbf16>
    %c0_40 = arith.constant 0 : index
    %c0_41 = arith.constant 0 : index
    %c0_42 = arith.constant 0 : index
    %58 = vector.load %arg6[%c0_40, %c0_41, %c0_42] : memref<3x8x72xbf16, #tpu.memory_space<vmem>>, vector<1x8x72xbf16>
    %59 = vector.shape_cast %58 : vector<1x8x72xbf16> to vector<8x72xbf16>
    %cst_43 = arith.constant dense<0.000000e+00> : vector<8x256xf32>
    %60 = tpu.matmul %59, %57, %cst_43 {dimension_numbers = #tpu.dot_dimension_numbers<[1], [0], [0], [1], [0, 0, 1, 1], [], []>} : vector<8x72xbf16>, vector<72x256xbf16>, vector<8x256xf32> -> vector<8x256xf32>
    %c0_44 = arith.constant 0 : index
    %c0_45 = arith.constant 0 : index
    %c0_46 = arith.constant 0 : index
    %61 = vector.load %arg7[%c0_44, %c0_45, %c0_46] : memref<3x8x1xf32, #tpu.memory_space<vmem>>, vector<1x8x1xf32>
    %62 = vector.shape_cast %61 : vector<1x8x1xf32> to vector<8x1xf32>
    %63 = vector.broadcast %62 : vector<8x1xf32> to vector<8x256xf32>
    %64 = arith.addf %60, %63 : vector<8x256xf32>
    %c0_47 = arith.constant 0 : index
    %c0_48 = arith.constant 0 : index
    %65 = vector.load %arg18[%c0_47, %c0_48] : memref<24x256xf32, #tpu.memory_space<vmem>>, vector<8x256xf32>
    tpu.vector_store %arg18[%c0_47, %c0_48], %64 {strides = array<i32>} : memref<24x256xf32, #tpu.memory_space<vmem>>, vector<8x256xf32>,
    %66 = vector.extract_strided_slice %16 {offsets = [8, 0], sizes = [8, 256], strides = [1, 1]} : vector<24x256xf32> to vector<8x256xf32>
    %67 = arith.addf %64, %66 : vector<8x256xf32>
    %c0_49 = arith.constant 0 : index
    %c9_50 = arith.constant 9 : index
    %68 = vector.load %arg17[%c0_49, %c9_50] : memref<8x274xf32, #tpu.memory_space<vmem>>, vector<8x256xf32>
    tpu.vector_store %arg17[%c0_49, %c9_50], %67 {strides = array<i32>} : memref<8x274xf32, #tpu.memory_space<vmem>>, vector<8x256xf32>,
    %c0_51 = arith.constant 0 : index
    %c0_52 = arith.constant 0 : index
    %69 = vector.load %arg17[%c0_51, %c0_52] : memref<8x274xf32, #tpu.memory_space<vmem>>, vector<8x256xf32>
    %c0_53 = arith.constant 0 : index
    %c0_54 = arith.constant 0 : index
    %70 = vector.load %arg8[%c0_53, %c0_54] : memref<9x256xf32, #tpu.memory_space<vmem>>, vector<1x256xf32>
    %71 = vector.broadcast %70 : vector<1x256xf32> to vector<8x256xf32>
    %72 = arith.mulf %69, %71 : vector<8x256xf32>
    %c0_55 = arith.constant 0 : index
    %c1_56 = arith.constant 1 : index
    %73 = vector.load %arg17[%c0_55, %c1_56] : memref<8x274xf32, #tpu.memory_space<vmem>>, vector<8x256xf32>
    %c1_57 = arith.constant 1 : index
    %c0_58 = arith.constant 0 : index
    %74 = vector.load %arg8[%c1_57, %c0_58] : memref<9x256xf32, #tpu.memory_space<vmem>>, vector<1x256xf32>
    %75 = vector.broadcast %74 : vector<1x256xf32> to vector<8x256xf32>
    %76 = arith.mulf %73, %75 : vector<8x256xf32>
    %c0_59 = arith.constant 0 : index
    %c2_60 = arith.constant 2 : index
    %77 = vector.load %arg17[%c0_59, %c2_60] : memref<8x274xf32, #tpu.memory_space<vmem>>, vector<8x256xf32>
    %c2_61 = arith.constant 2 : index
    %c0_62 = arith.constant 0 : index
    %78 = vector.load %arg8[%c2_61, %c0_62] : memref<9x256xf32, #tpu.memory_space<vmem>>, vector<1x256xf32>
    %79 = vector.broadcast %78 : vector<1x256xf32> to vector<8x256xf32>
    %80 = arith.mulf %77, %79 : vector<8x256xf32>
    %c0_63 = arith.constant 0 : index
    %c8_64 = arith.constant 8 : index
    %81 = vector.load %arg17[%c0_63, %c8_64] : memref<8x274xf32, #tpu.memory_space<vmem>>, vector<8x256xf32>
    %c3_65 = arith.constant 3 : index
    %c0_66 = arith.constant 0 : index
    %82 = vector.load %arg8[%c3_65, %c0_66] : memref<9x256xf32, #tpu.memory_space<vmem>>, vector<1x256xf32>
    %83 = vector.broadcast %82 : vector<1x256xf32> to vector<8x256xf32>
    %84 = arith.mulf %81, %83 : vector<8x256xf32>
    %c0_67 = arith.constant 0 : index
    %c9_68 = arith.constant 9 : index
    %85 = vector.load %arg17[%c0_67, %c9_68] : memref<8x274xf32, #tpu.memory_space<vmem>>, vector<8x256xf32>
    %c0_69 = arith.constant 0 : index
    %c10_70 = arith.constant 10 : index
    %86 = vector.load %arg17[%c0_69, %c10_70] : memref<8x274xf32, #tpu.memory_space<vmem>>, vector<8x256xf32>
    %c5_71 = arith.constant 5 : index
    %c0_72 = arith.constant 0 : index
    %87 = vector.load %arg8[%c5_71, %c0_72] : memref<9x256xf32, #tpu.memory_space<vmem>>, vector<1x256xf32>
    %88 = vector.broadcast %87 : vector<1x256xf32> to vector<8x256xf32>
    %89 = arith.mulf %86, %88 : vector<8x256xf32>
    %c0_73 = arith.constant 0 : index
    %c16_74 = arith.constant 16 : index
    %90 = vector.load %arg17[%c0_73, %c16_74] : memref<8x274xf32, #tpu.memory_space<vmem>>, vector<8x256xf32>
    %c6_75 = arith.constant 6 : index
    %c0_76 = arith.constant 0 : index
    %91 = vector.load %arg8[%c6_75, %c0_76] : memref<9x256xf32, #tpu.memory_space<vmem>>, vector<1x256xf32>
    %92 = vector.broadcast %91 : vector<1x256xf32> to vector<8x256xf32>
    %93 = arith.mulf %90, %92 : vector<8x256xf32>
    %c0_77 = arith.constant 0 : index
    %c17_78 = arith.constant 17 : index
    %94 = vector.load %arg17[%c0_77, %c17_78] : memref<8x274xf32, #tpu.memory_space<vmem>>, vector<8x256xf32>
    %c7_79 = arith.constant 7 : index
    %c0_80 = arith.constant 0 : index
    %95 = vector.load %arg8[%c7_79, %c0_80] : memref<9x256xf32, #tpu.memory_space<vmem>>, vector<1x256xf32>
    %96 = vector.broadcast %95 : vector<1x256xf32> to vector<8x256xf32>
    %97 = arith.mulf %94, %96 : vector<8x256xf32>
    %c0_81 = arith.constant 0 : index
    %c18_82 = arith.constant 18 : index
    %98 = vector.load %arg17[%c0_81, %c18_82] : memref<8x274xf32, #tpu.memory_space<vmem>>, vector<8x256xf32>
    %c8_83 = arith.constant 8 : index
    %c0_84 = arith.constant 0 : index
    %99 = vector.load %arg8[%c8_83, %c0_84] : memref<9x256xf32, #tpu.memory_space<vmem>>, vector<1x256xf32>
    %100 = vector.broadcast %99 : vector<1x256xf32> to vector<8x256xf32>
    %101 = arith.mulf %98, %100 : vector<8x256xf32>
    %102 = tpu.concatenate %72, %76, %80, %84, %85, %89, %93, %97, %101 in 0 : vector<8x256xf32>, vector<8x256xf32>, vector<8x256xf32>, vector<8x256xf32>, vector<8x256xf32>, vector<8x256xf32>, vector<8x256xf32>, vector<8x256xf32>, vector<8x256xf32> -> vector<72x256xf32>
    %103 = arith.truncf %102 : vector<72x256xf32> to vector<72x256xbf16>
    %c1_85 = arith.constant 1 : index
    %c0_86 = arith.constant 0 : index
    %c0_87 = arith.constant 0 : index
    %104 = vector.load %arg6[%c1_85, %c0_86, %c0_87] : memref<3x8x72xbf16, #tpu.memory_space<vmem>>, vector<1x8x72xbf16>
    %105 = vector.shape_cast %104 : vector<1x8x72xbf16> to vector<8x72xbf16>
    %cst_88 = arith.constant dense<0.000000e+00> : vector<8x256xf32>
    %106 = tpu.matmul %105, %103, %cst_88 {dimension_numbers = #tpu.dot_dimension_numbers<[1], [0], [0], [1], [0, 0, 1, 1], [], []>} : vector<8x72xbf16>, vector<72x256xbf16>, vector<8x256xf32> -> vector<8x256xf32>
    %c1_89 = arith.constant 1 : index
    %c0_90 = arith.constant 0 : index
    %c0_91 = arith.constant 0 : index
    %107 = vector.load %arg7[%c1_89, %c0_90, %c0_91] : memref<3x8x1xf32, #tpu.memory_space<vmem>>, vector<1x8x1xf32>
    %108 = vector.shape_cast %107 : vector<1x8x1xf32> to vector<8x1xf32>
    %109 = vector.broadcast %108 : vector<8x1xf32> to vector<8x256xf32>
    %110 = arith.addf %106, %109 : vector<8x256xf32>
    %c8_92 = arith.constant 8 : index
    %c0_93 = arith.constant 0 : index
    %111 = vector.load %arg18[%c8_92, %c0_93] : memref<24x256xf32, #tpu.memory_space<vmem>>, vector<8x256xf32>
    tpu.vector_store %arg18[%c8_92, %c0_93], %110 {strides = array<i32>} : memref<24x256xf32, #tpu.memory_space<vmem>>, vector<8x256xf32>,
    %112 = vector.extract_strided_slice %16 {offsets = [16, 0], sizes = [8, 256], strides = [1, 1]} : vector<24x256xf32> to vector<8x256xf32>
    %113 = arith.addf %110, %112 : vector<8x256xf32>
    %c0_94 = arith.constant 0 : index
    %c9_95 = arith.constant 9 : index
    %114 = vector.load %arg17[%c0_94, %c9_95] : memref<8x274xf32, #tpu.memory_space<vmem>>, vector<8x256xf32>
    tpu.vector_store %arg17[%c0_94, %c9_95], %113 {strides = array<i32>} : memref<8x274xf32, #tpu.memory_space<vmem>>, vector<8x256xf32>,
    %c0_96 = arith.constant 0 : index
    %c0_97 = arith.constant 0 : index
    %115 = vector.load %arg17[%c0_96, %c0_97] : memref<8x274xf32, #tpu.memory_space<vmem>>, vector<8x256xf32>
    %c0_98 = arith.constant 0 : index
    %c0_99 = arith.constant 0 : index
    %116 = vector.load %arg8[%c0_98, %c0_99] : memref<9x256xf32, #tpu.memory_space<vmem>>, vector<1x256xf32>
    %117 = vector.broadcast %116 : vector<1x256xf32> to vector<8x256xf32>
    %118 = arith.mulf %115, %117 : vector<8x256xf32>
    %c0_100 = arith.constant 0 : index
    %c1_101 = arith.constant 1 : index
    %119 = vector.load %arg17[%c0_100, %c1_101] : memref<8x274xf32, #tpu.memory_space<vmem>>, vector<8x256xf32>
    %c1_102 = arith.constant 1 : index
    %c0_103 = arith.constant 0 : index
    %120 = vector.load %arg8[%c1_102, %c0_103] : memref<9x256xf32, #tpu.memory_space<vmem>>, vector<1x256xf32>
    %121 = vector.broadcast %120 : vector<1x256xf32> to vector<8x256xf32>
    %122 = arith.mulf %119, %121 : vector<8x256xf32>
    %c0_104 = arith.constant 0 : index
    %c2_105 = arith.constant 2 : index
    %123 = vector.load %arg17[%c0_104, %c2_105] : memref<8x274xf32, #tpu.memory_space<vmem>>, vector<8x256xf32>
    %c2_106 = arith.constant 2 : index
    %c0_107 = arith.constant 0 : index
    %124 = vector.load %arg8[%c2_106, %c0_107] : memref<9x256xf32, #tpu.memory_space<vmem>>, vector<1x256xf32>
    %125 = vector.broadcast %124 : vector<1x256xf32> to vector<8x256xf32>
    %126 = arith.mulf %123, %125 : vector<8x256xf32>
    %c0_108 = arith.constant 0 : index
    %c8_109 = arith.constant 8 : index
    %127 = vector.load %arg17[%c0_108, %c8_109] : memref<8x274xf32, #tpu.memory_space<vmem>>, vector<8x256xf32>
    %c3_110 = arith.constant 3 : index
    %c0_111 = arith.constant 0 : index
    %128 = vector.load %arg8[%c3_110, %c0_111] : memref<9x256xf32, #tpu.memory_space<vmem>>, vector<1x256xf32>
    %129 = vector.broadcast %128 : vector<1x256xf32> to vector<8x256xf32>
    %130 = arith.mulf %127, %129 : vector<8x256xf32>
    %c0_112 = arith.constant 0 : index
    %c9_113 = arith.constant 9 : index
    %131 = vector.load %arg17[%c0_112, %c9_113] : memref<8x274xf32, #tpu.memory_space<vmem>>, vector<8x256xf32>
    %c0_114 = arith.constant 0 : index
    %c10_115 = arith.constant 10 : index
    %132 = vector.load %arg17[%c0_114, %c10_115] : memref<8x274xf32, #tpu.memory_space<vmem>>, vector<8x256xf32>
    %c5_116 = arith.constant 5 : index
    %c0_117 = arith.constant 0 : index
    %133 = vector.load %arg8[%c5_116, %c0_117] : memref<9x256xf32, #tpu.memory_space<vmem>>, vector<1x256xf32>
    %134 = vector.broadcast %133 : vector<1x256xf32> to vector<8x256xf32>
    %135 = arith.mulf %132, %134 : vector<8x256xf32>
    %c0_118 = arith.constant 0 : index
    %c16_119 = arith.constant 16 : index
    %136 = vector.load %arg17[%c0_118, %c16_119] : memref<8x274xf32, #tpu.memory_space<vmem>>, vector<8x256xf32>
    %c6_120 = arith.constant 6 : index
    %c0_121 = arith.constant 0 : index
    %137 = vector.load %arg8[%c6_120, %c0_121] : memref<9x256xf32, #tpu.memory_space<vmem>>, vector<1x256xf32>
    %138 = vector.broadcast %137 : vector<1x256xf32> to vector<8x256xf32>
    %139 = arith.mulf %136, %138 : vector<8x256xf32>
    %c0_122 = arith.constant 0 : index
    %c17_123 = arith.constant 17 : index
    %140 = vector.load %arg17[%c0_122, %c17_123] : memref<8x274xf32, #tpu.memory_space<vmem>>, vector<8x256xf32>
    %c7_124 = arith.constant 7 : index
    %c0_125 = arith.constant 0 : index
    %141 = vector.load %arg8[%c7_124, %c0_125] : memref<9x256xf32, #tpu.memory_space<vmem>>, vector<1x256xf32>
    %142 = vector.broadcast %141 : vector<1x256xf32> to vector<8x256xf32>
    %143 = arith.mulf %140, %142 : vector<8x256xf32>
    %c0_126 = arith.constant 0 : index
    %c18_127 = arith.constant 18 : index
    %144 = vector.load %arg17[%c0_126, %c18_127] : memref<8x274xf32, #tpu.memory_space<vmem>>, vector<8x256xf32>
    %c8_128 = arith.constant 8 : index
    %c0_129 = arith.constant 0 : index
    %145 = vector.load %arg8[%c8_128, %c0_129] : memref<9x256xf32, #tpu.memory_space<vmem>>, vector<1x256xf32>
    %146 = vector.broadcast %145 : vector<1x256xf32> to vector<8x256xf32>
    %147 = arith.mulf %144, %146 : vector<8x256xf32>
    %148 = tpu.concatenate %118, %122, %126, %130, %131, %135, %139, %143, %147 in 0 : vector<8x256xf32>, vector<8x256xf32>, vector<8x256xf32>, vector<8x256xf32>, vector<8x256xf32>, vector<8x256xf32>, vector<8x256xf32>, vector<8x256xf32>, vector<8x256xf32> -> vector<72x256xf32>
    %149 = arith.truncf %148 : vector<72x256xf32> to vector<72x256xbf16>
    %c2_130 = arith.constant 2 : index
    %c0_131 = arith.constant 0 : index
    %c0_132 = arith.constant 0 : index
    %150 = vector.load %arg6[%c2_130, %c0_131, %c0_132] : memref<3x8x72xbf16, #tpu.memory_space<vmem>>, vector<1x8x72xbf16>
    %151 = vector.shape_cast %150 : vector<1x8x72xbf16> to vector<8x72xbf16>
    %cst_133 = arith.constant dense<0.000000e+00> : vector<8x256xf32>
    %152 = tpu.matmul %151, %149, %cst_133 {dimension_numbers = #tpu.dot_dimension_numbers<[1], [0], [0], [1], [0, 0, 1, 1], [], []>} : vector<8x72xbf16>, vector<72x256xbf16>, vector<8x256xf32> -> vector<8x256xf32>
    %c2_134 = arith.constant 2 : index
    %c0_135 = arith.constant 0 : index
    %c0_136 = arith.constant 0 : index
    %153 = vector.load %arg7[%c2_134, %c0_135, %c0_136] : memref<3x8x1xf32, #tpu.memory_space<vmem>>, vector<1x8x1xf32>
    %154 = vector.shape_cast %153 : vector<1x8x1xf32> to vector<8x1xf32>
    %155 = vector.broadcast %154 : vector<8x1xf32> to vector<8x256xf32>
    %156 = arith.addf %152, %155 : vector<8x256xf32>
    %c16_137 = arith.constant 16 : index
    %c0_138 = arith.constant 0 : index
    %157 = vector.load %arg18[%c16_137, %c0_138] : memref<24x256xf32, #tpu.memory_space<vmem>>, vector<8x256xf32>
    tpu.vector_store %arg18[%c16_137, %c0_138], %156 {strides = array<i32>} : memref<24x256xf32, #tpu.memory_space<vmem>>, vector<8x256xf32>,
    %c0_139 = arith.constant 0 : index
    %c0_140 = arith.constant 0 : index
    %158 = vector.load %arg18[%c0_139, %c0_140] : memref<24x256xf32, #tpu.memory_space<vmem>>, vector<24x256xf32>
    %c0_141 = arith.constant 0 : index
    %c0_142 = arith.constant 0 : index
    %159 = vector.load %arg9[%c0_141, %c0_142] : memref<256x4xf32, #tpu.memory_space<vmem>>, vector<256x4xf32>
    %cst_143 = arith.constant dense<0.000000e+00> : vector<24x4xf32>
    %160 = tpu.matmul %158, %159, %cst_143 {dimension_numbers = #tpu.dot_dimension_numbers<[1], [0], [0], [1], [0, 0, 1, 1], [], []>} : vector<24x256xf32>, vector<256x4xf32>, vector<24x4xf32> -> vector<24x4xf32>
    %c0_144 = arith.constant 0 : index
    %c0_145 = arith.constant 0 : index
    %161 = vector.load %arg11[%c0_144, %c0_145] : memref<24x24xbf16, #tpu.memory_space<vmem>>, vector<24x24xbf16>
    %162 = arith.truncf %160 : vector<24x4xf32> to vector<24x4xbf16>
    %cst_146 = arith.constant dense<0.000000e+00> : vector<24x4xf32>
    %163 = tpu.matmul %161, %162, %cst_146 {dimension_numbers = #tpu.dot_dimension_numbers<[1], [0], [0], [1], [0, 0, 1, 1], [], []>} : vector<24x24xbf16>, vector<24x4xbf16>, vector<24x4xf32> -> vector<24x4xf32>
    %cst_147 = arith.constant 0.000000e+00 : f32
    %164 = vector.broadcast %cst_147 : f32 to vector<24x4xf32>
    %165 = arith.maximumf %163, %164 : vector<24x4xf32>
    %c0_148 = arith.constant 0 : index
    %c0_149 = arith.constant 0 : index
    %166 = vector.load %arg12[%c0_148, %c0_149] : memref<24x24xbf16, #tpu.memory_space<vmem>>, vector<24x24xbf16>
    %167 = arith.truncf %165 : vector<24x4xf32> to vector<24x4xbf16>
    %cst_150 = arith.constant dense<0.000000e+00> : vector<24x4xf32>
    %168 = tpu.matmul %166, %167, %cst_150 {dimension_numbers = #tpu.dot_dimension_numbers<[1], [0], [0], [1], [0, 0, 1, 1], [], []>} : vector<24x24xbf16>, vector<24x4xbf16>, vector<24x4xf32> -> vector<24x4xf32>
    %cst_151 = arith.constant 0.000000e+00 : f32
    %169 = vector.broadcast %cst_151 : f32 to vector<24x4xf32>
    %170 = arith.subf %169, %168 : vector<24x4xf32>
    %171 = math.exp %170 : vector<24x4xf32>
    %cst_152 = arith.constant 1.000000e+00 : f32
    %172 = vector.broadcast %cst_152 : f32 to vector<24x4xf32>
    %173 = arith.addf %172, %171 : vector<24x4xf32>
    %cst_153 = arith.constant 1.000000e+00 : f32
    %174 = vector.broadcast %cst_153 : f32 to vector<24x4xf32>
    %175 = arith.divf %174, %173 : vector<24x4xf32>
    %176 = vector.extract_strided_slice %175 {offsets = [0, 0], sizes = [8, 4], strides = [1, 1]} : vector<24x4xf32> to vector<8x4xf32>
    %177 = vector.extract_strided_slice %175 {offsets = [8, 0], sizes = [8, 4], strides = [1, 1]} : vector<24x4xf32> to vector<8x4xf32>
    %178 = vector.extract_strided_slice %175 {offsets = [16, 0], sizes = [8, 4], strides = [1, 1]} : vector<24x4xf32> to vector<8x4xf32>
    %179 = arith.maximumf %176, %177 : vector<8x4xf32>
    %180 = arith.maximumf %179, %178 : vector<8x4xf32>
    %181 = arith.subf %176, %180 : vector<8x4xf32>
    %182 = math.exp %181 : vector<8x4xf32>
    %183 = arith.subf %177, %180 : vector<8x4xf32>
    %184 = math.exp %183 : vector<8x4xf32>
    %185 = arith.subf %178, %180 : vector<8x4xf32>
    %186 = math.exp %185 : vector<8x4xf32>
    %187 = arith.addf %182, %184 : vector<8x4xf32>
    %188 = arith.addf %187, %186 : vector<8x4xf32>
    %cst_154 = arith.constant 1.000000e+00 : f32
    %189 = vector.broadcast %cst_154 : f32 to vector<8x4xf32>
    %190 = arith.divf %189, %188 : vector<8x4xf32>
    %191 = arith.mulf %182, %190 : vector<8x4xf32>
    %c0_155 = arith.constant 0 : index
    %c0_156 = arith.constant 0 : index
    %c0_157 = arith.constant 0 : index
    %192 = vector.load %arg13[%c0_155, %c0_156, %c0_157] : memref<3x8x1xf32, #tpu.memory_space<vmem>>, vector<1x8x1xf32>
    %193 = vector.shape_cast %192 : vector<1x8x1xf32> to vector<8x1xf32>
    %194 = vector.broadcast %193 : vector<8x1xf32> to vector<8x4xf32>
    %195 = arith.mulf %191, %194 : vector<8x4xf32>
    %c0_158 = arith.constant 0 : index
    %c0_159 = arith.constant 0 : index
    %196 = vector.load %arg10[%c0_158, %c0_159] : memref<4x256xf32, #tpu.memory_space<vmem>>, vector<4x256xf32>
    %cst_160 = arith.constant dense<0.000000e+00> : vector<8x256xf32>
    %197 = tpu.matmul %195, %196, %cst_160 {dimension_numbers = #tpu.dot_dimension_numbers<[1], [0], [0], [1], [0, 0, 1, 1], [], []>} : vector<8x4xf32>, vector<4x256xf32>, vector<8x256xf32> -> vector<8x256xf32>
    %c0_161 = arith.constant 0 : index
    %c0_162 = arith.constant 0 : index
    %198 = vector.load %arg18[%c0_161, %c0_162] : memref<24x256xf32, #tpu.memory_space<vmem>>, vector<8x256xf32>
    %199 = arith.mulf %198, %197 : vector<8x256xf32>
    %c0_163 = arith.constant 0 : index
    %c0_164 = arith.constant 0 : index
    %c0_165 = arith.constant 0 : index
    %200 = vector.load %arg14[%c0_163, %c0_164, %c0_165] : memref<3x8x1xf32, #tpu.memory_space<vmem>>, vector<1x8x1xf32>
    %201 = vector.shape_cast %200 : vector<1x8x1xf32> to vector<8x1xf32>
    %202 = vector.broadcast %201 : vector<8x1xf32> to vector<8x256xf32>
    %203 = arith.addf %199, %202 : vector<8x256xf32>
    %cst_166 = arith.constant 0.000000e+00 : f32
    %204 = vector.broadcast %cst_166 : f32 to vector<8x256xf32>
    %205 = arith.maximumf %203, %204 : vector<8x256xf32>
    %c0_167 = arith.constant 0 : index
    %c0_168 = arith.constant 0 : index
    %206 = vector.load %arg18[%c0_167, %c0_168] : memref<24x256xf32, #tpu.memory_space<vmem>>, vector<8x256xf32>
    tpu.vector_store %arg18[%c0_167, %c0_168], %205 {strides = array<i32>} : memref<24x256xf32, #tpu.memory_space<vmem>>, vector<8x256xf32>,
    %207 = arith.mulf %184, %190 : vector<8x4xf32>
    %c1_169 = arith.constant 1 : index
    %c0_170 = arith.constant 0 : index
    %c0_171 = arith.constant 0 : index
    %208 = vector.load %arg13[%c1_169, %c0_170, %c0_171] : memref<3x8x1xf32, #tpu.memory_space<vmem>>, vector<1x8x1xf32>
    %209 = vector.shape_cast %208 : vector<1x8x1xf32> to vector<8x1xf32>
    %210 = vector.broadcast %209 : vector<8x1xf32> to vector<8x4xf32>
    %211 = arith.mulf %207, %210 : vector<8x4xf32>
    %c0_172 = arith.constant 0 : index
    %c0_173 = arith.constant 0 : index
    %212 = vector.load %arg10[%c0_172, %c0_173] : memref<4x256xf32, #tpu.memory_space<vmem>>, vector<4x256xf32>
    %cst_174 = arith.constant dense<0.000000e+00> : vector<8x256xf32>
    %213 = tpu.matmul %211, %212, %cst_174 {dimension_numbers = #tpu.dot_dimension_numbers<[1], [0], [0], [1], [0, 0, 1, 1], [], []>} : vector<8x4xf32>, vector<4x256xf32>, vector<8x256xf32> -> vector<8x256xf32>
    %c8_175 = arith.constant 8 : index
    %c0_176 = arith.constant 0 : index
    %214 = vector.load %arg18[%c8_175, %c0_176] : memref<24x256xf32, #tpu.memory_space<vmem>>, vector<8x256xf32>
    %215 = arith.mulf %214, %213 : vector<8x256xf32>
    %c1_177 = arith.constant 1 : index
    %c0_178 = arith.constant 0 : index
    %c0_179 = arith.constant 0 : index
    %216 = vector.load %arg14[%c1_177, %c0_178, %c0_179] : memref<3x8x1xf32, #tpu.memory_space<vmem>>, vector<1x8x1xf32>
    %217 = vector.shape_cast %216 : vector<1x8x1xf32> to vector<8x1xf32>
    %218 = vector.broadcast %217 : vector<8x1xf32> to vector<8x256xf32>
    %219 = arith.addf %215, %218 : vector<8x256xf32>
    %cst_180 = arith.constant 0.000000e+00 : f32
    %220 = vector.broadcast %cst_180 : f32 to vector<8x256xf32>
    %221 = arith.maximumf %219, %220 : vector<8x256xf32>
    %c8_181 = arith.constant 8 : index
    %c0_182 = arith.constant 0 : index
    %222 = vector.load %arg18[%c8_181, %c0_182] : memref<24x256xf32, #tpu.memory_space<vmem>>, vector<8x256xf32>
    tpu.vector_store %arg18[%c8_181, %c0_182], %221 {strides = array<i32>} : memref<24x256xf32, #tpu.memory_space<vmem>>, vector<8x256xf32>,
    %223 = arith.mulf %186, %190 : vector<8x4xf32>
    %c2_183 = arith.constant 2 : index
    %c0_184 = arith.constant 0 : index
    %c0_185 = arith.constant 0 : index
    %224 = vector.load %arg13[%c2_183, %c0_184, %c0_185] : memref<3x8x1xf32, #tpu.memory_space<vmem>>, vector<1x8x1xf32>
    %225 = vector.shape_cast %224 : vector<1x8x1xf32> to vector<8x1xf32>
    %226 = vector.broadcast %225 : vector<8x1xf32> to vector<8x4xf32>
    %227 = arith.mulf %223, %226 : vector<8x4xf32>
    %c0_186 = arith.constant 0 : index
    %c0_187 = arith.constant 0 : index
    %228 = vector.load %arg10[%c0_186, %c0_187] : memref<4x256xf32, #tpu.memory_space<vmem>>, vector<4x256xf32>
    %cst_188 = arith.constant dense<0.000000e+00> : vector<8x256xf32>
    %229 = tpu.matmul %227, %228, %cst_188 {dimension_numbers = #tpu.dot_dimension_numbers<[1], [0], [0], [1], [0, 0, 1, 1], [], []>} : vector<8x4xf32>, vector<4x256xf32>, vector<8x256xf32> -> vector<8x256xf32>
    %c16_189 = arith.constant 16 : index
    %c0_190 = arith.constant 0 : index
    %230 = vector.load %arg18[%c16_189, %c0_190] : memref<24x256xf32, #tpu.memory_space<vmem>>, vector<8x256xf32>
    %231 = arith.mulf %230, %229 : vector<8x256xf32>
    %c2_191 = arith.constant 2 : index
    %c0_192 = arith.constant 0 : index
    %c0_193 = arith.constant 0 : index
    %232 = vector.load %arg14[%c2_191, %c0_192, %c0_193] : memref<3x8x1xf32, #tpu.memory_space<vmem>>, vector<1x8x1xf32>
    %233 = vector.shape_cast %232 : vector<1x8x1xf32> to vector<8x1xf32>
    %234 = vector.broadcast %233 : vector<8x1xf32> to vector<8x256xf32>
    %235 = arith.addf %231, %234 : vector<8x256xf32>
    %cst_194 = arith.constant 0.000000e+00 : f32
    %236 = vector.broadcast %cst_194 : f32 to vector<8x256xf32>
    %237 = arith.maximumf %235, %236 : vector<8x256xf32>
    %c16_195 = arith.constant 16 : index
    %c0_196 = arith.constant 0 : index
    %238 = vector.load %arg18[%c16_195, %c0_196] : memref<24x256xf32, #tpu.memory_space<vmem>>, vector<8x256xf32>
    tpu.vector_store %arg18[%c16_195, %c0_196], %237 {strides = array<i32>} : memref<24x256xf32, #tpu.memory_space<vmem>>, vector<8x256xf32>,
    %c0_197 = arith.constant 0 : index
    %c0_198 = arith.constant 0 : index
    %239 = vector.load %arg15[%c0_197, %c0_198] : memref<32x24xbf16, #tpu.memory_space<vmem>>, vector<32x24xbf16>
    %c0_199 = arith.constant 0 : index
    %c0_200 = arith.constant 0 : index
    %240 = vector.load %arg18[%c0_199, %c0_200] : memref<24x256xf32, #tpu.memory_space<vmem>>, vector<24x256xf32>
    %241 = arith.truncf %240 : vector<24x256xf32> to vector<24x256xbf16>
    %cst_201 = arith.constant dense<0.000000e+00> : vector<32x256xf32>
    %242 = tpu.matmul %239, %241, %cst_201 {dimension_numbers = #tpu.dot_dimension_numbers<[1], [0], [0], [1], [0, 0, 1, 1], [], []>} : vector<32x24xbf16>, vector<24x256xbf16>, vector<32x256xf32> -> vector<32x256xf32>
    %243 = arith.addf %0, %242 : vector<32x256xf32>
    %c0_202 = arith.constant 0 : index
    %c0_203 = arith.constant 0 : index
    %244 = vector.load %arg16[%c0_202, %c0_203] : memref<32x256xf32, #tpu.memory_space<vmem>>, vector<32x256xf32>
    tpu.vector_store %arg16[%c0_202, %c0_203], %243 {strides = array<i32>} : memref<32x256xf32, #tpu.memory_space<vmem>>, vector<32x256xf32>,
    return
  }
  func.func @transform_0(%arg0: i32) -> (i32, i32) {
    %c0_i32 = arith.constant 0 : i32
    %c0_i32_0 = arith.constant 0 : i32
    return %c0_i32, %arg0 : i32, i32
  }
  func.func @transform_1(%arg0: i32) -> (i32, i32) {
    %c0_i32 = arith.constant 0 : i32
    %c0_i32_0 = arith.constant 0 : i32
    %c0_i32_1 = arith.constant 0 : i32
    return %c0_i32, %c0_i32_0 : i32, i32
  }
  func.func @transform_2(%arg0: i32) -> (i32, i32) {
    %c0_i32 = arith.constant 0 : i32
    %c0_i32_0 = arith.constant 0 : i32
    %c0_i32_1 = arith.constant 0 : i32
    return %c0_i32, %c0_i32_0 : i32, i32
  }
  func.func @transform_3(%arg0: i32) -> (i32, i32) {
    %c0_i32 = arith.constant 0 : i32
    %c0_i32_0 = arith.constant 0 : i32
    %c0_i32_1 = arith.constant 0 : i32
    return %c0_i32, %c0_i32_0 : i32, i32
  }
  func.func @transform_4(%arg0: i32) -> (i32, i32) {
    %c0_i32 = arith.constant 0 : i32
    %c0_i32_0 = arith.constant 0 : i32
    %c0_i32_1 = arith.constant 0 : i32
    return %c0_i32, %c0_i32_0 : i32, i32
  }
  func.func @transform_5(%arg0: i32) -> (i32, i32, i32) {
    %c0_i32 = arith.constant 0 : i32
    %c0_i32_0 = arith.constant 0 : i32
    %c0_i32_1 = arith.constant 0 : i32
    %c0_i32_2 = arith.constant 0 : i32
    return %c0_i32, %c0_i32_0, %c0_i32_1 : i32, i32, i32
  }
  func.func @transform_6(%arg0: i32) -> (i32, i32, i32) {
    %c0_i32 = arith.constant 0 : i32
    %c0_i32_0 = arith.constant 0 : i32
    %c0_i32_1 = arith.constant 0 : i32
    %c0_i32_2 = arith.constant 0 : i32
    return %c0_i32, %c0_i32_0, %c0_i32_1 : i32, i32, i32
  }
  func.func @transform_7(%arg0: i32) -> (i32, i32) {
    %c0_i32 = arith.constant 0 : i32
    %c0_i32_0 = arith.constant 0 : i32
    %c0_i32_1 = arith.constant 0 : i32
    return %c0_i32, %c0_i32_0 : i32, i32
  }
  func.func @transform_8(%arg0: i32) -> (i32, i32) {
    %c0_i32 = arith.constant 0 : i32
    %c0_i32_0 = arith.constant 0 : i32
    %c0_i32_1 = arith.constant 0 : i32
    return %c0_i32, %c0_i32_0 : i32, i32
  }
  func.func @transform_9(%arg0: i32) -> (i32, i32) {
    %c0_i32 = arith.constant 0 : i32
    %c0_i32_0 = arith.constant 0 : i32
    %c0_i32_1 = arith.constant 0 : i32
    return %c0_i32, %c0_i32_0 : i32, i32
  }
  func.func @transform_10(%arg0: i32) -> (i32, i32) {
    %c0_i32 = arith.constant 0 : i32
    %c0_i32_0 = arith.constant 0 : i32
    %c0_i32_1 = arith.constant 0 : i32
    return %c0_i32, %c0_i32_0 : i32, i32
  }
  func.func @transform_11(%arg0: i32) -> (i32, i32) {
    %c0_i32 = arith.constant 0 : i32
    %c0_i32_0 = arith.constant 0 : i32
    %c0_i32_1 = arith.constant 0 : i32
    return %c0_i32, %c0_i32_0 : i32, i32
  }
  func.func @transform_12(%arg0: i32) -> (i32, i32, i32) {
    %c0_i32 = arith.constant 0 : i32
    %c0_i32_0 = arith.constant 0 : i32
    %c0_i32_1 = arith.constant 0 : i32
    %c0_i32_2 = arith.constant 0 : i32
    return %c0_i32, %c0_i32_0, %c0_i32_1 : i32, i32, i32
  }
  func.func @transform_13(%arg0: i32) -> (i32, i32, i32) {
    %c0_i32 = arith.constant 0 : i32
    %c0_i32_0 = arith.constant 0 : i32
    %c0_i32_1 = arith.constant 0 : i32
    %c0_i32_2 = arith.constant 0 : i32
    return %c0_i32, %c0_i32_0, %c0_i32_1 : i32, i32, i32
  }
  func.func @transform_14(%arg0: i32) -> (i32, i32) {
    %c0_i32 = arith.constant 0 : i32
    %c0_i32_0 = arith.constant 0 : i32
    %c0_i32_1 = arith.constant 0 : i32
    return %c0_i32, %c0_i32_0 : i32, i32
  }
  func.func @transform_15(%arg0: i32) -> (i32, i32) {
    %c0_i32 = arith.constant 0 : i32
    %c0_i32_0 = arith.constant 0 : i32
    return %c0_i32, %arg0 : i32, i32
  }
}

</mosaic_0001>

<llo_original>
// kernel: tpu_custom_call.1
$region0: #{tpu_custom_call.1}
  #allocation0 [shape = 'u32[]', space=smem, size = 0x4, offset = 0x4, fixed_abs, tag = 'smem constant byte address 0x4 - core index']
  #allocation1 [shape = 'u32[144,128]{1,0:T(1,128)}', space=vmem, size = 0x12000, scoped, tag = 'internal scratch']
  #allocation2 [shape = 'f32[8,274]{1,0:T(8,128)}', space=vmem, size = 0x3000, scoped, tag = 'scratch operand']
  #allocation3 [shape = 'f32[24,256]{1,0:T(8,128)}', space=vmem, size = 0x6000, scoped, tag = 'scratch operand']
  %s0 = inlined_call_operand.hbm [shape: f32[32,512], index: 0, kind: input, shape index: {}, may-alias: {0,15}]
  %s1 = inlined_call_operand.vmem [shape: f32[32,1], index: 1, kind: input, shape index: {}]
  %s2 = inlined_call_operand.vmem [shape: f32[32,1], index: 2, kind: input, shape index: {}]
  %s3 = inlined_call_operand.vmem [shape: bf16[24,32], index: 3, kind: input, shape index: {}]
  %s4 = inlined_call_operand.vmem [shape: f32[24,1], index: 4, kind: input, shape index: {}]
  %s5 = inlined_call_operand.vmem [shape: bf16[3,8,72], index: 5, kind: input, shape index: {}]
  %s6 = inlined_call_operand.vmem [shape: f32[3,8,1], index: 6, kind: input, shape index: {}]
  %s7 = inlined_call_operand.vmem [shape: f32[9,256], index: 7, kind: input, shape index: {}]
  %s8 = inlined_call_operand.vmem [shape: f32[256,4], index: 8, kind: input, shape index: {}]
  %s9 = inlined_call_operand.vmem [shape: f32[4,256], index: 9, kind: input, shape index: {}]
  %s10 = inlined_call_operand.vmem [shape: bf16[24,24], index: 10, kind: input, shape index: {}]
  %s11 = inlined_call_operand.vmem [shape: bf16[24,24], index: 11, kind: input, shape index: {}]
  %s12 = inlined_call_operand.vmem [shape: f32[3,8,1], index: 12, kind: input, shape index: {}]
  %s13 = inlined_call_operand.vmem [shape: f32[3,8,1], index: 13, kind: input, shape index: {}]
  %s14 = inlined_call_operand.vmem [shape: bf16[32,24], index: 14, kind: input, shape index: {}]
  %s15 = inlined_call_operand.hbm [shape: f32[32,512], index: 15, kind: output, shape index: {}, may-alias: {0,15}]
  %s16 = sld [smem:[#allocation0]]
  $region97: #{tpu_custom_call.1} parent=0
    _
  %s18 = ssub.s32 1, %s16
  %s19 = scalar_select 0, %s18, %s16
  $region1: #{tpu_custom_call.1} parent=0
    #allocation4 [shape = 'u8[65536]{0}', space=vmem, size = 0x10000, scoped, tag = 'input window, operand 0']
    #allocation5 [shape = 's32[2]{0}', space=sflag, size = 0x8, scoped, tag = 'scoped memory for tpu_custom_call.1']
    #allocation6 [shape = 's32[2]{0}', space=sflag, size = 0x8, scoped, tag = 'scoped memory for tpu_custom_call.1']
    #allocation7 [shape = 'u8[65536]{0}', space=vmem, size = 0x10000, scoped, tag = 'output window, operand 0']
    %20 = vsyncpa [#allocation5], 0
    %s21 = scalar_lea.sflag [#allocation5], 1
    %22 = vsyncpa %s21, 0
    %23 = vsyncpa [#allocation6], 0
    %s24 = scalar_lea.sflag [#allocation6], 1
    %25 = vsyncpa %s24, 0
    loop: start=0, step=1, limit=4
    $region2: #{tpu_custom_call.1} parent=1 // loop_pre_header
      _
    $region3: #{tpu_custom_call.1} parent=1 // loop_header
      %s27 = sphi 0, %s31
      %p28 = scmp.ge.s32.totalorder %s27, 4
      %s37 = sphi 0, %s39
      %s40 = sphi 0, %s37
      %s41 = sphi 0, %s40
      %s57 = sphi 0, %s41
      %s61 = sphi 0, %s61
      %s63 = sphi 0, %s61
      %s64 = sphi 0, %s63
      %s78 = sphi 0, %s64
      %s82 = sphi 0, %s82
      %s84 = sphi 0, %s82
      %s85 = sphi 0, %s84
      %s99 = sphi 0, %s85
      %s103 = sphi 0, %s103
      %s105 = sphi 0, %s103
      %s106 = sphi 0, %s105
      %s120 = sphi 0, %s106
      %s124 = sphi 0, %s124
      %s126 = sphi 0, %s124
      %s127 = sphi 0, %s126
      %s141 = sphi 0, %s127
      %s145 = sphi 0, %s145
      %s147 = sphi 0, %s145
      %s148 = sphi 0, %s147
      %s162 = sphi 0, %s148
      %s166 = sphi 0, %s166
      %s168 = sphi 0, %s166
      %s169 = sphi 0, %s168
      %s183 = sphi 0, %s169
      %s187 = sphi 0, %s187
      %s189 = sphi 0, %s187
      %s190 = sphi 0, %s189
      %s204 = sphi 0, %s190
      %s208 = sphi 0, %s208
      %s210 = sphi 0, %s208
      %s211 = sphi 0, %s210
      %s225 = sphi 0, %s211
      %s229 = sphi 0, %s229
      %s231 = sphi 0, %s229
      %s232 = sphi 0, %s231
      %s246 = sphi 0, %s232
      %s250 = sphi 0, %s250
      %s252 = sphi 0, %s250
      %s253 = sphi 0, %s252
      %s267 = sphi 0, %s253
      %s271 = sphi 0, %s271
      %s273 = sphi 0, %s271
      %s274 = sphi 0, %s273
      %s288 = sphi 0, %s274
      %s292 = sphi 0, %s292
      %s294 = sphi 0, %s292
      %s295 = sphi 0, %s294
      %s309 = sphi 0, %s295
      %s313 = sphi 0, %s313
      %s315 = sphi 0, %s313
      %s316 = sphi 0, %s315
      %s330 = sphi 0, %s316
      %s334 = sphi 0, %s334
      %s336 = sphi 0, %s334
      %s337 = sphi 0, %s336
      %s351 = sphi 0, %s337
      %s357 = sphi 0, %s359
      %s360 = sphi 0, %s357
      %s361 = sphi 0, %s360
      %s377 = sphi 0, %s361
    $region4: #{tpu_custom_call.1} parent=1 // loop_header_branch
      %30 = sbr.rel (%p28) target = $region8
    $region5: #{tpu_custom_call.1} parent=1 // loop_body
      %s32 = ssub.s32 %s27, 1
      %s33 = ssub.s32 %s27, 2
      %s34 = sadd.s32 %s27, 1
      %s35 = ssub.s32 %s27, %s34
      %p36 = scmp.eq.s32.totalorder %s35, 0
      %s38 = sadd.s32 %s37, 1
      %s39 = scalar_select %p36, %s37, %s38
      %p42 = pneg %p36
      %p43 = scmp.eq.s32.totalorder %s27, 1
      %p44 = por %p42, %p43
      %p45 = scmp.ne.s32.totalorder %s37, %s40
      %p46 = scmp.eq.s32.totalorder %s27, 0
      %p47 = por %p45, %p46
      %p48 = scmp.ne.s32.totalorder %s37, %s40
      %p49 = scmp.eq.s32.totalorder %s32, 1
      %p50 = por %p48, %p49
      %p51 = scmp.ne.s32.totalorder %s40, %s41
      %p52 = scmp.eq.s32.totalorder %s32, 0
      %p53 = por %p51, %p52
      %p54 = scmp.ne.s32.totalorder %s40, %s41
      %p55 = scmp.eq.s32.totalorder %s33, 1
      %p56 = por %p54, %p55
      %p58 = scmp.ne.s32.totalorder %s41, %s57
      %p59 = scmp.eq.s32.totalorder %s33, 0
      %p60 = por %p58, %p59
      %s62 = sadd.s32 %s61, 1
      %p65 = scmp.eq.s32.totalorder %s27, 1
      %p66 = scmp.ne.s32.totalorder %s61, %s63
      %p67 = scmp.eq.s32.totalorder %s27, 0
      %p68 = por %p66, %p67
      %p69 = scmp.ne.s32.totalorder %s61, %s63
      %p70 = scmp.eq.s32.totalorder %s32, 1
      %p71 = por %p69, %p70
      %p72 = scmp.ne.s32.totalorder %s63, %s64
      %p73 = scmp.eq.s32.totalorder %s32, 0
      %p74 = por %p72, %p73
      %p75 = scmp.ne.s32.totalorder %s63, %s64
      %p76 = scmp.eq.s32.totalorder %s33, 1
      %p77 = por %p75, %p76
      %p79 = scmp.ne.s32.totalorder %s64, %s78
      %p80 = scmp.eq.s32.totalorder %s33, 0
      %p81 = por %p79, %p80
      %s83 = sadd.s32 %s82, 1
      %p86 = scmp.eq.s32.totalorder %s27, 1
      %p87 = scmp.ne.s32.totalorder %s82, %s84
      %p88 = scmp.eq.s32.totalorder %s27, 0
      %p89 = por %p87, %p88
      %p90 = scmp.ne.s32.totalorder %s82, %s84
      %p91 = scmp.eq.s32.totalorder %s32, 1
      %p92 = por %p90, %p91
      %p93 = scmp.ne.s32.totalorder %s84, %s85
      %p94 = scmp.eq.s32.totalorder %s32, 0
      %p95 = por %p93, %p94
      %p96 = scmp.ne.s32.totalorder %s84, %s85
      %p97 = scmp.eq.s32.totalorder %s33, 1
      %p98 = por %p96, %p97
      %p100 = scmp.ne.s32.totalorder %s85, %s99
      %p101 = scmp.eq.s32.totalorder %s33, 0
      %p102 = por %p100, %p101
      %s104 = sadd.s32 %s103, 1
      %p107 = scmp.eq.s32.totalorder %s27, 1
      %p108 = scmp.ne.s32.totalorder %s103, %s105
      %p109 = scmp.eq.s32.totalorder %s27, 0
      %p110 = por %p108, %p109
      %p111 = scmp.ne.s32.totalorder %s103, %s105
      %p112 = scmp.eq.s32.totalorder %s32, 1
      %p113 = por %p111, %p112
      %p114 = scmp.ne.s32.totalorder %s105, %s106
      %p115 = scmp.eq.s32.totalorder %s32, 0
      %p116 = por %p114, %p115
      %p117 = scmp.ne.s32.totalorder %s105, %s106
      %p118 = scmp.eq.s32.totalorder %s33, 1
      %p119 = por %p117, %p118
      %p121 = scmp.ne.s32.totalorder %s106, %s120
      %p122 = scmp.eq.s32.totalorder %s33, 0
      %p123 = por %p121, %p122
      %s125 = sadd.s32 %s124, 1
      %p128 = scmp.eq.s32.totalorder %s27, 1
      %p129 = scmp.ne.s32.totalorder %s124, %s126
      %p130 = scmp.eq.s32.totalorder %s27, 0
      %p131 = por %p129, %p130
      %p132 = scmp.ne.s32.totalorder %s124, %s126
      %p133 = scmp.eq.s32.totalorder %s32, 1
      %p134 = por %p132, %p133
      %p135 = scmp.ne.s32.totalorder %s126, %s127
      %p136 = scmp.eq.s32.totalorder %s32, 0
      %p137 = por %p135, %p136
      %p138 = scmp.ne.s32.totalorder %s126, %s127
      %p139 = scmp.eq.s32.totalorder %s33, 1
      %p140 = por %p138, %p139
      %p142 = scmp.ne.s32.totalorder %s127, %s141
      %p143 = scmp.eq.s32.totalorder %s33, 0
      %p144 = por %p142, %p143
      %s146 = sadd.s32 %s145, 1
      %p149 = scmp.eq.s32.totalorder %s27, 1
      %p150 = scmp.ne.s32.totalorder %s145, %s147
      %p151 = scmp.eq.s32.totalorder %s27, 0
      %p152 = por %p150, %p151
      %p153 = scmp.ne.s32.totalorder %s145, %s147
      %p154 = scmp.eq.s32.totalorder %s32, 1
      %p155 = por %p153, %p154
      %p156 = scmp.ne.s32.totalorder %s147, %s148
      %p157 = scmp.eq.s32.totalorder %s32, 0
      %p158 = por %p156, %p157
      %p159 = scmp.ne.s32.totalorder %s147, %s148
      %p160 = scmp.eq.s32.totalorder %s33, 1
      %p161 = por %p159, %p160
      %p163 = scmp.ne.s32.totalorder %s148, %s162
      %p164 = scmp.eq.s32.totalorder %s33, 0
      %p165 = por %p163, %p164
      %s167 = sadd.s32 %s166, 1
      %p170 = scmp.eq.s32.totalorder %s27, 1
      %p171 = scmp.ne.s32.totalorder %s166, %s168
      %p172 = scmp.eq.s32.totalorder %s27, 0
      %p173 = por %p171, %p172
      %p174 = scmp.ne.s32.totalorder %s166, %s168
      %p175 = scmp.eq.s32.totalorder %s32, 1
      %p176 = por %p174, %p175
      %p177 = scmp.ne.s32.totalorder %s168, %s169
      %p178 = scmp.eq.s32.totalorder %s32, 0
      %p179 = por %p177, %p178
      %p180 = scmp.ne.s32.totalorder %s168, %s169
      %p181 = scmp.eq.s32.totalorder %s33, 1
      %p182 = por %p180, %p181
      %p184 = scmp.ne.s32.totalorder %s169, %s183
      %p185 = scmp.eq.s32.totalorder %s33, 0
      %p186 = por %p184, %p185
      %s188 = sadd.s32 %s187, 1
      %p191 = scmp.eq.s32.totalorder %s27, 1
      %p192 = scmp.ne.s32.totalorder %s187, %s189
      %p193 = scmp.eq.s32.totalorder %s27, 0
      %p194 = por %p192, %p193
      %p195 = scmp.ne.s32.totalorder %s187, %s189
      %p196 = scmp.eq.s32.totalorder %s32, 1
      %p197 = por %p195, %p196
      %p198 = scmp.ne.s32.totalorder %s189, %s190
      %p199 = scmp.eq.s32.totalorder %s32, 0
      %p200 = por %p198, %p199
      %p201 = scmp.ne.s32.totalorder %s189, %s190
      %p202 = scmp.eq.s32.totalorder %s33, 1
      %p203 = por %p201, %p202
      %p205 = scmp.ne.s32.totalorder %s190, %s204
      %p206 = scmp.eq.s32.totalorder %s33, 0
      %p207 = por %p205, %p206
      %s209 = sadd.s32 %s208, 1
      %p212 = scmp.eq.s32.totalorder %s27, 1
      %p213 = scmp.ne.s32.totalorder %s208, %s210
      %p214 = scmp.eq.s32.totalorder %s27, 0
      %p215 = por %p213, %p214
      %p216 = scmp.ne.s32.totalorder %s208, %s210
      %p217 = scmp.eq.s32.totalorder %s32, 1
      %p218 = por %p216, %p217
      %p219 = scmp.ne.s32.totalorder %s210, %s211
      %p220 = scmp.eq.s32.totalorder %s32, 0
      %p221 = por %p219, %p220
      %p222 = scmp.ne.s32.totalorder %s210, %s211
      %p223 = scmp.eq.s32.totalorder %s33, 1
      %p224 = por %p222, %p223
      %p226 = scmp.ne.s32.totalorder %s211, %s225
      %p227 = scmp.eq.s32.totalorder %s33, 0
      %p228 = por %p226, %p227
      %s230 = sadd.s32 %s229, 1
      %p233 = scmp.eq.s32.totalorder %s27, 1
      %p234 = scmp.ne.s32.totalorder %s229, %s231
      %p235 = scmp.eq.s32.totalorder %s27, 0
      %p236 = por %p234, %p235
      %p237 = scmp.ne.s32.totalorder %s229, %s231
      %p238 = scmp.eq.s32.totalorder %s32, 1
      %p239 = por %p237, %p238
      %p240 = scmp.ne.s32.totalorder %s231, %s232
      %p241 = scmp.eq.s32.totalorder %s32, 0
      %p242 = por %p240, %p241
      %p243 = scmp.ne.s32.totalorder %s231, %s232
      %p244 = scmp.eq.s32.totalorder %s33, 1
      %p245 = por %p243, %p244
      %p247 = scmp.ne.s32.totalorder %s232, %s246
      %p248 = scmp.eq.s32.totalorder %s33, 0
      %p249 = por %p247, %p248
      %s251 = sadd.s32 %s250, 1
      %p254 = scmp.eq.s32.totalorder %s27, 1
      %p255 = scmp.ne.s32.totalorder %s250, %s252
      %p256 = scmp.eq.s32.totalorder %s27, 0
      %p257 = por %p255, %p256
      %p258 = scmp.ne.s32.totalorder %s250, %s252
      %p259 = scmp.eq.s32.totalorder %s32, 1
      %p260 = por %p258, %p259
      %p261 = scmp.ne.s32.totalorder %s252, %s253
      %p262 = scmp.eq.s32.totalorder %s32, 0
      %p263 = por %p261, %p262
      %p264 = scmp.ne.s32.totalorder %s252, %s253
      %p265 = scmp.eq.s32.totalorder %s33, 1
      %p266 = por %p264, %p265
      %p268 = scmp.ne.s32.totalorder %s253, %s267
      %p269 = scmp.eq.s32.totalorder %s33, 0
      %p270 = por %p268, %p269
      %s272 = sadd.s32 %s271, 1
      %p275 = scmp.eq.s32.totalorder %s27, 1
      %p276 = scmp.ne.s32.totalorder %s271, %s273
      %p277 = scmp.eq.s32.totalorder %s27, 0
      %p278 = por %p276, %p277
      %p279 = scmp.ne.s32.totalorder %s271, %s273
      %p280 = scmp.eq.s32.totalorder %s32, 1
      %p281 = por %p279, %p280
      %p282 = scmp.ne.s32.totalorder %s273, %s274
      %p283 = scmp.eq.s32.totalorder %s32, 0
      %p284 = por %p282, %p283
      %p285 = scmp.ne.s32.totalorder %s273, %s274
      %p286 = scmp.eq.s32.totalorder %s33, 1
      %p287 = por %p285, %p286
      %p289 = scmp.ne.s32.totalorder %s274, %s288
      %p290 = scmp.eq.s32.totalorder %s33, 0
      %p291 = por %p289, %p290
      %s293 = sadd.s32 %s292, 1
      %p296 = scmp.eq.s32.totalorder %s27, 1
      %p297 = scmp.ne.s32.totalorder %s292, %s294
      %p298 = scmp.eq.s32.totalorder %s27, 0
      %p299 = por %p297, %p298
      %p300 = scmp.ne.s32.totalorder %s292, %s294
      %p301 = scmp.eq.s32.totalorder %s32, 1
      %p302 = por %p300, %p301
      %p303 = scmp.ne.s32.totalorder %s294, %s295
      %p304 = scmp.eq.s32.totalorder %s32, 0
      %p305 = por %p303, %p304
      %p306 = scmp.ne.s32.totalorder %s294, %s295
      %p307 = scmp.eq.s32.totalorder %s33, 1
      %p308 = por %p306, %p307
      %p310 = scmp.ne.s32.totalorder %s295, %s309
      %p311 = scmp.eq.s32.totalorder %s33, 0
      %p312 = por %p310, %p311
      %s314 = sadd.s32 %s313, 1
      %p317 = scmp.eq.s32.totalorder %s27, 1
      %p318 = scmp.ne.s32.totalorder %s313, %s315
      %p319 = scmp.eq.s32.totalorder %s27, 0
      %p320 = por %p318, %p319
      %p321 = scmp.ne.s32.totalorder %s313, %s315
      %p322 = scmp.eq.s32.totalorder %s32, 1
      %p323 = por %p321, %p322
      %p324 = scmp.ne.s32.totalorder %s315, %s316
      %p325 = scmp.eq.s32.totalorder %s32, 0
      %p326 = por %p324, %p325
      %p327 = scmp.ne.s32.totalorder %s315, %s316
      %p328 = scmp.eq.s32.totalorder %s33, 1
      %p329 = por %p327, %p328
      %p331 = scmp.ne.s32.totalorder %s316, %s330
      %p332 = scmp.eq.s32.totalorder %s33, 0
      %p333 = por %p331, %p332
      %s335 = sadd.s32 %s334, 1
      %p338 = scmp.eq.s32.totalorder %s27, 1
      %p339 = scmp.ne.s32.totalorder %s334, %s336
      %p340 = scmp.eq.s32.totalorder %s27, 0
      %p341 = por %p339, %p340
      %p342 = scmp.ne.s32.totalorder %s334, %s336
      %p343 = scmp.eq.s32.totalorder %s32, 1
      %p344 = por %p342, %p343
      %p345 = scmp.ne.s32.totalorder %s336, %s337
      %p346 = scmp.eq.s32.totalorder %s32, 0
      %p347 = por %p345, %p346
      %p348 = scmp.ne.s32.totalorder %s336, %s337
      %p349 = scmp.eq.s32.totalorder %s33, 1
      %p350 = por %p348, %p349
      %p352 = scmp.ne.s32.totalorder %s337, %s351
      %p353 = scmp.eq.s32.totalorder %s33, 0
      %p354 = por %p352, %p353
      %s355 = ssub.s32 %s27, %s34
      %p356 = scmp.eq.s32.totalorder %s355, 0
      %s358 = sadd.s32 %s357, 1
      %s359 = scalar_select %p356, %s357, %s358
      %p362 = pneg %p356
      %p363 = scmp.eq.s32.totalorder %s27, 1
      %p364 = por %p362, %p363
      %p365 = scmp.ne.s32.totalorder %s357, %s360
      %p366 = scmp.eq.s32.totalorder %s27, 0
      %p367 = por %p365, %p366
      %p368 = scmp.ne.s32.totalorder %s357, %s360
      %p369 = scmp.eq.s32.totalorder %s32, 1
      %p370 = por %p368, %p369
      %p371 = scmp.ne.s32.totalorder %s360, %s361
      %p372 = scmp.eq.s32.totalorder %s32, 0
      %p373 = por %p371, %p372
      %p374 = scmp.ne.s32.totalorder %s360, %s361
      %p375 = scmp.eq.s32.totalorder %s33, 1
      %p376 = por %p374, %p375
      %p378 = scmp.ne.s32.totalorder %s361, %s377
      %p379 = scmp.eq.s32.totalorder %s33, 0
      %p380 = por %p378, %p379
      %p381 = scmp.le.s32.totalorder 1, %s27
      %p382 = scmp.lt.s32.totalorder %s27, 3
      %p383 = pnand %p381, %p382
      %p384 = pneg %p383
      // Predicated region
      $region9: #{tpu_custom_call.1} parent=5 // pred_check
        _
      $region10: #{tpu_custom_call.1} parent=5 // pred_check_branch
        %386 = sbr.rel (%p383) target = $region12
      $region11: #{tpu_custom_call.1} parent=5 // pred_region
        %s387 = ssub.s32 %s27, 1
        // Predicated region
        $region13: #{tpu_custom_call.1} parent=11 // pred_check
          %p388 = pneg %p74
        $region14: #{tpu_custom_call.1} parent=11 // pred_check_branch
          %390 = sbr.rel (%p388) target = $region16
        $region15: #{tpu_custom_call.1} parent=11 // pred_region
          _
        $region16: #{tpu_custom_call.1} parent=11 // pred_fallthru
          _
        // Predicated region
        $region17: #{tpu_custom_call.1} parent=11 // pred_check
          %p391 = pneg %p95
        $region18: #{tpu_custom_call.1} parent=11 // pred_check_branch
          %393 = sbr.rel (%p391) target = $region20
        $region19: #{tpu_custom_call.1} parent=11 // pred_region
          _
        $region20: #{tpu_custom_call.1} parent=11 // pred_fallthru
          _
        // Predicated region
        $region21: #{tpu_custom_call.1} parent=11 // pred_check
          %p394 = pneg %p116
        $region22: #{tpu_custom_call.1} parent=11 // pred_check_branch
          %396 = sbr.rel (%p394) target = $region24
        $region23: #{tpu_custom_call.1} parent=11 // pred_region
          _
        $region24: #{tpu_custom_call.1} parent=11 // pred_fallthru
          _
        // Predicated region
        $region25: #{tpu_custom_call.1} parent=11 // pred_check
          %p397 = pneg %p137
        $region26: #{tpu_custom_call.1} parent=11 // pred_check_branch
          %399 = sbr.rel (%p397) target = $region28
        $region27: #{tpu_custom_call.1} parent=11 // pred_region
          _
        $region28: #{tpu_custom_call.1} parent=11 // pred_fallthru
          _
        // Predicated region
        $region29: #{tpu_custom_call.1} parent=11 // pred_check
          %p400 = pneg %p158
        $region30: #{tpu_custom_call.1} parent=11 // pred_check_branch
          %402 = sbr.rel (%p400) target = $region32
        $region31: #{tpu_custom_call.1} parent=11 // pred_region
          _
        $region32: #{tpu_custom_call.1} parent=11 // pred_fallthru
          _
        // Predicated region
        $region33: #{tpu_custom_call.1} parent=11 // pred_check
          %p403 = pneg %p179
        $region34: #{tpu_custom_call.1} parent=11 // pred_check_branch
          %405 = sbr.rel (%p403) target = $region36
        $region35: #{tpu_custom_call.1} parent=11 // pred_region
          _
        $region36: #{tpu_custom_call.1} parent=11 // pred_fallthru
          _
        // Predicated region
        $region37: #{tpu_custom_call.1} parent=11 // pred_check
          %p406 = pneg %p200
        $region38: #{tpu_custom_call.1} parent=11 // pred_check_branch
          %408 = sbr.rel (%p406) target = $region40
        $region39: #{tpu_custom_call.1} parent=11 // pred_region
          _
        $region40: #{tpu_custom_call.1} parent=11 // pred_fallthru
          _
        // Predicated region
        $region41: #{tpu_custom_call.1} parent=11 // pred_check
          %p409 = pneg %p221
        $region42: #{tpu_custom_call.1} parent=11 // pred_check_branch
          %411 = sbr.rel (%p409) target = $region44
        $region43: #{tpu_custom_call.1} parent=11 // pred_region
          _
        $region44: #{tpu_custom_call.1} parent=11 // pred_fallthru
          _
        // Predicated region
        $region45: #{tpu_custom_call.1} parent=11 // pred_check
          %p412 = pneg %p242
        $region46: #{tpu_custom_call.1} parent=11 // pred_check_branch
          %414 = sbr.rel (%p412) target = $region48
        $region47: #{tpu_custom_call.1} parent=11 // pred_region
          _
        $region48: #{tpu_custom_call.1} parent=11 // pred_fallthru
          _
        // Predicated region
        $region49: #{tpu_custom_call.1} parent=11 // pred_check
          %p415 = pneg %p263
        $region50: #{tpu_custom_call.1} parent=11 // pred_check_branch
          %417 = sbr.rel (%p415) target = $region52
        $region51: #{tpu_custom_call.1} parent=11 // pred_region
          _
        $region52: #{tpu_custom_call.1} parent=11 // pred_fallthru
          _
        // Predicated region
        $region53: #{tpu_custom_call.1} parent=11 // pred_check
          %p418 = pneg %p284
        $region54: #{tpu_custom_call.1} parent=11 // pred_check_branch
          %420 = sbr.rel (%p418) target = $region56
        $region55: #{tpu_custom_call.1} parent=11 // pred_region
          _
        $region56: #{tpu_custom_call.1} parent=11 // pred_fallthru
          _
        // Predicated region
        $region57: #{tpu_custom_call.1} parent=11 // pred_check
          %p421 = pneg %p305
        $region58: #{tpu_custom_call.1} parent=11 // pred_check_branch
          %423 = sbr.rel (%p421) target = $region60
        $region59: #{tpu_custom_call.1} parent=11 // pred_region
          _
        $region60: #{tpu_custom_call.1} parent=11 // pred_fallthru
          _
        // Predicated region
        $region61: #{tpu_custom_call.1} parent=11 // pred_check
          %p424 = pneg %p326
        $region62: #{tpu_custom_call.1} parent=11 // pred_check_branch
          %426 = sbr.rel (%p424) target = $region64
        $region63: #{tpu_custom_call.1} parent=11 // pred_region
          _
        $region64: #{tpu_custom_call.1} parent=11 // pred_fallthru
          _
        // Predicated region
        $region65: #{tpu_custom_call.1} parent=11 // pred_check
          %p427 = pneg %p347
        $region66: #{tpu_custom_call.1} parent=11 // pred_check_branch
          %429 = sbr.rel (%p427) target = $region68
        $region67: #{tpu_custom_call.1} parent=11 // pred_region
          _
        $region68: #{tpu_custom_call.1} parent=11 // pred_fallthru
          _
      $region12: #{tpu_custom_call.1} parent=5 // pred_fallthru
        _
      %p430 = scmp.lt.s32.totalorder %s27, 2
      // Predicated region
      $region69: #{tpu_custom_call.1} parent=5 // pred_check
        %p431 = pneg %p430
      $region70: #{tpu_custom_call.1} parent=5 // pred_check_branch
        %433 = sbr.rel (%p431) target = $region72
      $region71: #{tpu_custom_call.1} parent=5 // pred_region
        // Predicated region
        $region73: #{tpu_custom_call.1} parent=71 // pred_check
          %p434 = pneg %p47
        $region74: #{tpu_custom_call.1} parent=71 // pred_check_branch
          %436 = sbr.rel (%p434) target = $region76
        $region75: #{tpu_custom_call.1} parent=71 // pred_region
          %s437 = sand.u32 %s37, 1
          %s438 = scalar_lea.sflag [#allocation5], %s437
          %s439 = sand.u32 %s37, 1
          %s440 = smul.addr %s439, 64
          %s441 = scalar_lea.vmem [#allocation4], %s440
          %s442 = smul.u32 2, %s27
          %s444 = ssub.s32 1024, 1024
          %445 = vsyncadd %s438, %s444
          %s446 = smul.addr %s442, 128
          %s447 = scalar_lea.hbm %s0, %s446
          %s448 = sshll.u32 %s441, 4
          %s449 = int_to_ptr.vmem [resolvable:$true] %s448
          %454 = dma.hbm_to_vmem [thread:$0]  %s447, 1024, %s449, %s438, 512, 256, 16
        $region76: #{tpu_custom_call.1} parent=71 // pred_fallthru
          _
      $region72: #{tpu_custom_call.1} parent=5 // pred_fallthru
        _
      %p455 = scmp.le.s32.totalorder 1, %s27
      %p456 = scmp.lt.s32.totalorder %s27, 3
      %p457 = pnand %p455, %p456
      %p458 = pneg %p457
      // Predicated region
      $region77: #{tpu_custom_call.1} parent=5 // pred_check
        _
      $region78: #{tpu_custom_call.1} parent=5 // pred_check_branch
        %460 = sbr.rel (%p457) target = $region80
      $region79: #{tpu_custom_call.1} parent=5 // pred_region
        %s461 = ssub.s32 %s27, 1
        %s462 = sand.u32 %s40, 1
        %s463 = scalar_lea.sflag [#allocation5], %s462
        %s464 = sand.u32 %s40, 1
        %s465 = smul.addr %s464, 64
        %s466 = scalar_lea.vmem [#allocation4], %s465
        // Predicated region
        $region81: #{tpu_custom_call.1} parent=79 // pred_check
          %p467 = pneg %p53
        $region82: #{tpu_custom_call.1} parent=79 // pred_check_branch
          %469 = sbr.rel (%p467) target = $region84
        $region83: #{tpu_custom_call.1} parent=79 // pred_region
          %470 = dma.done %s463, 1024
        $region84: #{tpu_custom_call.1} parent=79 // pred_fallthru
          _
        %s471 = sand.u32 %s40, 1
        %s472 = scalar_lea.sflag [#allocation5], %s471
        %s473 = sand.u32 %s40, 1
        %s474 = smul.addr %s473, 64
        %s475 = scalar_lea.vmem [#allocation4], %s474
        %p476 = pneg %p53
        %p477 = pneg %p50
        %p478 = pneg %p74
        %p479 = pneg %p71
        %p480 = pneg %p95
        %p481 = pneg %p92
        %p482 = pneg %p116
        %p483 = pneg %p113
        %p484 = pneg %p137
        %p485 = pneg %p134
        %p486 = pneg %p158
        %p487 = pneg %p155
        %p488 = pneg %p179
        %p489 = pneg %p176
        %p490 = pneg %p200
        %p491 = pneg %p197
        %p492 = pneg %p221
        %p493 = pneg %p218
        %p494 = pneg %p242
        %p495 = pneg %p239
        %p496 = pneg %p263
        %p497 = pneg %p260
        %p498 = pneg %p284
        %p499 = pneg %p281
        %p500 = pneg %p305
        %p501 = pneg %p302
        %p502 = pneg %p326
        %p503 = pneg %p323
        %p504 = pneg %p347
        %p505 = pneg %p344
        %p506 = pneg %p373
        %p507 = pneg %p370
        %s508 = sand.u32 %s360, 1
        %s509 = scalar_lea.sflag [#allocation6], %s508
        %s510 = sand.u32 %s360, 1
        %s511 = smul.addr %s510, 64
        %s512 = scalar_lea.vmem [#allocation7], %s511
        %s513 = smul.u32 2, %s32
        %s514 = smul.u32 2, %s32
        %v516 = vld [vmem:[%s466] sm:$0xff]
        %v517 = vld [vmem:[%s466 + $0x8] sm:$0xff]
        %v518 = vld [vmem:[%s466 + $0x10] sm:$0xff]
        %v519 = vld [vmem:[%s466 + $0x18] sm:$0xff]
        %v520 = vld [vmem:[%s466 + $0x20] sm:$0xff]
        %v521 = vld [vmem:[%s466 + $0x28] sm:$0xff]
        %v522 = vld [vmem:[%s466 + $0x30] sm:$0xff]
        %v523 = vld [vmem:[%s466 + $0x38] sm:$0xff]
        %v524 = vld [vmem:[%s1] sm:$0xff]
        %v525 = vld [vmem:[%s1 + $0x8] sm:$0xff]
        %v526 = vld [vmem:[%s1 + $0x10] sm:$0xff]
        %v527 = vld [vmem:[%s1 + $0x18] sm:$0xff]
        %529 = vset.pattern.permute.xlu0 0
        %530 = vperm.xlu0 %529, %v524
        %v531 = vpop.permute.xlu0 %530
        %534 = vset.pattern.permute.xlu0 0
        %535 = vperm.xlu0 %534, %v525
        %v536 = vpop.permute.xlu0 %535
        %539 = vset.pattern.permute.xlu0 0
        %540 = vperm.xlu0 %539, %v526
        %v541 = vpop.permute.xlu0 %540
        %544 = vset.pattern.permute.xlu0 0
        %545 = vperm.xlu0 %544, %v527
        %v546 = vpop.permute.xlu0 %545
        %v548 = vmul.f32 %v516, %v531
        %v549 = vmul.f32 %v517, %v531
        %v550 = vmul.f32 %v518, %v536
        %v551 = vmul.f32 %v519, %v536
        %v552 = vmul.f32 %v520, %v541
        %v553 = vmul.f32 %v521, %v541
        %v554 = vmul.f32 %v522, %v546
        %v555 = vmul.f32 %v523, %v546
        %v556 = vld [vmem:[%s2] sm:$0xff]
        %v557 = vld [vmem:[%s2 + $0x8] sm:$0xff]
        %v558 = vld [vmem:[%s2 + $0x10] sm:$0xff]
        %v559 = vld [vmem:[%s2 + $0x18] sm:$0xff]
        %561 = vset.pattern.permute.xlu0 0
        %562 = vperm.xlu0 %561, %v556
        %v563 = vpop.permute.xlu0 %562
        %566 = vset.pattern.permute.xlu0 0
        %567 = vperm.xlu0 %566, %v557
        %v568 = vpop.permute.xlu0 %567
        %571 = vset.pattern.permute.xlu0 0
        %572 = vperm.xlu0 %571, %v558
        %v573 = vpop.permute.xlu0 %572
        %576 = vset.pattern.permute.xlu0 0
        %577 = vperm.xlu0 %576, %v559
        %v578 = vpop.permute.xlu0 %577
        %v580 = vadd.f32 %v548, %v563
        %v581 = vadd.f32 %v549, %v563
        %v582 = vadd.f32 %v550, %v568
        %v583 = vadd.f32 %v551, %v568
        %v584 = vadd.f32 %v552, %v573
        %v585 = vadd.f32 %v553, %v573
        %v586 = vadd.f32 %v554, %v578
        %v587 = vadd.f32 %v555, %v578
        %v588 = vmax.f32 %v580, 0.0
        %v589 = vmax.f32 %v581, 0.0
        %v590 = vmax.f32 %v582, 0.0
        %v591 = vmax.f32 %v583, 0.0
        %v592 = vmax.f32 %v584, 0.0
        %v593 = vmax.f32 %v585, 0.0
        %v594 = vmax.f32 %v586, 0.0
        %v595 = vmax.f32 %v587, 0.0
        %v596 = vld [vmem:[%s3] sm:$0xf]
        %v597 = vld [vmem:[%s3 + $0x4] sm:$0xf]
        %v598 = vld [vmem:[%s3 + $0x8] sm:$0xf]
        %v599 = vpack.c.bf16 %v590, %v588
        %v600 = vpack.c.bf16 %v591, %v589
        %v601 = vpack.c.bf16 %v594, %v592
        %v602 = vpack.c.bf16 %v595, %v593
        %v603 = vld [vmem:[%s4] sm:$0xff]
        %v604 = vld [vmem:[%s4 + $0x8] sm:$0xff]
        %v605 = vld [vmem:[%s4 + $0x10] sm:$0xff]
        %607 = vset.pattern.permute.xlu0 0
        %608 = vperm.xlu0 %607, %v603
        %v609 = vpop.permute.xlu0 %608
        %612 = vset.pattern.permute.xlu0 0
        %613 = vperm.xlu0 %612, %v604
        %v614 = vpop.permute.xlu0 %613
        %617 = vset.pattern.permute.xlu0 0
        %618 = vperm.xlu0 %617, %v605
        %v619 = vpop.permute.xlu0 %618
        %v624 = vunpack.c.l.b16 %v596
        %v625 = vunpack.c.l.b16 %v597
        %v626 = vunpack.c.l.b16 %v598
        %v627 = vpack.c.b16 %v625, %v624
        %v628 = vpack.c.b16 %v626, %v626
        %vm629 = vcmask 261120
        %v631 = vsel %vm629, %v627, 0
        %v634 = vsel %vm629, %v628, 0
        %636 = vmatprep.subr.bf16.mxu0 %v600
        %637 = vmatpush1.bf16.msra.mxu0 %v599
        %638 = vmatprep.subr.bf16.mxu0 %v602
        %639 = vmatpush1.bf16.msra.mxu0 %v601
        %640 = vmatprep.subr.bf16.mxu0 0
        %641 = vmatpush1.bf16.msra.mxu0 0
        %642 = vmatprep.subr.bf16.mxu0 0
        %643 = vmatpush1.bf16.msra.mxu0 0
        %644 = vmatprep.subr.bf16.mxu0 0
        %645 = vmatpush1.bf16.msra.mxu0 0
        %646 = vmatprep.subr.bf16.mxu0 0
        %647 = vmatpush1.bf16.msra.mxu0 0
        %648 = vmatprep.subr.bf16.mxu0 0
        %649 = vmatpush1.bf16.msra.mxu0 0
        %650 = vmatprep.subr.bf16.mxu0 0
        %651 = vmatpush1.bf16.msra.mxu0 0
        %652 = vmatprep.subr.bf16.mxu0 0
        %653 = vmatpush1.bf16.msra.mxu0 0
        %654 = vmatprep.subr.bf16.mxu0 0
        %655 = vmatpush1.bf16.msra.mxu0 0
        %656 = vmatprep.subr.bf16.mxu0 0
        %657 = vmatpush1.bf16.msra.mxu0 0
        %658 = vmatprep.subr.bf16.mxu0 0
        %659 = vmatpush1.bf16.msra.mxu0 0
        %660 = vmatprep.subr.bf16.mxu0 0
        %661 = vmatpush1.bf16.msra.mxu0 0
        %662 = vmatprep.subr.bf16.mxu0 0
        %663 = vmatpush1.bf16.msra.mxu0 0
        %664 = vmatprep.subr.bf16.mxu0 0
        %665 = vmatpush1.bf16.msra.mxu0 0
        %666 = vmatprep.subr.bf16.mxu0 0
        %667 = vmatpush1.bf16.msra.mxu0 0
        %668 = vmatprep.mubr.bf16.mxu0 0
        %669 = vmatmul.mubr.bf16.gmra.mrb[0].mxu0 %v631
        %v670 = vpop.f32.mrb[0].mxu0
        %v671 = vadd.f32 %v609, %v670
        %v672 = vpop.f32.mrb[0].mxu0
        %v673 = vadd.f32 %v609, %v672
        %v674 = vpop.f32.mrb[0].mxu0
        %v675 = vadd.f32 %v614, %v674
        %v676 = vpop.f32.mrb[0].mxu0
        %v677 = vadd.f32 %v614, %v676
        %678 = vmatprep.mubr.bf16.mxu0 0
        %679 = vmatmul.mubr.bf16.gmra.mrb[0].mxu0 %v634
        %v680 = vpop.f32.mrb[0].mxu0
        %v681 = vadd.f32 %v619, %v680
        %v682 = vpop.f32.mrb[0].mxu0
        %v683 = vadd.f32 %v619, %v682
        %v684 = vpop.f32.mrb[0].mxu0
        %v685 = vpop.f32.mrb[0].mxu0
        %686 = vdwg.mxu0
        %v687 = vmax.f32 %v671, 0.0
        %v688 = vmax.f32 %v673, 0.0
        %v689 = vmax.f32 %v675, 0.0
        %v690 = vmax.f32 %v677, 0.0
        %v691 = vmax.f32 %v681, 0.0
        %v692 = vmax.f32 %v683, 0.0
        %vm693 = vcmask 72704
        %694 = vst.msk [vmem:[#allocation2] sm:$0xff] %vm693, 0.0
        %vm695 = vcmask 146504
        %696 = vst.msk [vmem:[#allocation2 + $0x10] sm:$0xff] %vm695, 0.0
        %699 = vrot.lane.b32.xlu0 %v687, 9
        %v700 = vpop.permute.xlu0 %699
        %701 = vrot.lane.b32.xlu0 %v688, 9
        %v702 = vpop.permute.xlu0 %701
        %v703 = vsel %vm693, %v700, %v702
        %vm707 = vcmask 1047624
        %708 = vst.msk [vmem:[#allocation2] sm:$0xff] %vm707, %v700
        %709 = vst [vmem:[#allocation2 + $0x8] sm:$0xff] %v703
        %710 = vst.msk [vmem:[#allocation2 + $0x10] sm:$0xff] %vm693, %v702
        %v711 = vld [vmem:[#allocation2] sm:$0xff]
        %v712 = vld [vmem:[#allocation2 + $0x8] sm:$0xff]
        %v713 = vld [vmem:[%s7] ss:$8 sm:$0x3]
        %v715 = vlaneseq
        %v716 = vshrl.u32 %v715, 7
        %v717 = vsub.s32 0, %v716
        %v718 = vrot.slane %v713, %v717
        %v719 = vlaneseq
        %v720 = vshrl.u32 %v719, 7
        %v721 = vsub.s32 1, %v720
        %v722 = vrot.slane %v713, %v721
        %v725 = vmul.f32 %v711, %v718
        %v726 = vmul.f32 %v712, %v722
        %v727 = vld [vmem:[#allocation2 + $0x10] sm:$0xff]
        %s728 = scalar_lea.vmem %s7, 1
        %v729 = vld [vmem:[%s728] ss:$8 sm:$0x3]
        %v731 = vlaneseq
        %v732 = vshrl.u32 %v731, 7
        %v733 = vsub.s32 0, %v732
        %v734 = vrot.slane %v729, %v733
        %v735 = vlaneseq
        %v736 = vshrl.u32 %v735, 7
        %v737 = vsub.s32 1, %v736
        %v738 = vrot.slane %v729, %v737
        %739 = vrot.lane.b32.xlu0 %v734, 1
        %v740 = vpop.permute.xlu0 %739
        %741 = vrot.lane.b32.xlu0 %v738, 1
        %v742 = vpop.permute.xlu0 %741
        %vm743 = vcmask 7168
        %v744 = vsel %vm743, %v740, %v742
        %v748 = vmul.f32 %v711, %v740
        %v749 = vmul.f32 %v712, %v744
        %v750 = vmul.f32 %v727, %v742
        %s751 = scalar_lea.vmem %s7, 2
        %v752 = vld [vmem:[%s751] ss:$8 sm:$0x3]
        %v754 = vlaneseq
        %v755 = vshrl.u32 %v754, 7
        %v756 = vsub.s32 0, %v755
        %v757 = vrot.slane %v752, %v756
        %v758 = vlaneseq
        %v759 = vshrl.u32 %v758, 7
        %v760 = vsub.s32 1, %v759
        %v761 = vrot.slane %v752, %v760
        %762 = vrot.lane.b32.xlu0 %v757, 2
        %v763 = vpop.permute.xlu0 %762
        %764 = vrot.lane.b32.xlu0 %v761, 2
        %v765 = vpop.permute.xlu0 %764
        %vm766 = vcmask 15360
        %v767 = vsel %vm766, %v763, %v765
        %v771 = vmul.f32 %v711, %v763
        %v772 = vmul.f32 %v712, %v767
        %v773 = vmul.f32 %v727, %v765
        %s774 = scalar_lea.vmem %s7, 3
        %v775 = vld [vmem:[%s774] ss:$8 sm:$0x3]
        %v777 = vlaneseq
        %v778 = vshrl.u32 %v777, 7
        %v779 = vsub.s32 0, %v778
        %v780 = vrot.slane %v775, %v779
        %v781 = vlaneseq
        %v782 = vshrl.u32 %v781, 7
        %v783 = vsub.s32 1, %v782
        %v784 = vrot.slane %v775, %v783
        %785 = vrot.lane.b32.xlu0 %v780, 8
        %v786 = vpop.permute.xlu0 %785
        %787 = vrot.lane.b32.xlu0 %v784, 8
        %v788 = vpop.permute.xlu0 %787
        %vm789 = vcmask 64512
        %v790 = vsel %vm789, %v786, %v788
        %v794 = vmul.f32 %v711, %v786
        %v795 = vmul.f32 %v712, %v790
        %v796 = vmul.f32 %v727, %v788
        %s797 = scalar_lea.vmem %s7, 5
        %v798 = vld [vmem:[%s797] ss:$8 sm:$0x3]
        %v800 = vlaneseq
        %v801 = vshrl.u32 %v800, 7
        %v802 = vsub.s32 0, %v801
        %v803 = vrot.slane %v798, %v802
        %v804 = vlaneseq
        %v805 = vshrl.u32 %v804, 7
        %v806 = vsub.s32 1, %v805
        %v807 = vrot.slane %v798, %v806
        %808 = vrot.lane.b32.xlu0 %v803, 10
        %v809 = vpop.permute.xlu0 %808
        %810 = vrot.lane.b32.xlu0 %v807, 10
        %v811 = vpop.permute.xlu0 %810
        %vm812 = vcmask 80896
        %v813 = vsel %vm812, %v809, %v811
        %v817 = vmul.f32 %v711, %v809
        %v818 = vmul.f32 %v712, %v813
        %v819 = vmul.f32 %v727, %v811
        %s820 = scalar_lea.vmem %s7, 6
        %v821 = vld [vmem:[%s820] ss:$8 sm:$0x3]
        %v823 = vlaneseq
        %v824 = vshrl.u32 %v823, 7
        %v825 = vsub.s32 0, %v824
        %v826 = vrot.slane %v821, %v825
        %v827 = vlaneseq
        %v828 = vshrl.u32 %v827, 7
        %v829 = vsub.s32 1, %v828
        %v830 = vrot.slane %v821, %v829
        %831 = vrot.lane.b32.xlu0 %v826, 16
        %v832 = vpop.permute.xlu0 %831
        %833 = vrot.lane.b32.xlu0 %v830, 16
        %v834 = vpop.permute.xlu0 %833
        %vm835 = vcmask 130048
        %v836 = vsel %vm835, %v832, %v834
        %v840 = vmul.f32 %v711, %v832
        %v841 = vmul.f32 %v712, %v836
        %v842 = vmul.f32 %v727, %v834
        %s843 = scalar_lea.vmem %s7, 7
        %v844 = vld [vmem:[%s843] ss:$8 sm:$0x3]
        %v846 = vlaneseq
        %v847 = vshrl.u32 %v846, 7
        %v848 = vsub.s32 0, %v847
        %v849 = vrot.slane %v844, %v848
        %v850 = vlaneseq
        %v851 = vshrl.u32 %v850, 7
        %v852 = vsub.s32 1, %v851
        %v853 = vrot.slane %v844, %v852
        %854 = vrot.lane.b32.xlu0 %v849, 17
        %v855 = vpop.permute.xlu0 %854
        %856 = vrot.lane.b32.xlu0 %v853, 17
        %v857 = vpop.permute.xlu0 %856
        %vm858 = vcmask 138240
        %v859 = vsel %vm858, %v855, %v857
        %v863 = vmul.f32 %v711, %v855
        %v864 = vmul.f32 %v712, %v859
        %v865 = vmul.f32 %v727, %v857
        %s866 = scalar_lea.vmem %s7, 16
        %v867 = vld [vmem:[%s866] ss:$8 sm:$0x3]
        %v869 = vlaneseq
        %v870 = vshrl.u32 %v869, 7
        %v871 = vsub.s32 0, %v870
        %v872 = vrot.slane %v867, %v871
        %v873 = vlaneseq
        %v874 = vshrl.u32 %v873, 7
        %v875 = vsub.s32 1, %v874
        %v876 = vrot.slane %v867, %v875
        %877 = vrot.lane.b32.xlu0 %v872, 18
        %v878 = vpop.permute.xlu0 %877
        %879 = vrot.lane.b32.xlu0 %v876, 18
        %v880 = vpop.permute.xlu0 %879
        %vm881 = vcmask 146432
        %v882 = vsel %vm881, %v878, %v880
        %v886 = vmul.f32 %v711, %v878
        %v887 = vmul.f32 %v712, %v882
        %v888 = vmul.f32 %v727, %v880
        %892 = vrot.lane.b32.xlu0 %v748, 127
        %v893 = vpop.permute.xlu0 %892
        %894 = vrot.lane.b32.xlu0 %v749, 127
        %v895 = vpop.permute.xlu0 %894
        %896 = vrot.lane.b32.xlu0 %v750, 127
        %v897 = vpop.permute.xlu0 %896
        %vm898 = vcmask 1039360
        %v899 = vsel %vm898, %v893, %v895
        %v900 = vsel %vm898, %v895, %v897
        %906 = vrot.lane.b32.xlu0 %v771, 126
        %v907 = vpop.permute.xlu0 %906
        %908 = vrot.lane.b32.xlu0 %v772, 126
        %v909 = vpop.permute.xlu0 %908
        %910 = vrot.lane.b32.xlu0 %v773, 126
        %v911 = vpop.permute.xlu0 %910
        %vm912 = vcmask 1031168
        %v913 = vsel %vm912, %v907, %v909
        %v914 = vsel %vm912, %v909, %v911
        %920 = vrot.lane.b32.xlu0 %v794, 120
        %v921 = vpop.permute.xlu0 %920
        %922 = vrot.lane.b32.xlu0 %v795, 120
        %v923 = vpop.permute.xlu0 %922
        %924 = vrot.lane.b32.xlu0 %v796, 120
        %v925 = vpop.permute.xlu0 %924
        %vm926 = vcmask 982016
        %v927 = vsel %vm926, %v921, %v923
        %v928 = vsel %vm926, %v923, %v925
        %934 = vrot.lane.b32.xlu0 %v711, 119
        %v935 = vpop.permute.xlu0 %934
        %936 = vrot.lane.b32.xlu0 %v712, 119
        %v937 = vpop.permute.xlu0 %936
        %938 = vrot.lane.b32.xlu0 %v727, 119
        %v939 = vpop.permute.xlu0 %938
        %vm940 = vcmask 973824
        %v941 = vsel %vm940, %v935, %v937
        %v942 = vsel %vm940, %v937, %v939
        %948 = vrot.lane.b32.xlu0 %v817, 118
        %v949 = vpop.permute.xlu0 %948
        %950 = vrot.lane.b32.xlu0 %v818, 118
        %v951 = vpop.permute.xlu0 %950
        %952 = vrot.lane.b32.xlu0 %v819, 118
        %v953 = vpop.permute.xlu0 %952
        %vm954 = vcmask 965632
        %v955 = vsel %vm954, %v949, %v951
        %v956 = vsel %vm954, %v951, %v953
        %962 = vrot.lane.b32.xlu0 %v840, 112
        %v963 = vpop.permute.xlu0 %962
        %964 = vrot.lane.b32.xlu0 %v841, 112
        %v965 = vpop.permute.xlu0 %964
        %966 = vrot.lane.b32.xlu0 %v842, 112
        %v967 = vpop.permute.xlu0 %966
        %vm968 = vcmask 916480
        %v969 = vsel %vm968, %v963, %v965
        %v970 = vsel %vm968, %v965, %v967
        %976 = vrot.lane.b32.xlu0 %v863, 111
        %v977 = vpop.permute.xlu0 %976
        %978 = vrot.lane.b32.xlu0 %v864, 111
        %v979 = vpop.permute.xlu0 %978
        %980 = vrot.lane.b32.xlu0 %v865, 111
        %v981 = vpop.permute.xlu0 %980
        %vm982 = vcmask 908288
        %v983 = vsel %vm982, %v977, %v979
        %v984 = vsel %vm982, %v979, %v981
        %990 = vrot.lane.b32.xlu0 %v886, 110
        %v991 = vpop.permute.xlu0 %990
        %992 = vrot.lane.b32.xlu0 %v887, 110
        %v993 = vpop.permute.xlu0 %992
        %994 = vrot.lane.b32.xlu0 %v888, 110
        %v995 = vpop.permute.xlu0 %994
        %vm996 = vcmask 900096
        %v997 = vsel %vm996, %v991, %v993
        %v998 = vsel %vm996, %v993, %v995
        %v1001 = vpack.c.bf16 %v899, %v725
        %v1002 = vpack.c.bf16 %v900, %v726
        %v1003 = vpack.c.bf16 %v927, %v913
        %v1004 = vpack.c.bf16 %v928, %v914
        %v1005 = vpack.c.bf16 %v955, %v941
        %v1006 = vpack.c.bf16 %v956, %v942
        %v1007 = vpack.c.bf16 %v983, %v969
        %v1008 = vpack.c.bf16 %v984, %v970
        %v1009 = vpack.c.bf16 %v997, %v997
        %v1010 = vpack.c.bf16 %v998, %v998
        %v1011 = vld [vmem:[%s5] sm:$0xf]
        %v1012 = vld [vmem:[%s6] sm:$0xff]
        %1014 = vset.pattern.permute.xlu0 0
        %1015 = vperm.xlu0 %1014, %v1012
        %v1016 = vpop.permute.xlu0 %1015
        %vm1018 = vcmask 588800
        %v1020 = vsel %vm1018, %v1011, 0
        %vm1022 = vcmask 1043456
        %v1024 = vsel %vm1022, %v1009, 0
        %v1027 = vsel %vm1022, %v1010, 0
        %1029 = vmatprep.subr.bf16.mxu0 %v1002
        %1030 = vmatpush1.bf16.msra.mxu0 %v1001
        %1031 = vmatprep.subr.bf16.mxu0 %v1004
        %1032 = vmatpush1.bf16.msra.mxu0 %v1003
        %1033 = vmatprep.subr.bf16.mxu0 %v1006
        %1034 = vmatpush1.bf16.msra.mxu0 %v1005
        %1035 = vmatprep.subr.bf16.mxu0 %v1008
        %1036 = vmatpush1.bf16.msra.mxu0 %v1007
        %1037 = vmatprep.subr.bf16.mxu0 %v1027
        %1038 = vmatpush1.bf16.msra.mxu0 %v1024
        %1039 = vmatprep.subr.bf16.mxu0 0
        %1040 = vmatpush1.bf16.msra.mxu0 0
        %1041 = vmatprep.subr.bf16.mxu0 0
        %1042 = vmatpush1.bf16.msra.mxu0 0
        %1043 = vmatprep.subr.bf16.mxu0 0
        %1044 = vmatpush1.bf16.msra.mxu0 0
        %1045 = vmatprep.subr.bf16.mxu0 0
        %1046 = vmatpush1.bf16.msra.mxu0 0
        %1047 = vmatprep.subr.bf16.mxu0 0
        %1048 = vmatpush1.bf16.msra.mxu0 0
        %1049 = vmatprep.subr.bf16.mxu0 0
        %1050 = vmatpush1.bf16.msra.mxu0 0
        %1051 = vmatprep.subr.bf16.mxu0 0
        %1052 = vmatpush1.bf16.msra.mxu0 0
        %1053 = vmatprep.subr.bf16.mxu0 0
        %1054 = vmatpush1.bf16.msra.mxu0 0
        %1055 = vmatprep.subr.bf16.mxu0 0
        %1056 = vmatpush1.bf16.msra.mxu0 0
        %1057 = vmatprep.subr.bf16.mxu0 0
        %1058 = vmatpush1.bf16.msra.mxu0 0
        %1059 = vmatprep.subr.bf16.mxu0 0
        %1060 = vmatpush1.bf16.msra.mxu0 0
        %1061 = vmatprep.mubr.bf16.mxu0 0
        %1062 = vmatmul.mubr.bf16.gmra.mrb[0].mxu0 %v1020
        %v1063 = vpop.f32.mrb[0].mxu0
        %v1064 = vadd.f32 %v1016, %v1063
        %v1065 = vpop.f32.mrb[0].mxu0
        %v1066 = vadd.f32 %v1016, %v1065
        %v1067 = vpop.f32.mrb[0].mxu0
        %v1068 = vpop.f32.mrb[0].mxu0
        %1069 = vdwg.mxu0
        %1070 = vst [vmem:[#allocation3] sm:$0xff] %v1064
        %1071 = vst [vmem:[#allocation3 + $0x8] sm:$0xff] %v1066
        %v1072 = vadd.f32 %v1064, %v689
        %v1073 = vadd.f32 %v1066, %v690
        %1076 = vrot.lane.b32.xlu0 %v1072, 9
        %v1077 = vpop.permute.xlu0 %1076
        %1078 = vrot.lane.b32.xlu0 %v1073, 9
        %v1079 = vpop.permute.xlu0 %1078
        %v1080 = vsel %vm693, %v1077, %v1079
        %1084 = vst.msk [vmem:[#allocation2] sm:$0xff] %vm707, %v1077
        %1085 = vst [vmem:[#allocation2 + $0x8] sm:$0xff] %v1080
        %1086 = vst.msk [vmem:[#allocation2 + $0x10] sm:$0xff] %vm693, %v1079
        %v1087 = vld [vmem:[#allocation2] sm:$0xff]
        %v1088 = vld [vmem:[#allocation2 + $0x8] sm:$0xff]
        %v1089 = vld [vmem:[%s7] ss:$8 sm:$0x3]
        %v1091 = vlaneseq
        %v1092 = vshrl.u32 %v1091, 7
        %v1093 = vsub.s32 0, %v1092
        %v1094 = vrot.slane %v1089, %v1093
        %v1095 = vlaneseq
        %v1096 = vshrl.u32 %v1095, 7
        %v1097 = vsub.s32 1, %v1096
        %v1098 = vrot.slane %v1089, %v1097
        %v1101 = vmul.f32 %v1087, %v1094
        %v1102 = vmul.f32 %v1088, %v1098
        %v1103 = vld [vmem:[#allocation2 + $0x10] sm:$0xff]
        %v1104 = vld [vmem:[%s728] ss:$8 sm:$0x3]
        %v1106 = vlaneseq
        %v1107 = vshrl.u32 %v1106, 7
        %v1108 = vsub.s32 0, %v1107
        %v1109 = vrot.slane %v1104, %v1108
        %v1110 = vlaneseq
        %v1111 = vshrl.u32 %v1110, 7
        %v1112 = vsub.s32 1, %v1111
        %v1113 = vrot.slane %v1104, %v1112
        %1114 = vrot.lane.b32.xlu0 %v1109, 1
        %v1115 = vpop.permute.xlu0 %1114
        %1116 = vrot.lane.b32.xlu0 %v1113, 1
        %v1117 = vpop.permute.xlu0 %1116
        %v1118 = vsel %vm743, %v1115, %v1117
        %v1122 = vmul.f32 %v1087, %v1115
        %v1123 = vmul.f32 %v1088, %v1118
        %v1124 = vmul.f32 %v1103, %v1117
        %v1125 = vld [vmem:[%s751] ss:$8 sm:$0x3]
        %v1127 = vlaneseq
        %v1128 = vshrl.u32 %v1127, 7
        %v1129 = vsub.s32 0, %v1128
        %v1130 = vrot.slane %v1125, %v1129
        %v1131 = vlaneseq
        %v1132 = vshrl.u32 %v1131, 7
        %v1133 = vsub.s32 1, %v1132
        %v1134 = vrot.slane %v1125, %v1133
        %1135 = vrot.lane.b32.xlu0 %v1130, 2
        %v1136 = vpop.permute.xlu0 %1135
        %1137 = vrot.lane.b32.xlu0 %v1134, 2
        %v1138 = vpop.permute.xlu0 %1137
        %v1139 = vsel %vm766, %v1136, %v1138
        %v1143 = vmul.f32 %v1087, %v1136
        %v1144 = vmul.f32 %v1088, %v1139
        %v1145 = vmul.f32 %v1103, %v1138
        %v1146 = vld [vmem:[%s774] ss:$8 sm:$0x3]
        %v1148 = vlaneseq
        %v1149 = vshrl.u32 %v1148, 7
        %v1150 = vsub.s32 0, %v1149
        %v1151 = vrot.slane %v1146, %v1150
        %v1152 = vlaneseq
        %v1153 = vshrl.u32 %v1152, 7
        %v1154 = vsub.s32 1, %v1153
        %v1155 = vrot.slane %v1146, %v1154
        %1156 = vrot.lane.b32.xlu0 %v1151, 8
        %v1157 = vpop.permute.xlu0 %1156
        %1158 = vrot.lane.b32.xlu0 %v1155, 8
        %v1159 = vpop.permute.xlu0 %1158
        %v1160 = vsel %vm789, %v1157, %v1159
        %v1164 = vmul.f32 %v1087, %v1157
        %v1165 = vmul.f32 %v1088, %v1160
        %v1166 = vmul.f32 %v1103, %v1159
        %v1167 = vld [vmem:[%s797] ss:$8 sm:$0x3]
        %v1169 = vlaneseq
        %v1170 = vshrl.u32 %v1169, 7
        %v1171 = vsub.s32 0, %v1170
        %v1172 = vrot.slane %v1167, %v1171
        %v1173 = vlaneseq
        %v1174 = vshrl.u32 %v1173, 7
        %v1175 = vsub.s32 1, %v1174
        %v1176 = vrot.slane %v1167, %v1175
        %1177 = vrot.lane.b32.xlu0 %v1172, 10
        %v1178 = vpop.permute.xlu0 %1177
        %1179 = vrot.lane.b32.xlu0 %v1176, 10
        %v1180 = vpop.permute.xlu0 %1179
        %v1181 = vsel %vm812, %v1178, %v1180
        %v1185 = vmul.f32 %v1087, %v1178
        %v1186 = vmul.f32 %v1088, %v1181
        %v1187 = vmul.f32 %v1103, %v1180
        %v1188 = vld [vmem:[%s820] ss:$8 sm:$0x3]
        %v1190 = vlaneseq
        %v1191 = vshrl.u32 %v1190, 7
        %v1192 = vsub.s32 0, %v1191
        %v1193 = vrot.slane %v1188, %v1192
        %v1194 = vlaneseq
        %v1195 = vshrl.u32 %v1194, 7
        %v1196 = vsub.s32 1, %v1195
        %v1197 = vrot.slane %v1188, %v1196
        %1198 = vrot.lane.b32.xlu0 %v1193, 16
        %v1199 = vpop.permute.xlu0 %1198
        %1200 = vrot.lane.b32.xlu0 %v1197, 16
        %v1201 = vpop.permute.xlu0 %1200
        %v1202 = vsel %vm835, %v1199, %v1201
        %v1206 = vmul.f32 %v1087, %v1199
        %v1207 = vmul.f32 %v1088, %v1202
        %v1208 = vmul.f32 %v1103, %v1201
        %v1209 = vld [vmem:[%s843] ss:$8 sm:$0x3]
        %v1211 = vlaneseq
        %v1212 = vshrl.u32 %v1211, 7
        %v1213 = vsub.s32 0, %v1212
        %v1214 = vrot.slane %v1209, %v1213
        %v1215 = vlaneseq
        %v1216 = vshrl.u32 %v1215, 7
        %v1217 = vsub.s32 1, %v1216
        %v1218 = vrot.slane %v1209, %v1217
        %1219 = vrot.lane.b32.xlu0 %v1214, 17
        %v1220 = vpop.permute.xlu0 %1219
        %1221 = vrot.lane.b32.xlu0 %v1218, 17
        %v1222 = vpop.permute.xlu0 %1221
        %v1223 = vsel %vm858, %v1220, %v1222
        %v1227 = vmul.f32 %v1087, %v1220
        %v1228 = vmul.f32 %v1088, %v1223
        %v1229 = vmul.f32 %v1103, %v1222
        %v1230 = vld [vmem:[%s866] ss:$8 sm:$0x3]
        %v1232 = vlaneseq
        %v1233 = vshrl.u32 %v1232, 7
        %v1234 = vsub.s32 0, %v1233
        %v1235 = vrot.slane %v1230, %v1234
        %v1236 = vlaneseq
        %v1237 = vshrl.u32 %v1236, 7
        %v1238 = vsub.s32 1, %v1237
        %v1239 = vrot.slane %v1230, %v1238
        %1240 = vrot.lane.b32.xlu0 %v1235, 18
        %v1241 = vpop.permute.xlu0 %1240
        %1242 = vrot.lane.b32.xlu0 %v1239, 18
        %v1243 = vpop.permute.xlu0 %1242
        %v1244 = vsel %vm881, %v1241, %v1243
        %v1248 = vmul.f32 %v1087, %v1241
        %v1249 = vmul.f32 %v1088, %v1244
        %v1250 = vmul.f32 %v1103, %v1243
        %1254 = vrot.lane.b32.xlu0 %v1122, 127
        %v1255 = vpop.permute.xlu0 %1254
        %1256 = vrot.lane.b32.xlu0 %v1123, 127
        %v1257 = vpop.permute.xlu0 %1256
        %1258 = vrot.lane.b32.xlu0 %v1124, 127
        %v1259 = vpop.permute.xlu0 %1258
        %v1260 = vsel %vm898, %v1255, %v1257
        %v1261 = vsel %vm898, %v1257, %v1259
        %1267 = vrot.lane.b32.xlu0 %v1143, 126
        %v1268 = vpop.permute.xlu0 %1267
        %1269 = vrot.lane.b32.xlu0 %v1144, 126
        %v1270 = vpop.permute.xlu0 %1269
        %1271 = vrot.lane.b32.xlu0 %v1145, 126
        %v1272 = vpop.permute.xlu0 %1271
        %v1273 = vsel %vm912, %v1268, %v1270
        %v1274 = vsel %vm912, %v1270, %v1272
        %1280 = vrot.lane.b32.xlu0 %v1164, 120
        %v1281 = vpop.permute.xlu0 %1280
        %1282 = vrot.lane.b32.xlu0 %v1165, 120
        %v1283 = vpop.permute.xlu0 %1282
        %1284 = vrot.lane.b32.xlu0 %v1166, 120
        %v1285 = vpop.permute.xlu0 %1284
        %v1286 = vsel %vm926, %v1281, %v1283
        %v1287 = vsel %vm926, %v1283, %v1285
        %1293 = vrot.lane.b32.xlu0 %v1087, 119
        %v1294 = vpop.permute.xlu0 %1293
        %1295 = vrot.lane.b32.xlu0 %v1088, 119
        %v1296 = vpop.permute.xlu0 %1295
        %1297 = vrot.lane.b32.xlu0 %v1103, 119
        %v1298 = vpop.permute.xlu0 %1297
        %v1299 = vsel %vm940, %v1294, %v1296
        %v1300 = vsel %vm940, %v1296, %v1298
        %1306 = vrot.lane.b32.xlu0 %v1185, 118
        %v1307 = vpop.permute.xlu0 %1306
        %1308 = vrot.lane.b32.xlu0 %v1186, 118
        %v1309 = vpop.permute.xlu0 %1308
        %1310 = vrot.lane.b32.xlu0 %v1187, 118
        %v1311 = vpop.permute.xlu0 %1310
        %v1312 = vsel %vm954, %v1307, %v1309
        %v1313 = vsel %vm954, %v1309, %v1311
        %1319 = vrot.lane.b32.xlu0 %v1206, 112
        %v1320 = vpop.permute.xlu0 %1319
        %1321 = vrot.lane.b32.xlu0 %v1207, 112
        %v1322 = vpop.permute.xlu0 %1321
        %1323 = vrot.lane.b32.xlu0 %v1208, 112
        %v1324 = vpop.permute.xlu0 %1323
        %v1325 = vsel %vm968, %v1320, %v1322
        %v1326 = vsel %vm968, %v1322, %v1324
        %1332 = vrot.lane.b32.xlu0 %v1227, 111
        %v1333 = vpop.permute.xlu0 %1332
        %1334 = vrot.lane.b32.xlu0 %v1228, 111
        %v1335 = vpop.permute.xlu0 %1334
        %1336 = vrot.lane.b32.xlu0 %v1229, 111
        %v1337 = vpop.permute.xlu0 %1336
        %v1338 = vsel %vm982, %v1333, %v1335
        %v1339 = vsel %vm982, %v1335, %v1337
        %1345 = vrot.lane.b32.xlu0 %v1248, 110
        %v1346 = vpop.permute.xlu0 %1345
        %1347 = vrot.lane.b32.xlu0 %v1249, 110
        %v1348 = vpop.permute.xlu0 %1347
        %1349 = vrot.lane.b32.xlu0 %v1250, 110
        %v1350 = vpop.permute.xlu0 %1349
        %v1351 = vsel %vm996, %v1346, %v1348
        %v1352 = vsel %vm996, %v1348, %v1350
        %v1355 = vpack.c.bf16 %v1260, %v1101
        %v1356 = vpack.c.bf16 %v1261, %v1102
        %v1357 = vpack.c.bf16 %v1286, %v1273
        %v1358 = vpack.c.bf16 %v1287, %v1274
        %v1359 = vpack.c.bf16 %v1312, %v1299
        %v1360 = vpack.c.bf16 %v1313, %v1300
        %v1361 = vpack.c.bf16 %v1338, %v1325
        %v1362 = vpack.c.bf16 %v1339, %v1326
        %v1363 = vpack.c.bf16 %v1351, %v1351
        %v1364 = vpack.c.bf16 %v1352, %v1352
        %s1365 = scalar_lea.vmem %s5, 4
        %v1366 = vld [vmem:[%s1365] sm:$0xf]
        %s1367 = scalar_lea.vmem %s6, 8
        %v1368 = vld [vmem:[%s1367] sm:$0xff]
        %1370 = vset.pattern.permute.xlu0 0
        %1371 = vperm.xlu0 %1370, %v1368
        %v1372 = vpop.permute.xlu0 %1371
        %v1375 = vsel %vm1018, %v1366, 0
        %v1378 = vsel %vm1022, %v1363, 0
        %v1381 = vsel %vm1022, %v1364, 0
        %1383 = vmatprep.subr.bf16.mxu0 %v1356
        %1384 = vmatpush1.bf16.msra.mxu0 %v1355
        %1385 = vmatprep.subr.bf16.mxu0 %v1358
        %1386 = vmatpush1.bf16.msra.mxu0 %v1357
        %1387 = vmatprep.subr.bf16.mxu0 %v1360
        %1388 = vmatpush1.bf16.msra.mxu0 %v1359
        %1389 = vmatprep.subr.bf16.mxu0 %v1362
        %1390 = vmatpush1.bf16.msra.mxu0 %v1361
        %1391 = vmatprep.subr.bf16.mxu0 %v1381
        %1392 = vmatpush1.bf16.msra.mxu0 %v1378
        %1393 = vmatprep.subr.bf16.mxu0 0
        %1394 = vmatpush1.bf16.msra.mxu0 0
        %1395 = vmatprep.subr.bf16.mxu0 0
        %1396 = vmatpush1.bf16.msra.mxu0 0
        %1397 = vmatprep.subr.bf16.mxu0 0
        %1398 = vmatpush1.bf16.msra.mxu0 0
        %1399 = vmatprep.subr.bf16.mxu0 0
        %1400 = vmatpush1.bf16.msra.mxu0 0
        %1401 = vmatprep.subr.bf16.mxu0 0
        %1402 = vmatpush1.bf16.msra.mxu0 0
        %1403 = vmatprep.subr.bf16.mxu0 0
        %1404 = vmatpush1.bf16.msra.mxu0 0
        %1405 = vmatprep.subr.bf16.mxu0 0
        %1406 = vmatpush1.bf16.msra.mxu0 0
        %1407 = vmatprep.subr.bf16.mxu0 0
        %1408 = vmatpush1.bf16.msra.mxu0 0
        %1409 = vmatprep.subr.bf16.mxu0 0
        %1410 = vmatpush1.bf16.msra.mxu0 0
        %1411 = vmatprep.subr.bf16.mxu0 0
        %1412 = vmatpush1.bf16.msra.mxu0 0
        %1413 = vmatprep.subr.bf16.mxu0 0
        %1414 = vmatpush1.bf16.msra.mxu0 0
        %1415 = vmatprep.mubr.bf16.mxu0 0
        %1416 = vmatmul.mubr.bf16.gmra.mrb[0].mxu0 %v1375
        %v1417 = vpop.f32.mrb[0].mxu0
        %v1418 = vadd.f32 %v1372, %v1417
        %v1419 = vpop.f32.mrb[0].mxu0
        %v1420 = vadd.f32 %v1372, %v1419
        %v1421 = vpop.f32.mrb[0].mxu0
        %v1422 = vpop.f32.mrb[0].mxu0
        %1423 = vdwg.mxu0
        %1424 = vst [vmem:[#allocation3 + $0x10] sm:$0xff] %v1418
        %1425 = vst [vmem:[#allocation3 + $0x18] sm:$0xff] %v1420
        %v1426 = vadd.f32 %v1418, %v691
        %v1427 = vadd.f32 %v1420, %v692
        %1430 = vrot.lane.b32.xlu0 %v1426, 9
        %v1431 = vpop.permute.xlu0 %1430
        %1432 = vrot.lane.b32.xlu0 %v1427, 9
        %v1433 = vpop.permute.xlu0 %1432
        %v1434 = vsel %vm693, %v1431, %v1433
        %1438 = vst.msk [vmem:[#allocation2] sm:$0xff] %vm707, %v1431
        %1439 = vst [vmem:[#allocation2 + $0x8] sm:$0xff] %v1434
        %1440 = vst.msk [vmem:[#allocation2 + $0x10] sm:$0xff] %vm693, %v1433
        %v1441 = vld [vmem:[#allocation2] sm:$0xff]
        %v1442 = vld [vmem:[#allocation2 + $0x8] sm:$0xff]
        %v1443 = vld [vmem:[%s7] ss:$8 sm:$0x3]
        %v1445 = vlaneseq
        %v1446 = vshrl.u32 %v1445, 7
        %v1447 = vsub.s32 0, %v1446
        %v1448 = vrot.slane %v1443, %v1447
        %v1449 = vlaneseq
        %v1450 = vshrl.u32 %v1449, 7
        %v1451 = vsub.s32 1, %v1450
        %v1452 = vrot.slane %v1443, %v1451
        %v1455 = vmul.f32 %v1441, %v1448
        %v1456 = vmul.f32 %v1442, %v1452
        %v1457 = vld [vmem:[#allocation2 + $0x10] sm:$0xff]
        %v1458 = vld [vmem:[%s728] ss:$8 sm:$0x3]
        %v1460 = vlaneseq
        %v1461 = vshrl.u32 %v1460, 7
        %v1462 = vsub.s32 0, %v1461
        %v1463 = vrot.slane %v1458, %v1462
        %v1464 = vlaneseq
        %v1465 = vshrl.u32 %v1464, 7
        %v1466 = vsub.s32 1, %v1465
        %v1467 = vrot.slane %v1458, %v1466
        %1468 = vrot.lane.b32.xlu0 %v1463, 1
        %v1469 = vpop.permute.xlu0 %1468
        %1470 = vrot.lane.b32.xlu0 %v1467, 1
        %v1471 = vpop.permute.xlu0 %1470
        %v1472 = vsel %vm743, %v1469, %v1471
        %v1476 = vmul.f32 %v1441, %v1469
        %v1477 = vmul.f32 %v1442, %v1472
        %v1478 = vmul.f32 %v1457, %v1471
        %v1479 = vld [vmem:[%s751] ss:$8 sm:$0x3]
        %v1481 = vlaneseq
        %v1482 = vshrl.u32 %v1481, 7
        %v1483 = vsub.s32 0, %v1482
        %v1484 = vrot.slane %v1479, %v1483
        %v1485 = vlaneseq
        %v1486 = vshrl.u32 %v1485, 7
        %v1487 = vsub.s32 1, %v1486
        %v1488 = vrot.slane %v1479, %v1487
        %1489 = vrot.lane.b32.xlu0 %v1484, 2
        %v1490 = vpop.permute.xlu0 %1489
        %1491 = vrot.lane.b32.xlu0 %v1488, 2
        %v1492 = vpop.permute.xlu0 %1491
        %v1493 = vsel %vm766, %v1490, %v1492
        %v1497 = vmul.f32 %v1441, %v1490
        %v1498 = vmul.f32 %v1442, %v1493
        %v1499 = vmul.f32 %v1457, %v1492
        %v1500 = vld [vmem:[%s774] ss:$8 sm:$0x3]
        %v1502 = vlaneseq
        %v1503 = vshrl.u32 %v1502, 7
        %v1504 = vsub.s32 0, %v1503
        %v1505 = vrot.slane %v1500, %v1504
        %v1506 = vlaneseq
        %v1507 = vshrl.u32 %v1506, 7
        %v1508 = vsub.s32 1, %v1507
        %v1509 = vrot.slane %v1500, %v1508
        %1510 = vrot.lane.b32.xlu0 %v1505, 8
        %v1511 = vpop.permute.xlu0 %1510
        %1512 = vrot.lane.b32.xlu0 %v1509, 8
        %v1513 = vpop.permute.xlu0 %1512
        %v1514 = vsel %vm789, %v1511, %v1513
        %v1518 = vmul.f32 %v1441, %v1511
        %v1519 = vmul.f32 %v1442, %v1514
        %v1520 = vmul.f32 %v1457, %v1513
        %v1521 = vld [vmem:[%s797] ss:$8 sm:$0x3]
        %v1523 = vlaneseq
        %v1524 = vshrl.u32 %v1523, 7
        %v1525 = vsub.s32 0, %v1524
        %v1526 = vrot.slane %v1521, %v1525
        %v1527 = vlaneseq
        %v1528 = vshrl.u32 %v1527, 7
        %v1529 = vsub.s32 1, %v1528
        %v1530 = vrot.slane %v1521, %v1529
        %1531 = vrot.lane.b32.xlu0 %v1526, 10
        %v1532 = vpop.permute.xlu0 %1531
        %1533 = vrot.lane.b32.xlu0 %v1530, 10
        %v1534 = vpop.permute.xlu0 %1533
        %v1535 = vsel %vm812, %v1532, %v1534
        %v1539 = vmul.f32 %v1441, %v1532
        %v1540 = vmul.f32 %v1442, %v1535
        %v1541 = vmul.f32 %v1457, %v1534
        %v1542 = vld [vmem:[%s820] ss:$8 sm:$0x3]
        %v1544 = vlaneseq
        %v1545 = vshrl.u32 %v1544, 7
        %v1546 = vsub.s32 0, %v1545
        %v1547 = vrot.slane %v1542, %v1546
        %v1548 = vlaneseq
        %v1549 = vshrl.u32 %v1548, 7
        %v1550 = vsub.s32 1, %v1549
        %v1551 = vrot.slane %v1542, %v1550
        %1552 = vrot.lane.b32.xlu0 %v1547, 16
        %v1553 = vpop.permute.xlu0 %1552
        %1554 = vrot.lane.b32.xlu0 %v1551, 16
        %v1555 = vpop.permute.xlu0 %1554
        %v1556 = vsel %vm835, %v1553, %v1555
        %v1560 = vmul.f32 %v1441, %v1553
        %v1561 = vmul.f32 %v1442, %v1556
        %v1562 = vmul.f32 %v1457, %v1555
        %v1563 = vld [vmem:[%s843] ss:$8 sm:$0x3]
        %v1565 = vlaneseq
        %v1566 = vshrl.u32 %v1565, 7
        %v1567 = vsub.s32 0, %v1566
        %v1568 = vrot.slane %v1563, %v1567
        %v1569 = vlaneseq
        %v1570 = vshrl.u32 %v1569, 7
        %v1571 = vsub.s32 1, %v1570
        %v1572 = vrot.slane %v1563, %v1571
        %1573 = vrot.lane.b32.xlu0 %v1568, 17
        %v1574 = vpop.permute.xlu0 %1573
        %1575 = vrot.lane.b32.xlu0 %v1572, 17
        %v1576 = vpop.permute.xlu0 %1575
        %v1577 = vsel %vm858, %v1574, %v1576
        %v1581 = vmul.f32 %v1441, %v1574
        %v1582 = vmul.f32 %v1442, %v1577
        %v1583 = vmul.f32 %v1457, %v1576
        %v1584 = vld [vmem:[%s866] ss:$8 sm:$0x3]
        %v1586 = vlaneseq
        %v1587 = vshrl.u32 %v1586, 7
        %v1588 = vsub.s32 0, %v1587
        %v1589 = vrot.slane %v1584, %v1588
        %v1590 = vlaneseq
        %v1591 = vshrl.u32 %v1590, 7
        %v1592 = vsub.s32 1, %v1591
        %v1593 = vrot.slane %v1584, %v1592
        %1594 = vrot.lane.b32.xlu0 %v1589, 18
        %v1595 = vpop.permute.xlu0 %1594
        %1596 = vrot.lane.b32.xlu0 %v1593, 18
        %v1597 = vpop.permute.xlu0 %1596
        %v1598 = vsel %vm881, %v1595, %v1597
        %v1602 = vmul.f32 %v1441, %v1595
        %v1603 = vmul.f32 %v1442, %v1598
        %v1604 = vmul.f32 %v1457, %v1597
        %1608 = vrot.lane.b32.xlu0 %v1476, 127
        %v1609 = vpop.permute.xlu0 %1608
        %1610 = vrot.lane.b32.xlu0 %v1477, 127
        %v1611 = vpop.permute.xlu0 %1610
        %1612 = vrot.lane.b32.xlu0 %v1478, 127
        %v1613 = vpop.permute.xlu0 %1612
        %v1614 = vsel %vm898, %v1609, %v1611
        %v1615 = vsel %vm898, %v1611, %v1613
        %1621 = vrot.lane.b32.xlu0 %v1497, 126
        %v1622 = vpop.permute.xlu0 %1621
        %1623 = vrot.lane.b32.xlu0 %v1498, 126
        %v1624 = vpop.permute.xlu0 %1623
        %1625 = vrot.lane.b32.xlu0 %v1499, 126
        %v1626 = vpop.permute.xlu0 %1625
        %v1627 = vsel %vm912, %v1622, %v1624
        %v1628 = vsel %vm912, %v1624, %v1626
        %1634 = vrot.lane.b32.xlu0 %v1518, 120
        %v1635 = vpop.permute.xlu0 %1634
        %1636 = vrot.lane.b32.xlu0 %v1519, 120
        %v1637 = vpop.permute.xlu0 %1636
        %1638 = vrot.lane.b32.xlu0 %v1520, 120
        %v1639 = vpop.permute.xlu0 %1638
        %v1640 = vsel %vm926, %v1635, %v1637
        %v1641 = vsel %vm926, %v1637, %v1639
        %1647 = vrot.lane.b32.xlu0 %v1441, 119
        %v1648 = vpop.permute.xlu0 %1647
        %1649 = vrot.lane.b32.xlu0 %v1442, 119
        %v1650 = vpop.permute.xlu0 %1649
        %1651 = vrot.lane.b32.xlu0 %v1457, 119
        %v1652 = vpop.permute.xlu0 %1651
        %v1653 = vsel %vm940, %v1648, %v1650
        %v1654 = vsel %vm940, %v1650, %v1652
        %1660 = vrot.lane.b32.xlu0 %v1539, 118
        %v1661 = vpop.permute.xlu0 %1660
        %1662 = vrot.lane.b32.xlu0 %v1540, 118
        %v1663 = vpop.permute.xlu0 %1662
        %1664 = vrot.lane.b32.xlu0 %v1541, 118
        %v1665 = vpop.permute.xlu0 %1664
        %v1666 = vsel %vm954, %v1661, %v1663
        %v1667 = vsel %vm954, %v1663, %v1665
        %1673 = vrot.lane.b32.xlu0 %v1560, 112
        %v1674 = vpop.permute.xlu0 %1673
        %1675 = vrot.lane.b32.xlu0 %v1561, 112
        %v1676 = vpop.permute.xlu0 %1675
        %1677 = vrot.lane.b32.xlu0 %v1562, 112
        %v1678 = vpop.permute.xlu0 %1677
        %v1679 = vsel %vm968, %v1674, %v1676
        %v1680 = vsel %vm968, %v1676, %v1678
        %1686 = vrot.lane.b32.xlu0 %v1581, 111
        %v1687 = vpop.permute.xlu0 %1686
        %1688 = vrot.lane.b32.xlu0 %v1582, 111
        %v1689 = vpop.permute.xlu0 %1688
        %1690 = vrot.lane.b32.xlu0 %v1583, 111
        %v1691 = vpop.permute.xlu0 %1690
        %v1692 = vsel %vm982, %v1687, %v1689
        %v1693 = vsel %vm982, %v1689, %v1691
        %1699 = vrot.lane.b32.xlu0 %v1602, 110
        %v1700 = vpop.permute.xlu0 %1699
        %1701 = vrot.lane.b32.xlu0 %v1603, 110
        %v1702 = vpop.permute.xlu0 %1701
        %1703 = vrot.lane.b32.xlu0 %v1604, 110
        %v1704 = vpop.permute.xlu0 %1703
        %v1705 = vsel %vm996, %v1700, %v1702
        %v1706 = vsel %vm996, %v1702, %v1704
        %v1709 = vpack.c.bf16 %v1614, %v1455
        %v1710 = vpack.c.bf16 %v1615, %v1456
        %v1711 = vpack.c.bf16 %v1640, %v1627
        %v1712 = vpack.c.bf16 %v1641, %v1628
        %v1713 = vpack.c.bf16 %v1666, %v1653
        %v1714 = vpack.c.bf16 %v1667, %v1654
        %v1715 = vpack.c.bf16 %v1692, %v1679
        %v1716 = vpack.c.bf16 %v1693, %v1680
        %v1717 = vpack.c.bf16 %v1705, %v1705
        %v1718 = vpack.c.bf16 %v1706, %v1706
        %s1719 = scalar_lea.vmem %s5, 8
        %v1720 = vld [vmem:[%s1719] sm:$0xf]
        %s1721 = scalar_lea.vmem %s6, 16
        %v1722 = vld [vmem:[%s1721] sm:$0xff]
        %1724 = vset.pattern.permute.xlu0 0
        %1725 = vperm.xlu0 %1724, %v1722
        %v1726 = vpop.permute.xlu0 %1725
        %v1729 = vsel %vm1018, %v1720, 0
        %v1732 = vsel %vm1022, %v1717, 0
        %v1735 = vsel %vm1022, %v1718, 0
        %1737 = vmatprep.subr.bf16.mxu0 %v1710
        %1738 = vmatpush1.bf16.msra.mxu0 %v1709
        %1739 = vmatprep.subr.bf16.mxu0 %v1712
        %1740 = vmatpush1.bf16.msra.mxu0 %v1711
        %1741 = vmatprep.subr.bf16.mxu0 %v1714
        %1742 = vmatpush1.bf16.msra.mxu0 %v1713
        %1743 = vmatprep.subr.bf16.mxu0 %v1716
        %1744 = vmatpush1.bf16.msra.mxu0 %v1715
        %1745 = vmatprep.subr.bf16.mxu0 %v1735
        %1746 = vmatpush1.bf16.msra.mxu0 %v1732
        %1747 = vmatprep.subr.bf16.mxu0 0
        %1748 = vmatpush1.bf16.msra.mxu0 0
        %1749 = vmatprep.subr.bf16.mxu0 0
        %1750 = vmatpush1.bf16.msra.mxu0 0
        %1751 = vmatprep.subr.bf16.mxu0 0
        %1752 = vmatpush1.bf16.msra.mxu0 0
        %1753 = vmatprep.subr.bf16.mxu0 0
        %1754 = vmatpush1.bf16.msra.mxu0 0
        %1755 = vmatprep.subr.bf16.mxu0 0
        %1756 = vmatpush1.bf16.msra.mxu0 0
        %1757 = vmatprep.subr.bf16.mxu0 0
        %1758 = vmatpush1.bf16.msra.mxu0 0
        %1759 = vmatprep.subr.bf16.mxu0 0
        %1760 = vmatpush1.bf16.msra.mxu0 0
        %1761 = vmatprep.subr.bf16.mxu0 0
        %1762 = vmatpush1.bf16.msra.mxu0 0
        %1763 = vmatprep.subr.bf16.mxu0 0
        %1764 = vmatpush1.bf16.msra.mxu0 0
        %1765 = vmatprep.subr.bf16.mxu0 0
        %1766 = vmatpush1.bf16.msra.mxu0 0
        %1767 = vmatprep.subr.bf16.mxu0 0
        %1768 = vmatpush1.bf16.msra.mxu0 0
        %1769 = vmatprep.mubr.bf16.mxu0 0
        %1770 = vmatmul.mubr.bf16.gmra.mrb[0].mxu0 %v1729
        %v1771 = vpop.f32.mrb[0].mxu0
        %v1772 = vadd.f32 %v1726, %v1771
        %v1773 = vpop.f32.mrb[0].mxu0
        %v1774 = vadd.f32 %v1726, %v1773
        %v1775 = vpop.f32.mrb[0].mxu0
        %v1776 = vpop.f32.mrb[0].mxu0
        %1777 = vdwg.mxu0
        %1778 = vst [vmem:[#allocation3 + $0x20] sm:$0xff] %v1772
        %1779 = vst [vmem:[#allocation3 + $0x28] sm:$0xff] %v1774
        %v1780 = vld [vmem:[#allocation3] sm:$0xff]
        %v1781 = vld [vmem:[#allocation3 + $0x8] sm:$0xff]
        %v1782 = vld [vmem:[#allocation3 + $0x10] sm:$0xff]
        %v1783 = vld [vmem:[#allocation3 + $0x18] sm:$0xff]
        %v1784 = vld [vmem:[#allocation3 + $0x20] sm:$0xff]
        %v1785 = vld [vmem:[#allocation3 + $0x28] sm:$0xff]
        %v1786 = vld [vmem:[%s8] sm:$0xff]
        %v1787 = vld [vmem:[%s8 + $0x8] sm:$0xff]
        %v1788 = vld [vmem:[%s8 + $0x10] sm:$0xff]
        %v1789 = vld [vmem:[%s8 + $0x18] sm:$0xff]
        %v1790 = vld [vmem:[%s8 + $0x20] sm:$0xff]
        %v1791 = vld [vmem:[%s8 + $0x28] sm:$0xff]
        %v1792 = vld [vmem:[%s8 + $0x30] sm:$0xff]
        %v1793 = vld [vmem:[%s8 + $0x38] sm:$0xff]
        %v1794 = vld [vmem:[%s8 + $0x40] sm:$0xff]
        %v1795 = vld [vmem:[%s8 + $0x48] sm:$0xff]
        %v1796 = vld [vmem:[%s8 + $0x50] sm:$0xff]
        %v1797 = vld [vmem:[%s8 + $0x58] sm:$0xff]
        %v1798 = vld [vmem:[%s8 + $0x60] sm:$0xff]
        %v1799 = vld [vmem:[%s8 + $0x68] sm:$0xff]
        %v1800 = vld [vmem:[%s8 + $0x70] sm:$0xff]
        %v1801 = vld [vmem:[%s8 + $0x78] sm:$0xff]
        %v1802 = vld [vmem:[%s8 + $0x80] sm:$0xff]
        %v1803 = vld [vmem:[%s8 + $0x88] sm:$0xff]
        %v1804 = vld [vmem:[%s8 + $0x90] sm:$0xff]
        %v1805 = vld [vmem:[%s8 + $0x98] sm:$0xff]
        %v1806 = vld [vmem:[%s8 + $0xa0] sm:$0xff]
        %v1807 = vld [vmem:[%s8 + $0xa8] sm:$0xff]
        %v1808 = vld [vmem:[%s8 + $0xb0] sm:$0xff]
        %v1809 = vld [vmem:[%s8 + $0xb8] sm:$0xff]
        %v1810 = vld [vmem:[%s8 + $0xc0] sm:$0xff]
        %v1811 = vld [vmem:[%s8 + $0xc8] sm:$0xff]
        %v1812 = vld [vmem:[%s8 + $0xd0] sm:$0xff]
        %v1813 = vld [vmem:[%s8 + $0xd8] sm:$0xff]
        %v1814 = vld [vmem:[%s8 + $0xe0] sm:$0xff]
        %v1815 = vld [vmem:[%s8 + $0xe8] sm:$0xff]
        %v1816 = vld [vmem:[%s8 + $0xf0] sm:$0xff]
        %v1817 = vld [vmem:[%s8 + $0xf8] sm:$0xff]
        %1818 = vmatprep.subr.mxu0 0.0
        %1819 = vmatpush1.msra.mxu0 %v1786
        %1820 = vmatprep.subr.mxu0 0.0
        %1821 = vmatpush1.msra.mxu0 %v1787
        %1822 = vmatprep.subr.mxu0 0.0
        %1823 = vmatpush1.msra.mxu0 %v1788
        %1824 = vmatprep.subr.mxu0 0.0
        %1825 = vmatpush1.msra.mxu0 %v1789
        %1826 = vmatprep.subr.mxu0 0.0
        %1827 = vmatpush1.msra.mxu0 %v1790
        %1828 = vmatprep.subr.mxu0 0.0
        %1829 = vmatpush1.msra.mxu0 %v1791
        %1830 = vmatprep.subr.mxu0 0.0
        %1831 = vmatpush1.msra.mxu0 %v1792
        %1832 = vmatprep.subr.mxu0 0.0
        %1833 = vmatpush1.msra.mxu0 %v1793
        %1834 = vmatprep.subr.mxu0 0.0
        %1835 = vmatpush1.msra.mxu0 %v1794
        %1836 = vmatprep.subr.mxu0 0.0
        %1837 = vmatpush1.msra.mxu0 %v1795
        %1838 = vmatprep.subr.mxu0 0.0
        %1839 = vmatpush1.msra.mxu0 %v1796
        %1840 = vmatprep.subr.mxu0 0.0
        %1841 = vmatpush1.msra.mxu0 %v1797
        %1842 = vmatprep.subr.mxu0 0.0
        %1843 = vmatpush1.msra.mxu0 %v1798
        %1844 = vmatprep.subr.mxu0 0.0
        %1845 = vmatpush1.msra.mxu0 %v1799
        %1846 = vmatprep.subr.mxu0 0.0
        %1847 = vmatpush1.msra.mxu0 %v1800
        %1848 = vmatprep.subr.mxu0 0.0
        %1849 = vmatpush1.msra.mxu0 %v1801
        %1850 = vmatprep.subr.mxu0 0.0
        %1851 = vmatpush1.msra.mxu0 %v1802
        %1852 = vmatprep.subr.mxu0 0.0
        %1853 = vmatpush1.msra.mxu0 %v1803
        %1854 = vmatprep.subr.mxu0 0.0
        %1855 = vmatpush1.msra.mxu0 %v1804
        %1856 = vmatprep.subr.mxu0 0.0
        %1857 = vmatpush1.msra.mxu0 %v1805
        %1858 = vmatprep.subr.mxu0 0.0
        %1859 = vmatpush1.msra.mxu0 %v1806
        %1860 = vmatprep.subr.mxu0 0.0
        %1861 = vmatpush1.msra.mxu0 %v1807
        %1862 = vmatprep.subr.mxu0 0.0
        %1863 = vmatpush1.msra.mxu0 %v1808
        %1864 = vmatprep.subr.mxu0 0.0
        %1865 = vmatpush1.msra.mxu0 %v1809
        %1866 = vmatprep.subr.mxu0 0.0
        %1867 = vmatpush1.msra.mxu0 %v1810
        %1868 = vmatprep.subr.mxu0 0.0
        %1869 = vmatpush1.msra.mxu0 %v1811
        %1870 = vmatprep.subr.mxu0 0.0
        %1871 = vmatpush1.msra.mxu0 %v1812
        %1872 = vmatprep.subr.mxu0 0.0
        %1873 = vmatpush1.msra.mxu0 %v1813
        %1874 = vmatprep.subr.mxu0 0.0
        %1875 = vmatpush1.msra.mxu0 %v1814
        %1876 = vmatprep.subr.mxu0 0.0
        %1877 = vmatpush1.msra.mxu0 %v1815
        %1878 = vmatprep.subr.mxu0 0.0
        %1879 = vmatpush1.msra.mxu0 %v1816
        %1880 = vmatprep.subr.mxu0 0.0
        %1881 = vmatpush1.msra.mxu0 %v1817
        %1882 = vmatprep.mubr.f32.mxu0 %v1781
        %1883 = vmatmul.mubr.f32.gmra.mrb[0].mxu0 %v1780
        %v1884 = vpop.f32.mrb[0].mxu0
        %v1885 = vadd.f32 0.0, %v1884
        %v1886 = vpop.f32.mrb[0].mxu0
        %1887 = vmatprep.mubr.f32.mxu0 %v1783
        %1888 = vmatmul.mubr.f32.gmra.mrb[0].mxu0 %v1782
        %v1889 = vpop.f32.mrb[0].mxu0
        %v1890 = vadd.f32 0.0, %v1889
        %v1891 = vpop.f32.mrb[0].mxu0
        %1892 = vmatprep.mubr.f32.mxu0 %v1785
        %1893 = vmatmul.mubr.f32.gmra.mrb[0].mxu0 %v1784
        %v1894 = vpop.f32.mrb[0].mxu0
        %v1895 = vadd.f32 0.0, %v1894
        %v1896 = vpop.f32.mrb[0].mxu0
        %1897 = vdwg.mxu0
        %v1898 = vld [vmem:[%s10] sm:$0xf]
        %v1899 = vld [vmem:[%s10 + $0x4] sm:$0xf]
        %v1900 = vld [vmem:[%s10 + $0x8] sm:$0xf]
        %v1901 = vpack.c.bf16 %v1890, %v1885
        %v1902 = vpack.c.bf16 %v1895, %v1895
        %v1906 = vunpack.c.l.b16 %v1898
        %v1907 = vunpack.c.l.b16 %v1899
        %v1908 = vunpack.c.l.b16 %v1900
        %v1909 = vpack.c.b16 %v1907, %v1906
        %v1910 = vpack.c.b16 %v1908, %v1908
        %vm1911 = vcmask 195584
        %v1913 = vsel %vm1911, %v1909, 0
        %v1916 = vsel %vm1911, %v1910, 0
        %v1919 = vsel %vm1022, %v1902, 0
        %1921 = vmatprep.subr.bf16.mxu0 0
        %1922 = vmatpush1.bf16.msra.mxu0 %v1901
        %1923 = vmatprep.subr.bf16.mxu0 0
        %1924 = vmatpush1.bf16.msra.mxu0 %v1919
        %1925 = vmatprep.subr.bf16.mxu0 0
        %1926 = vmatpush1.bf16.msra.mxu0 0
        %1927 = vmatprep.subr.bf16.mxu0 0
        %1928 = vmatpush1.bf16.msra.mxu0 0
        %1929 = vmatprep.subr.bf16.mxu0 0
        %1930 = vmatpush1.bf16.msra.mxu0 0
        %1931 = vmatprep.subr.bf16.mxu0 0
        %1932 = vmatpush1.bf16.msra.mxu0 0
        %1933 = vmatprep.subr.bf16.mxu0 0
        %1934 = vmatpush1.bf16.msra.mxu0 0
        %1935 = vmatprep.subr.bf16.mxu0 0
        %1936 = vmatpush1.bf16.msra.mxu0 0
        %1937 = vmatprep.subr.bf16.mxu0 0
        %1938 = vmatpush1.bf16.msra.mxu0 0
        %1939 = vmatprep.subr.bf16.mxu0 0
        %1940 = vmatpush1.bf16.msra.mxu0 0
        %1941 = vmatprep.subr.bf16.mxu0 0
        %1942 = vmatpush1.bf16.msra.mxu0 0
        %1943 = vmatprep.subr.bf16.mxu0 0
        %1944 = vmatpush1.bf16.msra.mxu0 0
        %1945 = vmatprep.subr.bf16.mxu0 0
        %1946 = vmatpush1.bf16.msra.mxu0 0
        %1947 = vmatprep.subr.bf16.mxu0 0
        %1948 = vmatpush1.bf16.msra.mxu0 0
        %1949 = vmatprep.subr.bf16.mxu0 0
        %1950 = vmatpush1.bf16.msra.mxu0 0
        %1951 = vmatprep.subr.bf16.mxu0 0
        %1952 = vmatpush1.bf16.msra.mxu0 0
        %1953 = vmatprep.mubr.bf16.mxu0 0
        %1954 = vmatmul.mubr.bf16.gmra.mrb[0].mxu0 %v1913
        %v1955 = vpop.f32.mrb[0].mxu0
        %v1956 = vadd.f32 0.0, %v1955
        %v1957 = vpop.f32.mrb[0].mxu0
        %v1958 = vpop.f32.mrb[0].mxu0
        %v1959 = vadd.f32 0.0, %v1958
        %v1960 = vpop.f32.mrb[0].mxu0
        %1961 = vmatprep.mubr.bf16.mxu0 0
        %1962 = vmatmul.mubr.bf16.gmra.mrb[0].mxu0 %v1916
        %v1963 = vpop.f32.mrb[0].mxu0
        %v1964 = vadd.f32 0.0, %v1963
        %v1965 = vpop.f32.mrb[0].mxu0
        %v1966 = vpop.f32.mrb[0].mxu0
        %v1967 = vpop.f32.mrb[0].mxu0
        %1968 = vdwg.mxu0
        %v1969 = vmax.f32 %v1956, 0.0
        %v1970 = vmax.f32 %v1959, 0.0
        %v1971 = vmax.f32 %v1964, 0.0
        %v1972 = vld [vmem:[%s11] sm:$0xf]
        %v1973 = vld [vmem:[%s11 + $0x4] sm:$0xf]
        %v1974 = vld [vmem:[%s11 + $0x8] sm:$0xf]
        %v1975 = vpack.c.bf16 %v1970, %v1969
        %v1976 = vpack.c.bf16 %v1971, %v1971
        %v1980 = vunpack.c.l.b16 %v1972
        %v1981 = vunpack.c.l.b16 %v1973
        %v1982 = vunpack.c.l.b16 %v1974
        %v1983 = vpack.c.b16 %v1981, %v1980
        %v1984 = vpack.c.b16 %v1982, %v1982
        %v1986 = vsel %vm1911, %v1983, 0
        %v1989 = vsel %vm1911, %v1984, 0
        %v1992 = vsel %vm1022, %v1976, 0
        %1994 = vmatprep.subr.bf16.mxu0 0
        %1995 = vmatpush1.bf16.msra.mxu0 %v1975
        %1996 = vmatprep.subr.bf16.mxu0 0
        %1997 = vmatpush1.bf16.msra.mxu0 %v1992
        %1998 = vmatprep.subr.bf16.mxu0 0
        %1999 = vmatpush1.bf16.msra.mxu0 0
        %2000 = vmatprep.subr.bf16.mxu0 0
        %2001 = vmatpush1.bf16.msra.mxu0 0
        %2002 = vmatprep.subr.bf16.mxu0 0
        %2003 = vmatpush1.bf16.msra.mxu0 0
        %2004 = vmatprep.subr.bf16.mxu0 0
        %2005 = vmatpush1.bf16.msra.mxu0 0
        %2006 = vmatprep.subr.bf16.mxu0 0
        %2007 = vmatpush1.bf16.msra.mxu0 0
        %2008 = vmatprep.subr.bf16.mxu0 0
        %2009 = vmatpush1.bf16.msra.mxu0 0
        %2010 = vmatprep.subr.bf16.mxu0 0
        %2011 = vmatpush1.bf16.msra.mxu0 0
        %2012 = vmatprep.subr.bf16.mxu0 0
        %2013 = vmatpush1.bf16.msra.mxu0 0
        %2014 = vmatprep.subr.bf16.mxu0 0
        %2015 = vmatpush1.bf16.msra.mxu0 0
        %2016 = vmatprep.subr.bf16.mxu0 0
        %2017 = vmatpush1.bf16.msra.mxu0 0
        %2018 = vmatprep.subr.bf16.mxu0 0
        %2019 = vmatpush1.bf16.msra.mxu0 0
        %2020 = vmatprep.subr.bf16.mxu0 0
        %2021 = vmatpush1.bf16.msra.mxu0 0
        %2022 = vmatprep.subr.bf16.mxu0 0
        %2023 = vmatpush1.bf16.msra.mxu0 0
        %2024 = vmatprep.subr.bf16.mxu0 0
        %2025 = vmatpush1.bf16.msra.mxu0 0
        %2026 = vmatprep.mubr.bf16.mxu0 0
        %2027 = vmatmul.mubr.bf16.gmra.mrb[0].mxu0 %v1986
        %v2028 = vpop.f32.mrb[0].mxu0
        %v2029 = vadd.f32 0.0, %v2028
        %v2030 = vpop.f32.mrb[0].mxu0
        %v2031 = vpop.f32.mrb[0].mxu0
        %v2032 = vadd.f32 0.0, %v2031
        %v2033 = vpop.f32.mrb[0].mxu0
        %2034 = vmatprep.mubr.bf16.mxu0 0
        %2035 = vmatmul.mubr.bf16.gmra.mrb[0].mxu0 %v1989
        %v2036 = vpop.f32.mrb[0].mxu0
        %v2037 = vadd.f32 0.0, %v2036
        %v2038 = vpop.f32.mrb[0].mxu0
        %v2039 = vpop.f32.mrb[0].mxu0
        %v2040 = vpop.f32.mrb[0].mxu0
        %2041 = vdwg.mxu0
        %v2042 = vsub.f32 0.0, %v2029
        %v2043 = vsub.f32 0.0, %v2032
        %v2044 = vsub.f32 0.0, %v2037
        %v2045 = vmul.f32 %v2042, 1.442695
        %v2046 = vpow.pop %v2045
        %v2047 = vmul.f32 %v2043, 1.442695
        %v2048 = vpow.pop %v2047
        %v2049 = vmul.f32 %v2044, 1.442695
        %v2050 = vpow.pop %v2049
        %v2051 = vadd.f32 %v2046, 1.0
        %v2052 = vadd.f32 %v2048, 1.0
        %v2053 = vadd.f32 %v2050, 1.0
        %v2054 = vrcp.pop %v2051
        %v2055 = vmul.f32 1.0, %v2054
        %v2056 = vrcp.pop %v2052
        %v2057 = vmul.f32 1.0, %v2056
        %v2058 = vrcp.pop %v2053
        %v2059 = vmul.f32 1.0, %v2058
        %v2060 = vmax.f32 %v2055, %v2057
        %v2061 = vmax.f32 %v2060, %v2059
        %v2062 = vsub.f32 %v2055, %v2061
        %v2063 = vmul.f32 %v2062, 1.442695
        %v2064 = vpow.pop %v2063
        %v2065 = vsub.f32 %v2057, %v2061
        %v2066 = vmul.f32 %v2065, 1.442695
        %v2067 = vpow.pop %v2066
        %v2068 = vsub.f32 %v2059, %v2061
        %v2069 = vmul.f32 %v2068, 1.442695
        %v2070 = vpow.pop %v2069
        %v2071 = vadd.f32 %v2064, %v2067
        %v2072 = vadd.f32 %v2071, %v2070
        %v2073 = vrcp.pop %v2072
        %v2074 = vmul.f32 1.0, %v2073
        %v2075 = vmul.f32 %v2064, %v2074
        %v2076 = vld [vmem:[%s12] sm:$0xff]
        %2078 = vset.pattern.permute.xlu0 0
        %2079 = vperm.xlu0 %2078, %v2076
        %v2080 = vpop.permute.xlu0 %2079
        %v2082 = vmul.f32 %v2075, %v2080
        %v2083 = vld [vmem:[%s9] sm:$0xff]
        %v2085 = vcombine.high %v2083, %v2083
        %vm2086 = vcmask 31744
        %v2088 = vsel %vm2086, %v2082, 0
        %v2090 = vsel %vm1022, %v2083, 0
        %v2092 = vsel %vm1022, %v2085, 0
        %2094 = vmatprep.subr.mxu0 %v2092
        %2095 = vmatpush1.msra.mxu0 %v2090
        %2096 = vmatprep.subr.mxu0 0.0
        %2097 = vmatpush1.msra.mxu0 0.0
        %2098 = vmatprep.subr.mxu0 0.0
        %2099 = vmatpush1.msra.mxu0 0.0
        %2100 = vmatprep.subr.mxu0 0.0
        %2101 = vmatpush1.msra.mxu0 0.0
        %2102 = vmatprep.subr.mxu0 0.0
        %2103 = vmatpush1.msra.mxu0 0.0
        %2104 = vmatprep.subr.mxu0 0.0
        %2105 = vmatpush1.msra.mxu0 0.0
        %2106 = vmatprep.subr.mxu0 0.0
        %2107 = vmatpush1.msra.mxu0 0.0
        %2108 = vmatprep.subr.mxu0 0.0
        %2109 = vmatpush1.msra.mxu0 0.0
        %2110 = vmatprep.subr.mxu0 0.0
        %2111 = vmatpush1.msra.mxu0 0.0
        %2112 = vmatprep.subr.mxu0 0.0
        %2113 = vmatpush1.msra.mxu0 0.0
        %2114 = vmatprep.subr.mxu0 0.0
        %2115 = vmatpush1.msra.mxu0 0.0
        %2116 = vmatprep.subr.mxu0 0.0
        %2117 = vmatpush1.msra.mxu0 0.0
        %2118 = vmatprep.subr.mxu0 0.0
        %2119 = vmatpush1.msra.mxu0 0.0
        %2120 = vmatprep.subr.mxu0 0.0
        %2121 = vmatpush1.msra.mxu0 0.0
        %2122 = vmatprep.subr.mxu0 0.0
        %2123 = vmatpush1.msra.mxu0 0.0
        %2124 = vmatprep.subr.mxu0 0.0
        %2125 = vmatpush1.msra.mxu0 0.0
        %2126 = vmatprep.subr.mxu0 0.0
        %2127 = vmatpush1.msra.mxu0 0.0
        %2128 = vmatprep.subr.mxu0 0.0
        %2129 = vmatpush1.msra.mxu0 0.0
        %2130 = vmatprep.subr.mxu0 0.0
        %2131 = vmatpush1.msra.mxu0 0.0
        %2132 = vmatprep.subr.mxu0 0.0
        %2133 = vmatpush1.msra.mxu0 0.0
        %2134 = vmatprep.subr.mxu0 0.0
        %2135 = vmatpush1.msra.mxu0 0.0
        %2136 = vmatprep.subr.mxu0 0.0
        %2137 = vmatpush1.msra.mxu0 0.0
        %2138 = vmatprep.subr.mxu0 0.0
        %2139 = vmatpush1.msra.mxu0 0.0
        %2140 = vmatprep.subr.mxu0 0.0
        %2141 = vmatpush1.msra.mxu0 0.0
        %2142 = vmatprep.subr.mxu0 0.0
        %2143 = vmatpush1.msra.mxu0 0.0
        %2144 = vmatprep.subr.mxu0 0.0
        %2145 = vmatpush1.msra.mxu0 0.0
        %2146 = vmatprep.subr.mxu0 0.0
        %2147 = vmatpush1.msra.mxu0 0.0
        %2148 = vmatprep.subr.mxu0 0.0
        %2149 = vmatpush1.msra.mxu0 0.0
        %2150 = vmatprep.subr.mxu0 0.0
        %2151 = vmatpush1.msra.mxu0 0.0
        %2152 = vmatprep.subr.mxu0 0.0
        %2153 = vmatpush1.msra.mxu0 0.0
        %2154 = vmatprep.subr.mxu0 0.0
        %2155 = vmatpush1.msra.mxu0 0.0
        %2156 = vmatprep.subr.mxu0 0.0
        %2157 = vmatpush1.msra.mxu0 0.0
        %2158 = vmatprep.mubr.f32.mxu0 0.0
        %2159 = vmatmul.mubr.f32.gmra.mrb[0].mxu0 %v2088
        %v2160 = vpop.f32.mrb[0].mxu0
        %v2161 = vadd.f32 0.0, %v2160
        %v2162 = vpop.f32.mrb[0].mxu0
        %v2163 = vadd.f32 0.0, %v2162
        %2164 = vdwg.mxu0
        %v2165 = vld [vmem:[#allocation3] sm:$0xff]
        %v2166 = vld [vmem:[#allocation3 + $0x8] sm:$0xff]
        %v2167 = vmul.f32 %v2165, %v2161
        %v2168 = vmul.f32 %v2166, %v2163
        %v2169 = vld [vmem:[%s13] sm:$0xff]
        %2171 = vset.pattern.permute.xlu0 0
        %2172 = vperm.xlu0 %2171, %v2169
        %v2173 = vpop.permute.xlu0 %2172
        %v2175 = vadd.f32 %v2167, %v2173
        %v2176 = vadd.f32 %v2168, %v2173
        %v2177 = vmax.f32 %v2175, 0.0
        %v2178 = vmax.f32 %v2176, 0.0
        %2179 = vst [vmem:[#allocation3] sm:$0xff] %v2177
        %2180 = vst [vmem:[#allocation3 + $0x8] sm:$0xff] %v2178
        %v2181 = vmul.f32 %v2067, %v2074
        %s2182 = scalar_lea.vmem %s12, 8
        %v2183 = vld [vmem:[%s2182] sm:$0xff]
        %2185 = vset.pattern.permute.xlu0 0
        %2186 = vperm.xlu0 %2185, %v2183
        %v2187 = vpop.permute.xlu0 %2186
        %v2189 = vmul.f32 %v2181, %v2187
        %v2190 = vld [vmem:[%s9] sm:$0xff]
        %v2192 = vcombine.high %v2190, %v2190
        %v2194 = vsel %vm2086, %v2189, 0
        %v2196 = vsel %vm1022, %v2190, 0
        %v2198 = vsel %vm1022, %v2192, 0
        %2200 = vmatprep.subr.mxu0 %v2198
        %2201 = vmatpush1.msra.mxu0 %v2196
        %2202 = vmatprep.subr.mxu0 0.0
        %2203 = vmatpush1.msra.mxu0 0.0
        %2204 = vmatprep.subr.mxu0 0.0
        %2205 = vmatpush1.msra.mxu0 0.0
        %2206 = vmatprep.subr.mxu0 0.0
        %2207 = vmatpush1.msra.mxu0 0.0
        %2208 = vmatprep.subr.mxu0 0.0
        %2209 = vmatpush1.msra.mxu0 0.0
        %2210 = vmatprep.subr.mxu0 0.0
        %2211 = vmatpush1.msra.mxu0 0.0
        %2212 = vmatprep.subr.mxu0 0.0
        %2213 = vmatpush1.msra.mxu0 0.0
        %2214 = vmatprep.subr.mxu0 0.0
        %2215 = vmatpush1.msra.mxu0 0.0
        %2216 = vmatprep.subr.mxu0 0.0
        %2217 = vmatpush1.msra.mxu0 0.0
        %2218 = vmatprep.subr.mxu0 0.0
        %2219 = vmatpush1.msra.mxu0 0.0
        %2220 = vmatprep.subr.mxu0 0.0
        %2221 = vmatpush1.msra.mxu0 0.0
        %2222 = vmatprep.subr.mxu0 0.0
        %2223 = vmatpush1.msra.mxu0 0.0
        %2224 = vmatprep.subr.mxu0 0.0
        %2225 = vmatpush1.msra.mxu0 0.0
        %2226 = vmatprep.subr.mxu0 0.0
        %2227 = vmatpush1.msra.mxu0 0.0
        %2228 = vmatprep.subr.mxu0 0.0
        %2229 = vmatpush1.msra.mxu0 0.0
        %2230 = vmatprep.subr.mxu0 0.0
        %2231 = vmatpush1.msra.mxu0 0.0
        %2232 = vmatprep.subr.mxu0 0.0
        %2233 = vmatpush1.msra.mxu0 0.0
        %2234 = vmatprep.subr.mxu0 0.0
        %2235 = vmatpush1.msra.mxu0 0.0
        %2236 = vmatprep.subr.mxu0 0.0
        %2237 = vmatpush1.msra.mxu0 0.0
        %2238 = vmatprep.subr.mxu0 0.0
        %2239 = vmatpush1.msra.mxu0 0.0
        %2240 = vmatprep.subr.mxu0 0.0
        %2241 = vmatpush1.msra.mxu0 0.0
        %2242 = vmatprep.subr.mxu0 0.0
        %2243 = vmatpush1.msra.mxu0 0.0
        %2244 = vmatprep.subr.mxu0 0.0
        %2245 = vmatpush1.msra.mxu0 0.0
        %2246 = vmatprep.subr.mxu0 0.0
        %2247 = vmatpush1.msra.mxu0 0.0
        %2248 = vmatprep.subr.mxu0 0.0
        %2249 = vmatpush1.msra.mxu0 0.0
        %2250 = vmatprep.subr.mxu0 0.0
        %2251 = vmatpush1.msra.mxu0 0.0
        %2252 = vmatprep.subr.mxu0 0.0
        %2253 = vmatpush1.msra.mxu0 0.0
        %2254 = vmatprep.subr.mxu0 0.0
        %2255 = vmatpush1.msra.mxu0 0.0
        %2256 = vmatprep.subr.mxu0 0.0
        %2257 = vmatpush1.msra.mxu0 0.0
        %2258 = vmatprep.subr.mxu0 0.0
        %2259 = vmatpush1.msra.mxu0 0.0
        %2260 = vmatprep.subr.mxu0 0.0
        %2261 = vmatpush1.msra.mxu0 0.0
        %2262 = vmatprep.subr.mxu0 0.0
        %2263 = vmatpush1.msra.mxu0 0.0
        %2264 = vmatprep.mubr.f32.mxu0 0.0
        %2265 = vmatmul.mubr.f32.gmra.mrb[0].mxu0 %v2194
        %v2266 = vpop.f32.mrb[0].mxu0
        %v2267 = vadd.f32 0.0, %v2266
        %v2268 = vpop.f32.mrb[0].mxu0
        %v2269 = vadd.f32 0.0, %v2268
        %2270 = vdwg.mxu0
        %v2271 = vld [vmem:[#allocation3 + $0x10] sm:$0xff]
        %v2272 = vld [vmem:[#allocation3 + $0x18] sm:$0xff]
        %v2273 = vmul.f32 %v2271, %v2267
        %v2274 = vmul.f32 %v2272, %v2269
        %s2275 = scalar_lea.vmem %s13, 8
        %v2276 = vld [vmem:[%s2275] sm:$0xff]
        %2278 = vset.pattern.permute.xlu0 0
        %2279 = vperm.xlu0 %2278, %v2276
        %v2280 = vpop.permute.xlu0 %2279
        %v2282 = vadd.f32 %v2273, %v2280
        %v2283 = vadd.f32 %v2274, %v2280
        %v2284 = vmax.f32 %v2282, 0.0
        %v2285 = vmax.f32 %v2283, 0.0
        %2286 = vst [vmem:[#allocation3 + $0x10] sm:$0xff] %v2284
        %2287 = vst [vmem:[#allocation3 + $0x18] sm:$0xff] %v2285
        %v2288 = vmul.f32 %v2070, %v2074
        %s2289 = scalar_lea.vmem %s12, 16
        %v2290 = vld [vmem:[%s2289] sm:$0xff]
        %2292 = vset.pattern.permute.xlu0 0
        %2293 = vperm.xlu0 %2292, %v2290
        %v2294 = vpop.permute.xlu0 %2293
        %v2296 = vmul.f32 %v2288, %v2294
        %v2297 = vld [vmem:[%s9] sm:$0xff]
        %v2299 = vcombine.high %v2297, %v2297
        %v2301 = vsel %vm2086, %v2296, 0
        %v2303 = vsel %vm1022, %v2297, 0
        %v2305 = vsel %vm1022, %v2299, 0
        %2307 = vmatprep.subr.mxu0 %v2305
        %2308 = vmatpush1.msra.mxu0 %v2303
        %2309 = vmatprep.subr.mxu0 0.0
        %2310 = vmatpush1.msra.mxu0 0.0
        %2311 = vmatprep.subr.mxu0 0.0
        %2312 = vmatpush1.msra.mxu0 0.0
        %2313 = vmatprep.subr.mxu0 0.0
        %2314 = vmatpush1.msra.mxu0 0.0
        %2315 = vmatprep.subr.mxu0 0.0
        %2316 = vmatpush1.msra.mxu0 0.0
        %2317 = vmatprep.subr.mxu0 0.0
        %2318 = vmatpush1.msra.mxu0 0.0
        %2319 = vmatprep.subr.mxu0 0.0
        %2320 = vmatpush1.msra.mxu0 0.0
        %2321 = vmatprep.subr.mxu0 0.0
        %2322 = vmatpush1.msra.mxu0 0.0
        %2323 = vmatprep.subr.mxu0 0.0
        %2324 = vmatpush1.msra.mxu0 0.0
        %2325 = vmatprep.subr.mxu0 0.0
        %2326 = vmatpush1.msra.mxu0 0.0
        %2327 = vmatprep.subr.mxu0 0.0
        %2328 = vmatpush1.msra.mxu0 0.0
        %2329 = vmatprep.subr.mxu0 0.0
        %2330 = vmatpush1.msra.mxu0 0.0
        %2331 = vmatprep.subr.mxu0 0.0
        %2332 = vmatpush1.msra.mxu0 0.0
        %2333 = vmatprep.subr.mxu0 0.0
        %2334 = vmatpush1.msra.mxu0 0.0
        %2335 = vmatprep.subr.mxu0 0.0
        %2336 = vmatpush1.msra.mxu0 0.0
        %2337 = vmatprep.subr.mxu0 0.0
        %2338 = vmatpush1.msra.mxu0 0.0
        %2339 = vmatprep.subr.mxu0 0.0
        %2340 = vmatpush1.msra.mxu0 0.0
        %2341 = vmatprep.subr.mxu0 0.0
        %2342 = vmatpush1.msra.mxu0 0.0
        %2343 = vmatprep.subr.mxu0 0.0
        %2344 = vmatpush1.msra.mxu0 0.0
        %2345 = vmatprep.subr.mxu0 0.0
        %2346 = vmatpush1.msra.mxu0 0.0
        %2347 = vmatprep.subr.mxu0 0.0
        %2348 = vmatpush1.msra.mxu0 0.0
        %2349 = vmatprep.subr.mxu0 0.0
        %2350 = vmatpush1.msra.mxu0 0.0
        %2351 = vmatprep.subr.mxu0 0.0
        %2352 = vmatpush1.msra.mxu0 0.0
        %2353 = vmatprep.subr.mxu0 0.0
        %2354 = vmatpush1.msra.mxu0 0.0
        %2355 = vmatprep.subr.mxu0 0.0
        %2356 = vmatpush1.msra.mxu0 0.0
        %2357 = vmatprep.subr.mxu0 0.0
        %2358 = vmatpush1.msra.mxu0 0.0
        %2359 = vmatprep.subr.mxu0 0.0
        %2360 = vmatpush1.msra.mxu0 0.0
        %2361 = vmatprep.subr.mxu0 0.0
        %2362 = vmatpush1.msra.mxu0 0.0
        %2363 = vmatprep.subr.mxu0 0.0
        %2364 = vmatpush1.msra.mxu0 0.0
        %2365 = vmatprep.subr.mxu0 0.0
        %2366 = vmatpush1.msra.mxu0 0.0
        %2367 = vmatprep.subr.mxu0 0.0
        %2368 = vmatpush1.msra.mxu0 0.0
        %2369 = vmatprep.subr.mxu0 0.0
        %2370 = vmatpush1.msra.mxu0 0.0
        %2371 = vmatprep.mubr.f32.mxu0 0.0
        %2372 = vmatmul.mubr.f32.gmra.mrb[0].mxu0 %v2301
        %v2373 = vpop.f32.mrb[0].mxu0
        %v2374 = vadd.f32 0.0, %v2373
        %v2375 = vpop.f32.mrb[0].mxu0
        %v2376 = vadd.f32 0.0, %v2375
        %2377 = vdwg.mxu0
        %v2378 = vld [vmem:[#allocation3 + $0x20] sm:$0xff]
        %v2379 = vld [vmem:[#allocation3 + $0x28] sm:$0xff]
        %v2380 = vmul.f32 %v2378, %v2374
        %v2381 = vmul.f32 %v2379, %v2376
        %s2382 = scalar_lea.vmem %s13, 16
        %v2383 = vld [vmem:[%s2382] sm:$0xff]
        %2385 = vset.pattern.permute.xlu0 0
        %2386 = vperm.xlu0 %2385, %v2383
        %v2387 = vpop.permute.xlu0 %2386
        %v2389 = vadd.f32 %v2380, %v2387
        %v2390 = vadd.f32 %v2381, %v2387
        %v2391 = vmax.f32 %v2389, 0.0
        %v2392 = vmax.f32 %v2390, 0.0
        %2393 = vst [vmem:[#allocation3 + $0x20] sm:$0xff] %v2391
        %2394 = vst [vmem:[#allocation3 + $0x28] sm:$0xff] %v2392
        %v2395 = vld [vmem:[%s14] sm:$0xf]
        %v2396 = vld [vmem:[%s14 + $0x4] sm:$0xf]
        %v2397 = vld [vmem:[%s14 + $0x8] sm:$0xf]
        %v2398 = vld [vmem:[%s14 + $0xc] sm:$0xf]
        %v2399 = vld [vmem:[#allocation3] sm:$0xff]
        %v2400 = vld [vmem:[#allocation3 + $0x8] sm:$0xff]
        %v2401 = vld [vmem:[#allocation3 + $0x10] sm:$0xff]
        %v2402 = vld [vmem:[#allocation3 + $0x18] sm:$0xff]
        %v2403 = vld [vmem:[#allocation3 + $0x20] sm:$0xff]
        %v2404 = vld [vmem:[#allocation3 + $0x28] sm:$0xff]
        %v2405 = vpack.c.bf16 %v2401, %v2399
        %v2406 = vpack.c.bf16 %v2402, %v2400
        %v2407 = vpack.c.bf16 %v2403, %v2403
        %v2408 = vpack.c.bf16 %v2404, %v2404
        %v2413 = vunpack.c.l.b16 %v2395
        %v2414 = vunpack.c.l.b16 %v2396
        %v2415 = vunpack.c.l.b16 %v2397
        %v2416 = vunpack.c.l.b16 %v2398
        %v2417 = vpack.c.b16 %v2414, %v2413
        %v2418 = vpack.c.b16 %v2416, %v2415
        %v2420 = vsel %vm1911, %v2417, 0
        %v2423 = vsel %vm1911, %v2418, 0
        %v2426 = vsel %vm1022, %v2407, 0
        %v2429 = vsel %vm1022, %v2408, 0
        %2431 = vmatprep.subr.bf16.mxu0 %v2406
        %2432 = vmatpush1.bf16.msra.mxu0 %v2405
        %2433 = vmatprep.subr.bf16.mxu0 %v2429
        %2434 = vmatpush1.bf16.msra.mxu0 %v2426
        %2435 = vmatprep.subr.bf16.mxu0 0
        %2436 = vmatpush1.bf16.msra.mxu0 0
        %2437 = vmatprep.subr.bf16.mxu0 0
        %2438 = vmatpush1.bf16.msra.mxu0 0
        %2439 = vmatprep.subr.bf16.mxu0 0
        %2440 = vmatpush1.bf16.msra.mxu0 0
        %2441 = vmatprep.subr.bf16.mxu0 0
        %2442 = vmatpush1.bf16.msra.mxu0 0
        %2443 = vmatprep.subr.bf16.mxu0 0
        %2444 = vmatpush1.bf16.msra.mxu0 0
        %2445 = vmatprep.subr.bf16.mxu0 0
        %2446 = vmatpush1.bf16.msra.mxu0 0
        %2447 = vmatprep.subr.bf16.mxu0 0
        %2448 = vmatpush1.bf16.msra.mxu0 0
        %2449 = vmatprep.subr.bf16.mxu0 0
        %2450 = vmatpush1.bf16.msra.mxu0 0
        %2451 = vmatprep.subr.bf16.mxu0 0
        %2452 = vmatpush1.bf16.msra.mxu0 0
        %2453 = vmatprep.subr.bf16.mxu0 0
        %2454 = vmatpush1.bf16.msra.mxu0 0
        %2455 = vmatprep.subr.bf16.mxu0 0
        %2456 = vmatpush1.bf16.msra.mxu0 0
        %2457 = vmatprep.subr.bf16.mxu0 0
        %2458 = vmatpush1.bf16.msra.mxu0 0
        %2459 = vmatprep.subr.bf16.mxu0 0
        %2460 = vmatpush1.bf16.msra.mxu0 0
        %2461 = vmatprep.subr.bf16.mxu0 0
        %2462 = vmatpush1.bf16.msra.mxu0 0
        %2463 = vmatprep.mubr.bf16.mxu0 0
        %2464 = vmatmul.mubr.bf16.gmra.mrb[0].mxu0 %v2420
        %v2465 = vpop.f32.mrb[0].mxu0
        %v2466 = vadd.f32 0.0, %v2465
        %v2467 = vpop.f32.mrb[0].mxu0
        %v2468 = vadd.f32 0.0, %v2467
        %v2469 = vpop.f32.mrb[0].mxu0
        %v2470 = vadd.f32 0.0, %v2469
        %v2471 = vpop.f32.mrb[0].mxu0
        %v2472 = vadd.f32 0.0, %v2471
        %2473 = vmatprep.mubr.bf16.mxu0 0
        %2474 = vmatmul.mubr.bf16.gmra.mrb[0].mxu0 %v2423
        %v2475 = vpop.f32.mrb[0].mxu0
        %v2476 = vadd.f32 0.0, %v2475
        %v2477 = vpop.f32.mrb[0].mxu0
        %v2478 = vadd.f32 0.0, %v2477
        %v2479 = vpop.f32.mrb[0].mxu0
        %v2480 = vadd.f32 0.0, %v2479
        %v2481 = vpop.f32.mrb[0].mxu0
        %v2482 = vadd.f32 0.0, %v2481
        %2483 = vdwg.mxu0
        %v2484 = vadd.f32 %v516, %v2466
        %v2485 = vadd.f32 %v517, %v2468
        %v2486 = vadd.f32 %v518, %v2470
        %v2487 = vadd.f32 %v519, %v2472
        %v2488 = vadd.f32 %v520, %v2476
        %v2489 = vadd.f32 %v521, %v2478
        %v2490 = vadd.f32 %v522, %v2480
        %v2491 = vadd.f32 %v523, %v2482
        %2492 = vst [vmem:[%s512] sm:$0xff] %v2484
        %2493 = vst [vmem:[%s512 + $0x8] sm:$0xff] %v2485
        %2494 = vst [vmem:[%s512 + $0x10] sm:$0xff] %v2486
        %2495 = vst [vmem:[%s512 + $0x18] sm:$0xff] %v2487
        %2496 = vst [vmem:[%s512 + $0x20] sm:$0xff] %v2488
        %2497 = vst [vmem:[%s512 + $0x28] sm:$0xff] %v2489
        %2498 = vst [vmem:[%s512 + $0x30] sm:$0xff] %v2490
        %2499 = vst [vmem:[%s512 + $0x38] sm:$0xff] %v2491
        %s2500 = sand.u32 %s360, 1
        %s2501 = scalar_lea.sflag [#allocation6], %s2500
        %s2502 = sand.u32 %s360, 1
        %s2503 = smul.addr %s2502, 64
        %s2504 = scalar_lea.vmem [#allocation7], %s2503
        // Predicated region
        $region85: #{tpu_custom_call.1} parent=79 // pred_check
          %p2505 = pneg %p370
        $region86: #{tpu_custom_call.1} parent=79 // pred_check_branch
          %2507 = sbr.rel (%p2505) target = $region88
        $region87: #{tpu_custom_call.1} parent=79 // pred_region
          %s2508 = smul.u32 2, %s32
          %s2510 = ssub.s32 1024, 1024
          %2511 = vsyncadd %s2501, %s2510
          %s2512 = smul.addr %s2508, 128
          %s2513 = scalar_lea.hbm %s15, %s2512
          %s2514 = sshll.u32 %s2504, 4
          %s2515 = int_to_ptr.vmem [resolvable:$true] %s2514
          %2520 = dma.vmem_to_hbm [thread:$0]  %s2515, 1024, %s2513, %s2501, 256, 512, 16
        $region88: #{tpu_custom_call.1} parent=79 // pred_fallthru
          _
      $region80: #{tpu_custom_call.1} parent=5 // pred_fallthru
        _
      %p2521 = scmp.le.s32.totalorder 2, %s27
      // Predicated region
      $region89: #{tpu_custom_call.1} parent=5 // pred_check
        %p2522 = pneg %p2521
      $region90: #{tpu_custom_call.1} parent=5 // pred_check_branch
        %2524 = sbr.rel (%p2522) target = $region92
      $region91: #{tpu_custom_call.1} parent=5 // pred_region
        %s2525 = ssub.s32 %s27, 2
        // Predicated region
        $region93: #{tpu_custom_call.1} parent=91 // pred_check
          %p2526 = pneg %p376
        $region94: #{tpu_custom_call.1} parent=91 // pred_check_branch
          %2528 = sbr.rel (%p2526) target = $region96
        $region95: #{tpu_custom_call.1} parent=91 // pred_region
          %s2529 = sand.u32 %s361, 1
          %s2530 = scalar_lea.sflag [#allocation6], %s2529
          %s2531 = sand.u32 %s361, 1
          %s2532 = smul.addr %s2531, 64
          %s2533 = scalar_lea.vmem [#allocation7], %s2532
          %2534 = dma.done %s2530, 1024
        $region96: #{tpu_custom_call.1} parent=91 // pred_fallthru
          _
      $region92: #{tpu_custom_call.1} parent=5 // pred_fallthru
        _
    $region6: #{tpu_custom_call.1} parent=1 // loop_footer
      %s31 = sadd.s32 1, %s27
    $region7: #{tpu_custom_call.1} parent=1 // loop_footer_branch
      %26 = sbr.rel target = $region3
    $region8: #{tpu_custom_call.1} parent=1 // loop_exit
      _
    %2535 = vsyncpa [#allocation5], 1
    %s2536 = scalar_lea.sflag [#allocation5], 1
    %2537 = vsyncpa %s2536, 1
    %2538 = vsyncpa [#allocation6], 1
    %s2539 = scalar_lea.sflag [#allocation6], 1
    %2540 = vsyncpa %s2539, 1

</llo_original>
